<compile_context>
chip_gen: v7x
topology: tpu7x:2x2x1
jax: 0.10.0
libtpu: 0.0.40
codegen_flags: <defaults>
</compile_context>

<pallas_src>
import jax
import jax.numpy as jnp
from jax import lax
from jax.experimental import pallas as pl
from jax.experimental.pallas import tpu as pltpu

# ----------------------------------------------------------------------------- consts
EMB_SIZE = 128        # TODO(synk): not provided upstream
NUM_HEADS = 4         # TODO(synk): not provided upstream
DFF = 256             # TODO(synk): not provided upstream
NUM_TRANSMIT = 16     # TODO(synk): not provided upstream
NUM_ENC_LAYERS = 2    # TODO(synk): not provided upstream

HEAD_DIM = EMB_SIZE // NUM_HEADS
ATT_SCALE = float(HEAD_DIM) ** -0.5
LN_EPS = 1e-5         # PyTorch TransformerEncoderLayer default

MXU_ROWS = 256        # target activation rows per grid step (v6e/v7x MXU width)


# ----------------------------------------------------------------------------- helpers
def _layernorm(v, g, b):
    mu = jnp.mean(v, axis=-1, keepdims=True)
    d = v - mu
    var = jnp.mean(d * d, axis=-1, keepdims=True)
    return d * lax.rsqrt(var + LN_EPS) * g + b


def _bf16_dot(a, b):
    """MXU matmul: bf16 operands, f32 accumulation."""
    return jnp.dot(a.astype(jnp.bfloat16), b.astype(jnp.bfloat16),
                   preferred_element_type=jnp.float32)


# ----------------------------------------------------------------------------- kernel
def _signal_att_kernel(x_ref, pos_ref,
                       wqkv_ref, bqkv_ref, wo_ref, bo_ref,
                       ln1g_ref, ln1b_ref,
                       w1_ref, b1_ref, w2_ref, b2_ref,
                       ln2g_ref, ln2b_ref,
                       o_ref):
    """BLOCK_B batch elements per grid step; the full encoder stack stays in VMEM."""
    bb, T, E = x_ref.shape
    H, HD = NUM_HEADS, HEAD_DIM

    # positional add in f32 (x may arrive as bf16 to halve HBM traffic)
    xb = x_ref[...].astype(jnp.float32) + pos_ref[0]                # (bb, T, E)
    xf = xb.reshape(bb * T, E)                                      # big-M activation matrix

    def split_heads(m):
        """(bb*T, E) f32 -> (H*bb, T, HD) bf16, head-major batch ordering."""
        m3 = m.reshape(bb, T, E)
        return jnp.concatenate(
            [m3[:, :, h * HD:(h + 1) * HD] for h in range(H)], axis=0
        ).astype(jnp.bfloat16)

    for l in range(NUM_ENC_LAYERS):                                 # unrolled at trace time
        # -------- multi-head self-attention (fused QKV projection) --------
        qkv = _bf16_dot(xf, wqkv_ref[l]) + bqkv_ref[l]              # (bb*T, 3E) f32
        qh = split_heads(qkv[:, :E] * ATT_SCALE)                    # scale folded into q
        kh = split_heads(qkv[:, E:2 * E])
        vh = split_heads(qkv[:, 2 * E:])

        # head-batched attention: one batched dot_general per matmul
        s = jnp.einsum('nqd,nkd->nqk', qh, kh,
                       preferred_element_type=jnp.float32)          # (H*bb, T, T)
        s = s - jnp.max(s, axis=-1, keepdims=True)
        p = jnp.exp(s)
        p = p / jnp.sum(p, axis=-1, keepdims=True)                  # exact normalize
        ctx = jnp.einsum('nqk,nkd->nqd', p.astype(jnp.bfloat16), vh,
                         preferred_element_type=jnp.float32)        # (H*bb, T, HD)

        # merge heads -> single dense E x E output projection
        merged = jnp.concatenate(
            [ctx[h * bb:(h + 1) * bb] for h in range(H)], axis=-1
        ).reshape(bb * T, E)                                        # (bb*T, E)
        attn = _bf16_dot(merged, wo_ref[l]) + bo_ref[l]

        xf = _layernorm(xf + attn, ln1g_ref[l], ln1b_ref[l])        # post-norm (PyTorch default)

        # -------- feed-forward (ReLU, PyTorch default activation) --------
        hdn = jnp.maximum(_bf16_dot(xf, w1_ref[l]) + b1_ref[l], 0.0)  # (bb*T, DFF)
        ff = _bf16_dot(hdn, w2_ref[l]) + b2_ref[l]                    # (bb*T, E)
        xf = _layernorm(xf + ff, ln2g_ref[l], ln2b_ref[l])

    o_ref[...] = xf.reshape(bb, T, E).astype(o_ref.dtype)


# ----------------------------------------------------------------------------- wrapper
def _choose_block_b(B, T):
    bb = max(1, min(B, MXU_ROWS // T))          # up to ~256 activation rows per step
    if B >= 2:
        bb = min(bb, pl.cdiv(B, 2))             # keep >=2 parallel grid steps (v7x 2 TCs)
    while B % bb:                               # pick a divisor of B
        bb -= 1
    return bb


def signal_att_forward(params, x, out_dtype=None):
    B, T, E = x.shape
    assert E == EMB_SIZE and T == params["pos"].shape[1], (x.shape, params["pos"].shape)
    out_dtype = out_dtype or x.dtype
    bb = _choose_block_b(B, T)

    def full_spec(a):
        return pl.BlockSpec(a.shape, lambda i, _n=a.ndim: (0,) * _n)

    args = (
        x,                                       # no wrapper-side upcast; kernel adds pos in f32
        params["pos"],
        params["wqkv"], params["bqkv"], params["wo"], params["bo"],
        params["ln1g"], params["ln1b"],
        params["w1"], params["b1"], params["w2"], params["b2"],
        params["ln2g"], params["ln2b"],
    )
    in_specs = [pl.BlockSpec((bb, T, E), lambda i: (i, 0, 0))] \
             + [full_spec(a) for a in args[1:]]

    return pl.pallas_call(
        _signal_att_kernel,
        out_shape=jax.ShapeDtypeStruct((B, T, E), out_dtype),
        grid=(B // bb,),
        in_specs=in_specs,
        out_specs=pl.BlockSpec((bb, T, E), lambda i: (i, 0, 0)),
        compiler_params=pltpu.CompilerParams(dimension_semantics=("parallel",)),
    )(*args)


# ----------------------------------------------------------------------------- params
def init_params(key=jax.random.PRNGKey(0)):
    keys = iter(jax.random.split(key, 16))

    def w(shape, fan_in):
        return jax.random.normal(next(keys), shape, jnp.float32) / jnp.sqrt(fan_in)

    L, E, F = NUM_ENC_LAYERS, EMB_SIZE, DFF
    # Matmul weights stored in bf16 (half HBM->VMEM bytes, native bf16 MXU);
    # biases / LayerNorm affine params stay f32 (added after f32 accumulation).
    return {
        "pos":  jax.random.normal(next(keys), (1, NUM_TRANSMIT, E), jnp.float32),
        "wqkv": w((L, E, 3 * E), E).astype(jnp.bfloat16),
        "bqkv": jnp.zeros((L, 1, 3 * E), jnp.float32),
        "wo":   w((L, E, E), E).astype(jnp.bfloat16),
        "bo":   jnp.zeros((L, 1, E), jnp.float32),
        "ln1g": jnp.ones((L, 1, E), jnp.float32),
        "ln1b": jnp.zeros((L, 1, E), jnp.float32),
        "w1":   w((L, E, F), E).astype(jnp.bfloat16),
        "b1":   jnp.zeros((L, 1, F), jnp.float32),
        "w2":   w((L, F, E), F).astype(jnp.bfloat16),
        "b2":   jnp.zeros((L, 1, E), jnp.float32),
        "ln2g": jnp.ones((L, 1, E), jnp.float32),
        "ln2b": jnp.zeros((L, 1, E), jnp.float32),
    }


# ----------------------------------------------------------------------------- main
if __name__ == "__main__":
    params = init_params(jax.random.PRNGKey(0))
    x = jax.random.normal(jax.random.PRNGKey(0),
                          (2, NUM_TRANSMIT, EMB_SIZE), jnp.float32)

    fwd = jax.jit(signal_att_forward)
    out = fwd(params, x)
    jax.block_until_ready(out)
    assert out.shape == (2, NUM_TRANSMIT, EMB_SIZE), out.shape
    assert bool(jnp.isfinite(out).all())
    print("KERNEL_OK")
</pallas_src>

<mosaic_0001>
module attributes {stable_mosaic.version = 11 : i64} {
  func.func @_signal_att_kernel(%arg0: i32, %arg1: memref<1x16x128xf32, #tpu.memory_space<vmem>>, %arg2: memref<1x16x128xf32, #tpu.memory_space<vmem>>, %arg3: memref<2x128x384xbf16, #tpu.memory_space<vmem>>, %arg4: memref<2x1x384xf32, #tpu.memory_space<vmem>>, %arg5: memref<2x128x128xbf16, #tpu.memory_space<vmem>>, %arg6: memref<2x1x128xf32, #tpu.memory_space<vmem>>, %arg7: memref<2x1x128xf32, #tpu.memory_space<vmem>>, %arg8: memref<2x1x128xf32, #tpu.memory_space<vmem>>, %arg9: memref<2x128x256xbf16, #tpu.memory_space<vmem>>, %arg10: memref<2x1x256xf32, #tpu.memory_space<vmem>>, %arg11: memref<2x256x128xbf16, #tpu.memory_space<vmem>>, %arg12: memref<2x1x128xf32, #tpu.memory_space<vmem>>, %arg13: memref<2x1x128xf32, #tpu.memory_space<vmem>>, %arg14: memref<2x1x128xf32, #tpu.memory_space<vmem>>, %arg15: memref<1x16x128xf32, #tpu.memory_space<vmem>>) attributes {dimension_semantics = [#tpu.dimension_semantics<parallel>], iteration_bounds = array<i64: 2>, scalar_prefetch = 0 : i64, scratch_operands = 0 : i64, tpu.core_type = #tpu.core_type<tc>, window_params = [{transform_indices = @transform_0, window_bounds = array<i64: 1, 16, 128>}, {pipeline_mode = #tpu.pipeline_mode<synchronous>, transform_indices = @transform_1, window_bounds = array<i64: 1, 16, 128>}, {pipeline_mode = #tpu.pipeline_mode<synchronous>, transform_indices = @transform_2, window_bounds = array<i64: 2, 128, 384>}, {pipeline_mode = #tpu.pipeline_mode<synchronous>, transform_indices = @transform_3, window_bounds = array<i64: 2, 1, 384>}, {pipeline_mode = #tpu.pipeline_mode<synchronous>, transform_indices = @transform_4, window_bounds = array<i64: 2, 128, 128>}, {pipeline_mode = #tpu.pipeline_mode<synchronous>, transform_indices = @transform_5, window_bounds = array<i64: 2, 1, 128>}, {pipeline_mode = #tpu.pipeline_mode<synchronous>, transform_indices = @transform_6, window_bounds = array<i64: 2, 1, 128>}, {pipeline_mode = #tpu.pipeline_mode<synchronous>, transform_indices = @transform_7, window_bounds = array<i64: 2, 1, 128>}, {pipeline_mode = #tpu.pipeline_mode<synchronous>, transform_indices = @transform_8, window_bounds = array<i64: 2, 128, 256>}, {pipeline_mode = #tpu.pipeline_mode<synchronous>, transform_indices = @transform_9, window_bounds = array<i64: 2, 1, 256>}, {pipeline_mode = #tpu.pipeline_mode<synchronous>, transform_indices = @transform_10, window_bounds = array<i64: 2, 256, 128>}, {pipeline_mode = #tpu.pipeline_mode<synchronous>, transform_indices = @transform_11, window_bounds = array<i64: 2, 1, 128>}, {pipeline_mode = #tpu.pipeline_mode<synchronous>, transform_indices = @transform_12, window_bounds = array<i64: 2, 1, 128>}, {pipeline_mode = #tpu.pipeline_mode<synchronous>, transform_indices = @transform_13, window_bounds = array<i64: 2, 1, 128>}, {transform_indices = @transform_14, window_bounds = array<i64: 1, 16, 128>}]} {
    %c0 = arith.constant 0 : index
    %c0_0 = arith.constant 0 : index
    %c0_1 = arith.constant 0 : index
    %0 = vector.load %arg1[%c0, %c0_0, %c0_1] : memref<1x16x128xf32, #tpu.memory_space<vmem>>, vector<1x16x128xf32>
    %c0_2 = arith.constant 0 : index
    %c0_3 = arith.constant 0 : index
    %c0_4 = arith.constant 0 : index
    %1 = vector.load %arg2[%c0_2, %c0_3, %c0_4] : memref<1x16x128xf32, #tpu.memory_space<vmem>>, vector<1x16x128xf32>
    %2 = vector.shape_cast %1 : vector<1x16x128xf32> to vector<16x128xf32>
    %3 = vector.shape_cast %2 : vector<16x128xf32> to vector<1x16x128xf32>
    %4 = arith.addf %0, %3 : vector<1x16x128xf32>
    %5 = vector.shape_cast %4 : vector<1x16x128xf32> to vector<16x128xf32>
    %c0_5 = arith.constant 0 : index
    %c0_6 = arith.constant 0 : index
    %c0_7 = arith.constant 0 : index
    %6 = vector.load %arg3[%c0_5, %c0_6, %c0_7] : memref<2x128x384xbf16, #tpu.memory_space<vmem>>, vector<1x128x384xbf16>
    %7 = vector.shape_cast %6 : vector<1x128x384xbf16> to vector<128x384xbf16>
    %8 = arith.truncf %5 : vector<16x128xf32> to vector<16x128xbf16>
    %cst = arith.constant dense<0.000000e+00> : vector<16x384xf32>
    %9 = tpu.matmul %8, %7, %cst {dimension_numbers = #tpu.dot_dimension_numbers<[1], [0], [0], [1], [0, 0, 1, 1], [], []>} : vector<16x128xbf16>, vector<128x384xbf16>, vector<16x384xf32> -> vector<16x384xf32>
    %c0_8 = arith.constant 0 : index
    %c0_9 = arith.constant 0 : index
    %c0_10 = arith.constant 0 : index
    %10 = vector.load %arg4[%c0_8, %c0_9, %c0_10] : memref<2x1x384xf32, #tpu.memory_space<vmem>>, vector<1x1x384xf32>
    %11 = vector.shape_cast %10 : vector<1x1x384xf32> to vector<1x384xf32>
    %12 = vector.broadcast %11 : vector<1x384xf32> to vector<16x384xf32>
    %13 = arith.addf %9, %12 : vector<16x384xf32>
    %14 = vector.extract_strided_slice %13 {offsets = [0, 0], sizes = [16, 128], strides = [1, 1]} : vector<16x384xf32> to vector<16x128xf32>
    %cst_11 = arith.constant 0.176776692 : f32
    %15 = vector.broadcast %cst_11 : f32 to vector<16x128xf32>
    %16 = arith.mulf %14, %15 : vector<16x128xf32>
    %17 = vector.shape_cast %16 : vector<16x128xf32> to vector<1x16x128xf32>
    %18 = vector.extract_strided_slice %17 {offsets = [0, 0, 0], sizes = [1, 16, 32], strides = [1, 1, 1]} : vector<1x16x128xf32> to vector<1x16x32xf32>
    %19 = vector.extract_strided_slice %17 {offsets = [0, 0, 32], sizes = [1, 16, 32], strides = [1, 1, 1]} : vector<1x16x128xf32> to vector<1x16x32xf32>
    %20 = vector.extract_strided_slice %17 {offsets = [0, 0, 64], sizes = [1, 16, 32], strides = [1, 1, 1]} : vector<1x16x128xf32> to vector<1x16x32xf32>
    %21 = vector.extract_strided_slice %17 {offsets = [0, 0, 96], sizes = [1, 16, 32], strides = [1, 1, 1]} : vector<1x16x128xf32> to vector<1x16x32xf32>
    %22 = tpu.concatenate %18, %19, %20, %21 in 0 : vector<1x16x32xf32>, vector<1x16x32xf32>, vector<1x16x32xf32>, vector<1x16x32xf32> -> vector<4x16x32xf32>
    %23 = arith.truncf %22 : vector<4x16x32xf32> to vector<4x16x32xbf16>
    %24 = vector.extract_strided_slice %13 {offsets = [0, 128], sizes = [16, 128], strides = [1, 1]} : vector<16x384xf32> to vector<16x128xf32>
    %25 = vector.shape_cast %24 : vector<16x128xf32> to vector<1x16x128xf32>
    %26 = vector.extract_strided_slice %25 {offsets = [0, 0, 0], sizes = [1, 16, 32], strides = [1, 1, 1]} : vector<1x16x128xf32> to vector<1x16x32xf32>
    %27 = vector.extract_strided_slice %25 {offsets = [0, 0, 32], sizes = [1, 16, 32], strides = [1, 1, 1]} : vector<1x16x128xf32> to vector<1x16x32xf32>
    %28 = vector.extract_strided_slice %25 {offsets = [0, 0, 64], sizes = [1, 16, 32], strides = [1, 1, 1]} : vector<1x16x128xf32> to vector<1x16x32xf32>
    %29 = vector.extract_strided_slice %25 {offsets = [0, 0, 96], sizes = [1, 16, 32], strides = [1, 1, 1]} : vector<1x16x128xf32> to vector<1x16x32xf32>
    %30 = tpu.concatenate %26, %27, %28, %29 in 0 : vector<1x16x32xf32>, vector<1x16x32xf32>, vector<1x16x32xf32>, vector<1x16x32xf32> -> vector<4x16x32xf32>
    %31 = arith.truncf %30 : vector<4x16x32xf32> to vector<4x16x32xbf16>
    %32 = vector.extract_strided_slice %13 {offsets = [0, 256], sizes = [16, 128], strides = [1, 1]} : vector<16x384xf32> to vector<16x128xf32>
    %33 = vector.shape_cast %32 : vector<16x128xf32> to vector<1x16x128xf32>
    %34 = vector.extract_strided_slice %33 {offsets = [0, 0, 0], sizes = [1, 16, 32], strides = [1, 1, 1]} : vector<1x16x128xf32> to vector<1x16x32xf32>
    %35 = vector.extract_strided_slice %33 {offsets = [0, 0, 32], sizes = [1, 16, 32], strides = [1, 1, 1]} : vector<1x16x128xf32> to vector<1x16x32xf32>
    %36 = vector.extract_strided_slice %33 {offsets = [0, 0, 64], sizes = [1, 16, 32], strides = [1, 1, 1]} : vector<1x16x128xf32> to vector<1x16x32xf32>
    %37 = vector.extract_strided_slice %33 {offsets = [0, 0, 96], sizes = [1, 16, 32], strides = [1, 1, 1]} : vector<1x16x128xf32> to vector<1x16x32xf32>
    %38 = tpu.concatenate %34, %35, %36, %37 in 0 : vector<1x16x32xf32>, vector<1x16x32xf32>, vector<1x16x32xf32>, vector<1x16x32xf32> -> vector<4x16x32xf32>
    %39 = arith.truncf %38 : vector<4x16x32xf32> to vector<4x16x32xbf16>
    "tpu.trace_start"() <{level = 10 : i32, message = "nqd,nkd->nqk"}> : () -> ()
    %cst_12 = arith.constant dense<0.000000e+00> : vector<4x16x16xf32>
    %40 = tpu.matmul %23, %31, %cst_12 {dimension_numbers = #tpu.dot_dimension_numbers<[2], [2], [1], [1], [0, 0, 0, 1, 1, 1], [0], [0]>} : vector<4x16x32xbf16>, vector<4x16x32xbf16>, vector<4x16x16xf32> -> vector<4x16x16xf32>
    "tpu.trace_stop"() : () -> ()
    %cst_13 = arith.constant dense<0xFF800000> : vector<4x16xf32>
    %41 = vector.multi_reduction <maximumf>, %40, %cst_13 [2] : vector<4x16x16xf32> to vector<4x16xf32>
    %42 = vector.shape_cast %41 : vector<4x16xf32> to vector<4x16x1xf32>
    %43 = vector.broadcast %42 : vector<4x16x1xf32> to vector<4x16x16xf32>
    %44 = arith.subf %40, %43 : vector<4x16x16xf32>
    %45 = math.exp %44 : vector<4x16x16xf32>
    %cst_14 = arith.constant dense<0.000000e+00> : vector<4x16xf32>
    %46 = vector.multi_reduction <add>, %45, %cst_14 [2] : vector<4x16x16xf32> to vector<4x16xf32>
    %47 = vector.shape_cast %46 : vector<4x16xf32> to vector<4x16x1xf32>
    %48 = vector.broadcast %47 : vector<4x16x1xf32> to vector<4x16x16xf32>
    %49 = arith.divf %45, %48 : vector<4x16x16xf32>
    %50 = arith.truncf %49 : vector<4x16x16xf32> to vector<4x16x16xbf16>
    "tpu.trace_start"() <{level = 10 : i32, message = "nqk,nkd->nqd"}> : () -> ()
    %cst_15 = arith.constant dense<0.000000e+00> : vector<4x16x32xf32>
    %51 = tpu.matmul %50, %39, %cst_15 {dimension_numbers = #tpu.dot_dimension_numbers<[2], [1], [1], [2], [0, 0, 0, 1, 1, 2], [0], [0]>} : vector<4x16x16xbf16>, vector<4x16x32xbf16>, vector<4x16x32xf32> -> vector<4x16x32xf32>
    "tpu.trace_stop"() : () -> ()
    %52 = vector.extract_strided_slice %51 {offsets = [0, 0, 0], sizes = [1, 16, 32], strides = [1, 1, 1]} : vector<4x16x32xf32> to vector<1x16x32xf32>
    %53 = vector.extract_strided_slice %51 {offsets = [1, 0, 0], sizes = [1, 16, 32], strides = [1, 1, 1]} : vector<4x16x32xf32> to vector<1x16x32xf32>
    %54 = vector.extract_strided_slice %51 {offsets = [2, 0, 0], sizes = [1, 16, 32], strides = [1, 1, 1]} : vector<4x16x32xf32> to vector<1x16x32xf32>
    %55 = vector.extract_strided_slice %51 {offsets = [3, 0, 0], sizes = [1, 16, 32], strides = [1, 1, 1]} : vector<4x16x32xf32> to vector<1x16x32xf32>
    %56 = tpu.concatenate %52, %53, %54, %55 in 2 : vector<1x16x32xf32>, vector<1x16x32xf32>, vector<1x16x32xf32>, vector<1x16x32xf32> -> vector<1x16x128xf32>
    %57 = vector.shape_cast %56 : vector<1x16x128xf32> to vector<16x128xf32>
    %c0_16 = arith.constant 0 : index
    %c0_17 = arith.constant 0 : index
    %c0_18 = arith.constant 0 : index
    %58 = vector.load %arg5[%c0_16, %c0_17, %c0_18] : memref<2x128x128xbf16, #tpu.memory_space<vmem>>, vector<1x128x128xbf16>
    %59 = vector.shape_cast %58 : vector<1x128x128xbf16> to vector<128x128xbf16>
    %60 = arith.truncf %57 : vector<16x128xf32> to vector<16x128xbf16>
    %cst_19 = arith.constant dense<0.000000e+00> : vector<16x128xf32>
    %61 = tpu.matmul %60, %59, %cst_19 {dimension_numbers = #tpu.dot_dimension_numbers<[1], [0], [0], [1], [0, 0, 1, 1], [], []>} : vector<16x128xbf16>, vector<128x128xbf16>, vector<16x128xf32> -> vector<16x128xf32>
    %c0_20 = arith.constant 0 : index
    %c0_21 = arith.constant 0 : index
    %c0_22 = arith.constant 0 : index
    %62 = vector.load %arg6[%c0_20, %c0_21, %c0_22] : memref<2x1x128xf32, #tpu.memory_space<vmem>>, vector<1x1x128xf32>
    %63 = vector.shape_cast %62 : vector<1x1x128xf32> to vector<1x128xf32>
    %64 = vector.broadcast %63 : vector<1x128xf32> to vector<16x128xf32>
    %65 = arith.addf %61, %64 : vector<16x128xf32>
    %66 = arith.addf %5, %65 : vector<16x128xf32>
    %c0_23 = arith.constant 0 : index
    %c0_24 = arith.constant 0 : index
    %c0_25 = arith.constant 0 : index
    %67 = vector.load %arg7[%c0_23, %c0_24, %c0_25] : memref<2x1x128xf32, #tpu.memory_space<vmem>>, vector<1x1x128xf32>
    %68 = vector.shape_cast %67 : vector<1x1x128xf32> to vector<1x128xf32>
    %c0_26 = arith.constant 0 : index
    %c0_27 = arith.constant 0 : index
    %c0_28 = arith.constant 0 : index
    %69 = vector.load %arg8[%c0_26, %c0_27, %c0_28] : memref<2x1x128xf32, #tpu.memory_space<vmem>>, vector<1x1x128xf32>
    %70 = vector.shape_cast %69 : vector<1x1x128xf32> to vector<1x128xf32>
    %cst_29 = arith.constant dense<0.000000e+00> : vector<16xf32>
    %71 = vector.multi_reduction <add>, %66, %cst_29 [1] : vector<16x128xf32> to vector<16xf32>
    %72 = vector.shape_cast %71 : vector<16xf32> to vector<16x1xf32>
    %cst_30 = arith.constant 1.280000e+02 : f32
    %73 = vector.broadcast %cst_30 : f32 to vector<16x1xf32>
    %74 = arith.divf %72, %73 : vector<16x1xf32>
    %75 = vector.broadcast %74 : vector<16x1xf32> to vector<16x128xf32>
    %76 = arith.subf %66, %75 : vector<16x128xf32>
    %77 = arith.mulf %76, %76 : vector<16x128xf32>
    %cst_31 = arith.constant dense<0.000000e+00> : vector<16xf32>
    %78 = vector.multi_reduction <add>, %77, %cst_31 [1] : vector<16x128xf32> to vector<16xf32>
    %79 = vector.shape_cast %78 : vector<16xf32> to vector<16x1xf32>
    %cst_32 = arith.constant 1.280000e+02 : f32
    %80 = vector.broadcast %cst_32 : f32 to vector<16x1xf32>
    %81 = arith.divf %79, %80 : vector<16x1xf32>
    %cst_33 = arith.constant 9.99999974E-6 : f32
    %82 = vector.broadcast %cst_33 : f32 to vector<16x1xf32>
    %83 = arith.addf %81, %82 : vector<16x1xf32>
    %84 = math.rsqrt %83 : vector<16x1xf32>
    %85 = vector.broadcast %84 : vector<16x1xf32> to vector<16x128xf32>
    %86 = arith.mulf %76, %85 : vector<16x128xf32>
    %87 = vector.broadcast %68 : vector<1x128xf32> to vector<16x128xf32>
    %88 = arith.mulf %86, %87 : vector<16x128xf32>
    %89 = vector.broadcast %70 : vector<1x128xf32> to vector<16x128xf32>
    %90 = arith.addf %88, %89 : vector<16x128xf32>
    %c0_34 = arith.constant 0 : index
    %c0_35 = arith.constant 0 : index
    %c0_36 = arith.constant 0 : index
    %91 = vector.load %arg9[%c0_34, %c0_35, %c0_36] : memref<2x128x256xbf16, #tpu.memory_space<vmem>>, vector<1x128x256xbf16>
    %92 = vector.shape_cast %91 : vector<1x128x256xbf16> to vector<128x256xbf16>
    %93 = arith.truncf %90 : vector<16x128xf32> to vector<16x128xbf16>
    %cst_37 = arith.constant dense<0.000000e+00> : vector<16x256xf32>
    %94 = tpu.matmul %93, %92, %cst_37 {dimension_numbers = #tpu.dot_dimension_numbers<[1], [0], [0], [1], [0, 0, 1, 1], [], []>} : vector<16x128xbf16>, vector<128x256xbf16>, vector<16x256xf32> -> vector<16x256xf32>
    %c0_38 = arith.constant 0 : index
    %c0_39 = arith.constant 0 : index
    %c0_40 = arith.constant 0 : index
    %95 = vector.load %arg10[%c0_38, %c0_39, %c0_40] : memref<2x1x256xf32, #tpu.memory_space<vmem>>, vector<1x1x256xf32>
    %96 = vector.shape_cast %95 : vector<1x1x256xf32> to vector<1x256xf32>
    %97 = vector.broadcast %96 : vector<1x256xf32> to vector<16x256xf32>
    %98 = arith.addf %94, %97 : vector<16x256xf32>
    %cst_41 = arith.constant 0.000000e+00 : f32
    %99 = vector.broadcast %cst_41 : f32 to vector<16x256xf32>
    %100 = arith.maximumf %98, %99 : vector<16x256xf32>
    %c0_42 = arith.constant 0 : index
    %c0_43 = arith.constant 0 : index
    %c0_44 = arith.constant 0 : index
    %101 = vector.load %arg11[%c0_42, %c0_43, %c0_44] : memref<2x256x128xbf16, #tpu.memory_space<vmem>>, vector<1x256x128xbf16>
    %102 = vector.shape_cast %101 : vector<1x256x128xbf16> to vector<256x128xbf16>
    %103 = arith.truncf %100 : vector<16x256xf32> to vector<16x256xbf16>
    %cst_45 = arith.constant dense<0.000000e+00> : vector<16x128xf32>
    %104 = tpu.matmul %103, %102, %cst_45 {dimension_numbers = #tpu.dot_dimension_numbers<[1], [0], [0], [1], [0, 0, 1, 1], [], []>} : vector<16x256xbf16>, vector<256x128xbf16>, vector<16x128xf32> -> vector<16x128xf32>
    %c0_46 = arith.constant 0 : index
    %c0_47 = arith.constant 0 : index
    %c0_48 = arith.constant 0 : index
    %105 = vector.load %arg12[%c0_46, %c0_47, %c0_48] : memref<2x1x128xf32, #tpu.memory_space<vmem>>, vector<1x1x128xf32>
    %106 = vector.shape_cast %105 : vector<1x1x128xf32> to vector<1x128xf32>
    %107 = vector.broadcast %106 : vector<1x128xf32> to vector<16x128xf32>
    %108 = arith.addf %104, %107 : vector<16x128xf32>
    %109 = arith.addf %90, %108 : vector<16x128xf32>
    %c0_49 = arith.constant 0 : index
    %c0_50 = arith.constant 0 : index
    %c0_51 = arith.constant 0 : index
    %110 = vector.load %arg13[%c0_49, %c0_50, %c0_51] : memref<2x1x128xf32, #tpu.memory_space<vmem>>, vector<1x1x128xf32>
    %111 = vector.shape_cast %110 : vector<1x1x128xf32> to vector<1x128xf32>
    %c0_52 = arith.constant 0 : index
    %c0_53 = arith.constant 0 : index
    %c0_54 = arith.constant 0 : index
    %112 = vector.load %arg14[%c0_52, %c0_53, %c0_54] : memref<2x1x128xf32, #tpu.memory_space<vmem>>, vector<1x1x128xf32>
    %113 = vector.shape_cast %112 : vector<1x1x128xf32> to vector<1x128xf32>
    %cst_55 = arith.constant dense<0.000000e+00> : vector<16xf32>
    %114 = vector.multi_reduction <add>, %109, %cst_55 [1] : vector<16x128xf32> to vector<16xf32>
    %115 = vector.shape_cast %114 : vector<16xf32> to vector<16x1xf32>
    %cst_56 = arith.constant 1.280000e+02 : f32
    %116 = vector.broadcast %cst_56 : f32 to vector<16x1xf32>
    %117 = arith.divf %115, %116 : vector<16x1xf32>
    %118 = vector.broadcast %117 : vector<16x1xf32> to vector<16x128xf32>
    %119 = arith.subf %109, %118 : vector<16x128xf32>
    %120 = arith.mulf %119, %119 : vector<16x128xf32>
    %cst_57 = arith.constant dense<0.000000e+00> : vector<16xf32>
    %121 = vector.multi_reduction <add>, %120, %cst_57 [1] : vector<16x128xf32> to vector<16xf32>
    %122 = vector.shape_cast %121 : vector<16xf32> to vector<16x1xf32>
    %cst_58 = arith.constant 1.280000e+02 : f32
    %123 = vector.broadcast %cst_58 : f32 to vector<16x1xf32>
    %124 = arith.divf %122, %123 : vector<16x1xf32>
    %cst_59 = arith.constant 9.99999974E-6 : f32
    %125 = vector.broadcast %cst_59 : f32 to vector<16x1xf32>
    %126 = arith.addf %124, %125 : vector<16x1xf32>
    %127 = math.rsqrt %126 : vector<16x1xf32>
    %128 = vector.broadcast %127 : vector<16x1xf32> to vector<16x128xf32>
    %129 = arith.mulf %119, %128 : vector<16x128xf32>
    %130 = vector.broadcast %111 : vector<1x128xf32> to vector<16x128xf32>
    %131 = arith.mulf %129, %130 : vector<16x128xf32>
    %132 = vector.broadcast %113 : vector<1x128xf32> to vector<16x128xf32>
    %133 = arith.addf %131, %132 : vector<16x128xf32>
    %c1 = arith.constant 1 : index
    %c0_60 = arith.constant 0 : index
    %c0_61 = arith.constant 0 : index
    %134 = vector.load %arg3[%c1, %c0_60, %c0_61] : memref<2x128x384xbf16, #tpu.memory_space<vmem>>, vector<1x128x384xbf16>
    %135 = vector.shape_cast %134 : vector<1x128x384xbf16> to vector<128x384xbf16>
    %136 = arith.truncf %133 : vector<16x128xf32> to vector<16x128xbf16>
    %cst_62 = arith.constant dense<0.000000e+00> : vector<16x384xf32>
    %137 = tpu.matmul %136, %135, %cst_62 {dimension_numbers = #tpu.dot_dimension_numbers<[1], [0], [0], [1], [0, 0, 1, 1], [], []>} : vector<16x128xbf16>, vector<128x384xbf16>, vector<16x384xf32> -> vector<16x384xf32>
    %c1_63 = arith.constant 1 : index
    %c0_64 = arith.constant 0 : index
    %c0_65 = arith.constant 0 : index
    %138 = vector.load %arg4[%c1_63, %c0_64, %c0_65] : memref<2x1x384xf32, #tpu.memory_space<vmem>>, vector<1x1x384xf32>
    %139 = vector.shape_cast %138 : vector<1x1x384xf32> to vector<1x384xf32>
    %140 = vector.broadcast %139 : vector<1x384xf32> to vector<16x384xf32>
    %141 = arith.addf %137, %140 : vector<16x384xf32>
    %142 = vector.extract_strided_slice %141 {offsets = [0, 0], sizes = [16, 128], strides = [1, 1]} : vector<16x384xf32> to vector<16x128xf32>
    %cst_66 = arith.constant 0.176776692 : f32
    %143 = vector.broadcast %cst_66 : f32 to vector<16x128xf32>
    %144 = arith.mulf %142, %143 : vector<16x128xf32>
    %145 = vector.shape_cast %144 : vector<16x128xf32> to vector<1x16x128xf32>
    %146 = vector.extract_strided_slice %145 {offsets = [0, 0, 0], sizes = [1, 16, 32], strides = [1, 1, 1]} : vector<1x16x128xf32> to vector<1x16x32xf32>
    %147 = vector.extract_strided_slice %145 {offsets = [0, 0, 32], sizes = [1, 16, 32], strides = [1, 1, 1]} : vector<1x16x128xf32> to vector<1x16x32xf32>
    %148 = vector.extract_strided_slice %145 {offsets = [0, 0, 64], sizes = [1, 16, 32], strides = [1, 1, 1]} : vector<1x16x128xf32> to vector<1x16x32xf32>
    %149 = vector.extract_strided_slice %145 {offsets = [0, 0, 96], sizes = [1, 16, 32], strides = [1, 1, 1]} : vector<1x16x128xf32> to vector<1x16x32xf32>
    %150 = tpu.concatenate %146, %147, %148, %149 in 0 : vector<1x16x32xf32>, vector<1x16x32xf32>, vector<1x16x32xf32>, vector<1x16x32xf32> -> vector<4x16x32xf32>
    %151 = arith.truncf %150 : vector<4x16x32xf32> to vector<4x16x32xbf16>
    %152 = vector.extract_strided_slice %141 {offsets = [0, 128], sizes = [16, 128], strides = [1, 1]} : vector<16x384xf32> to vector<16x128xf32>
    %153 = vector.shape_cast %152 : vector<16x128xf32> to vector<1x16x128xf32>
    %154 = vector.extract_strided_slice %153 {offsets = [0, 0, 0], sizes = [1, 16, 32], strides = [1, 1, 1]} : vector<1x16x128xf32> to vector<1x16x32xf32>
    %155 = vector.extract_strided_slice %153 {offsets = [0, 0, 32], sizes = [1, 16, 32], strides = [1, 1, 1]} : vector<1x16x128xf32> to vector<1x16x32xf32>
    %156 = vector.extract_strided_slice %153 {offsets = [0, 0, 64], sizes = [1, 16, 32], strides = [1, 1, 1]} : vector<1x16x128xf32> to vector<1x16x32xf32>
    %157 = vector.extract_strided_slice %153 {offsets = [0, 0, 96], sizes = [1, 16, 32], strides = [1, 1, 1]} : vector<1x16x128xf32> to vector<1x16x32xf32>
    %158 = tpu.concatenate %154, %155, %156, %157 in 0 : vector<1x16x32xf32>, vector<1x16x32xf32>, vector<1x16x32xf32>, vector<1x16x32xf32> -> vector<4x16x32xf32>
    %159 = arith.truncf %158 : vector<4x16x32xf32> to vector<4x16x32xbf16>
    %160 = vector.extract_strided_slice %141 {offsets = [0, 256], sizes = [16, 128], strides = [1, 1]} : vector<16x384xf32> to vector<16x128xf32>
    %161 = vector.shape_cast %160 : vector<16x128xf32> to vector<1x16x128xf32>
    %162 = vector.extract_strided_slice %161 {offsets = [0, 0, 0], sizes = [1, 16, 32], strides = [1, 1, 1]} : vector<1x16x128xf32> to vector<1x16x32xf32>
    %163 = vector.extract_strided_slice %161 {offsets = [0, 0, 32], sizes = [1, 16, 32], strides = [1, 1, 1]} : vector<1x16x128xf32> to vector<1x16x32xf32>
    %164 = vector.extract_strided_slice %161 {offsets = [0, 0, 64], sizes = [1, 16, 32], strides = [1, 1, 1]} : vector<1x16x128xf32> to vector<1x16x32xf32>
    %165 = vector.extract_strided_slice %161 {offsets = [0, 0, 96], sizes = [1, 16, 32], strides = [1, 1, 1]} : vector<1x16x128xf32> to vector<1x16x32xf32>
    %166 = tpu.concatenate %162, %163, %164, %165 in 0 : vector<1x16x32xf32>, vector<1x16x32xf32>, vector<1x16x32xf32>, vector<1x16x32xf32> -> vector<4x16x32xf32>
    %167 = arith.truncf %166 : vector<4x16x32xf32> to vector<4x16x32xbf16>
    "tpu.trace_start"() <{level = 10 : i32, message = "nqd,nkd->nqk"}> : () -> ()
    %cst_67 = arith.constant dense<0.000000e+00> : vector<4x16x16xf32>
    %168 = tpu.matmul %151, %159, %cst_67 {dimension_numbers = #tpu.dot_dimension_numbers<[2], [2], [1], [1], [0, 0, 0, 1, 1, 1], [0], [0]>} : vector<4x16x32xbf16>, vector<4x16x32xbf16>, vector<4x16x16xf32> -> vector<4x16x16xf32>
    "tpu.trace_stop"() : () -> ()
    %cst_68 = arith.constant dense<0xFF800000> : vector<4x16xf32>
    %169 = vector.multi_reduction <maximumf>, %168, %cst_68 [2] : vector<4x16x16xf32> to vector<4x16xf32>
    %170 = vector.shape_cast %169 : vector<4x16xf32> to vector<4x16x1xf32>
    %171 = vector.broadcast %170 : vector<4x16x1xf32> to vector<4x16x16xf32>
    %172 = arith.subf %168, %171 : vector<4x16x16xf32>
    %173 = math.exp %172 : vector<4x16x16xf32>
    %cst_69 = arith.constant dense<0.000000e+00> : vector<4x16xf32>
    %174 = vector.multi_reduction <add>, %173, %cst_69 [2] : vector<4x16x16xf32> to vector<4x16xf32>
    %175 = vector.shape_cast %174 : vector<4x16xf32> to vector<4x16x1xf32>
    %176 = vector.broadcast %175 : vector<4x16x1xf32> to vector<4x16x16xf32>
    %177 = arith.divf %173, %176 : vector<4x16x16xf32>
    %178 = arith.truncf %177 : vector<4x16x16xf32> to vector<4x16x16xbf16>
    "tpu.trace_start"() <{level = 10 : i32, message = "nqk,nkd->nqd"}> : () -> ()
    %cst_70 = arith.constant dense<0.000000e+00> : vector<4x16x32xf32>
    %179 = tpu.matmul %178, %167, %cst_70 {dimension_numbers = #tpu.dot_dimension_numbers<[2], [1], [1], [2], [0, 0, 0, 1, 1, 2], [0], [0]>} : vector<4x16x16xbf16>, vector<4x16x32xbf16>, vector<4x16x32xf32> -> vector<4x16x32xf32>
    "tpu.trace_stop"() : () -> ()
    %180 = vector.extract_strided_slice %179 {offsets = [0, 0, 0], sizes = [1, 16, 32], strides = [1, 1, 1]} : vector<4x16x32xf32> to vector<1x16x32xf32>
    %181 = vector.extract_strided_slice %179 {offsets = [1, 0, 0], sizes = [1, 16, 32], strides = [1, 1, 1]} : vector<4x16x32xf32> to vector<1x16x32xf32>
    %182 = vector.extract_strided_slice %179 {offsets = [2, 0, 0], sizes = [1, 16, 32], strides = [1, 1, 1]} : vector<4x16x32xf32> to vector<1x16x32xf32>
    %183 = vector.extract_strided_slice %179 {offsets = [3, 0, 0], sizes = [1, 16, 32], strides = [1, 1, 1]} : vector<4x16x32xf32> to vector<1x16x32xf32>
    %184 = tpu.concatenate %180, %181, %182, %183 in 2 : vector<1x16x32xf32>, vector<1x16x32xf32>, vector<1x16x32xf32>, vector<1x16x32xf32> -> vector<1x16x128xf32>
    %185 = vector.shape_cast %184 : vector<1x16x128xf32> to vector<16x128xf32>
    %c1_71 = arith.constant 1 : index
    %c0_72 = arith.constant 0 : index
    %c0_73 = arith.constant 0 : index
    %186 = vector.load %arg5[%c1_71, %c0_72, %c0_73] : memref<2x128x128xbf16, #tpu.memory_space<vmem>>, vector<1x128x128xbf16>
    %187 = vector.shape_cast %186 : vector<1x128x128xbf16> to vector<128x128xbf16>
    %188 = arith.truncf %185 : vector<16x128xf32> to vector<16x128xbf16>
    %cst_74 = arith.constant dense<0.000000e+00> : vector<16x128xf32>
    %189 = tpu.matmul %188, %187, %cst_74 {dimension_numbers = #tpu.dot_dimension_numbers<[1], [0], [0], [1], [0, 0, 1, 1], [], []>} : vector<16x128xbf16>, vector<128x128xbf16>, vector<16x128xf32> -> vector<16x128xf32>
    %c1_75 = arith.constant 1 : index
    %c0_76 = arith.constant 0 : index
    %c0_77 = arith.constant 0 : index
    %190 = vector.load %arg6[%c1_75, %c0_76, %c0_77] : memref<2x1x128xf32, #tpu.memory_space<vmem>>, vector<1x1x128xf32>
    %191 = vector.shape_cast %190 : vector<1x1x128xf32> to vector<1x128xf32>
    %192 = vector.broadcast %191 : vector<1x128xf32> to vector<16x128xf32>
    %193 = arith.addf %189, %192 : vector<16x128xf32>
    %194 = arith.addf %133, %193 : vector<16x128xf32>
    %c1_78 = arith.constant 1 : index
    %c0_79 = arith.constant 0 : index
    %c0_80 = arith.constant 0 : index
    %195 = vector.load %arg7[%c1_78, %c0_79, %c0_80] : memref<2x1x128xf32, #tpu.memory_space<vmem>>, vector<1x1x128xf32>
    %196 = vector.shape_cast %195 : vector<1x1x128xf32> to vector<1x128xf32>
    %c1_81 = arith.constant 1 : index
    %c0_82 = arith.constant 0 : index
    %c0_83 = arith.constant 0 : index
    %197 = vector.load %arg8[%c1_81, %c0_82, %c0_83] : memref<2x1x128xf32, #tpu.memory_space<vmem>>, vector<1x1x128xf32>
    %198 = vector.shape_cast %197 : vector<1x1x128xf32> to vector<1x128xf32>
    %cst_84 = arith.constant dense<0.000000e+00> : vector<16xf32>
    %199 = vector.multi_reduction <add>, %194, %cst_84 [1] : vector<16x128xf32> to vector<16xf32>
    %200 = vector.shape_cast %199 : vector<16xf32> to vector<16x1xf32>
    %cst_85 = arith.constant 1.280000e+02 : f32
    %201 = vector.broadcast %cst_85 : f32 to vector<16x1xf32>
    %202 = arith.divf %200, %201 : vector<16x1xf32>
    %203 = vector.broadcast %202 : vector<16x1xf32> to vector<16x128xf32>
    %204 = arith.subf %194, %203 : vector<16x128xf32>
    %205 = arith.mulf %204, %204 : vector<16x128xf32>
    %cst_86 = arith.constant dense<0.000000e+00> : vector<16xf32>
    %206 = vector.multi_reduction <add>, %205, %cst_86 [1] : vector<16x128xf32> to vector<16xf32>
    %207 = vector.shape_cast %206 : vector<16xf32> to vector<16x1xf32>
    %cst_87 = arith.constant 1.280000e+02 : f32
    %208 = vector.broadcast %cst_87 : f32 to vector<16x1xf32>
    %209 = arith.divf %207, %208 : vector<16x1xf32>
    %cst_88 = arith.constant 9.99999974E-6 : f32
    %210 = vector.broadcast %cst_88 : f32 to vector<16x1xf32>
    %211 = arith.addf %209, %210 : vector<16x1xf32>
    %212 = math.rsqrt %211 : vector<16x1xf32>
    %213 = vector.broadcast %212 : vector<16x1xf32> to vector<16x128xf32>
    %214 = arith.mulf %204, %213 : vector<16x128xf32>
    %215 = vector.broadcast %196 : vector<1x128xf32> to vector<16x128xf32>
    %216 = arith.mulf %214, %215 : vector<16x128xf32>
    %217 = vector.broadcast %198 : vector<1x128xf32> to vector<16x128xf32>
    %218 = arith.addf %216, %217 : vector<16x128xf32>
    %c1_89 = arith.constant 1 : index
    %c0_90 = arith.constant 0 : index
    %c0_91 = arith.constant 0 : index
    %219 = vector.load %arg9[%c1_89, %c0_90, %c0_91] : memref<2x128x256xbf16, #tpu.memory_space<vmem>>, vector<1x128x256xbf16>
    %220 = vector.shape_cast %219 : vector<1x128x256xbf16> to vector<128x256xbf16>
    %221 = arith.truncf %218 : vector<16x128xf32> to vector<16x128xbf16>
    %cst_92 = arith.constant dense<0.000000e+00> : vector<16x256xf32>
    %222 = tpu.matmul %221, %220, %cst_92 {dimension_numbers = #tpu.dot_dimension_numbers<[1], [0], [0], [1], [0, 0, 1, 1], [], []>} : vector<16x128xbf16>, vector<128x256xbf16>, vector<16x256xf32> -> vector<16x256xf32>
    %c1_93 = arith.constant 1 : index
    %c0_94 = arith.constant 0 : index
    %c0_95 = arith.constant 0 : index
    %223 = vector.load %arg10[%c1_93, %c0_94, %c0_95] : memref<2x1x256xf32, #tpu.memory_space<vmem>>, vector<1x1x256xf32>
    %224 = vector.shape_cast %223 : vector<1x1x256xf32> to vector<1x256xf32>
    %225 = vector.broadcast %224 : vector<1x256xf32> to vector<16x256xf32>
    %226 = arith.addf %222, %225 : vector<16x256xf32>
    %cst_96 = arith.constant 0.000000e+00 : f32
    %227 = vector.broadcast %cst_96 : f32 to vector<16x256xf32>
    %228 = arith.maximumf %226, %227 : vector<16x256xf32>
    %c1_97 = arith.constant 1 : index
    %c0_98 = arith.constant 0 : index
    %c0_99 = arith.constant 0 : index
    %229 = vector.load %arg11[%c1_97, %c0_98, %c0_99] : memref<2x256x128xbf16, #tpu.memory_space<vmem>>, vector<1x256x128xbf16>
    %230 = vector.shape_cast %229 : vector<1x256x128xbf16> to vector<256x128xbf16>
    %231 = arith.truncf %228 : vector<16x256xf32> to vector<16x256xbf16>
    %cst_100 = arith.constant dense<0.000000e+00> : vector<16x128xf32>
    %232 = tpu.matmul %231, %230, %cst_100 {dimension_numbers = #tpu.dot_dimension_numbers<[1], [0], [0], [1], [0, 0, 1, 1], [], []>} : vector<16x256xbf16>, vector<256x128xbf16>, vector<16x128xf32> -> vector<16x128xf32>
    %c1_101 = arith.constant 1 : index
    %c0_102 = arith.constant 0 : index
    %c0_103 = arith.constant 0 : index
    %233 = vector.load %arg12[%c1_101, %c0_102, %c0_103] : memref<2x1x128xf32, #tpu.memory_space<vmem>>, vector<1x1x128xf32>
    %234 = vector.shape_cast %233 : vector<1x1x128xf32> to vector<1x128xf32>
    %235 = vector.broadcast %234 : vector<1x128xf32> to vector<16x128xf32>
    %236 = arith.addf %232, %235 : vector<16x128xf32>
    %237 = arith.addf %218, %236 : vector<16x128xf32>
    %c1_104 = arith.constant 1 : index
    %c0_105 = arith.constant 0 : index
    %c0_106 = arith.constant 0 : index
    %238 = vector.load %arg13[%c1_104, %c0_105, %c0_106] : memref<2x1x128xf32, #tpu.memory_space<vmem>>, vector<1x1x128xf32>
    %239 = vector.shape_cast %238 : vector<1x1x128xf32> to vector<1x128xf32>
    %c1_107 = arith.constant 1 : index
    %c0_108 = arith.constant 0 : index
    %c0_109 = arith.constant 0 : index
    %240 = vector.load %arg14[%c1_107, %c0_108, %c0_109] : memref<2x1x128xf32, #tpu.memory_space<vmem>>, vector<1x1x128xf32>
    %241 = vector.shape_cast %240 : vector<1x1x128xf32> to vector<1x128xf32>
    %cst_110 = arith.constant dense<0.000000e+00> : vector<16xf32>
    %242 = vector.multi_reduction <add>, %237, %cst_110 [1] : vector<16x128xf32> to vector<16xf32>
    %243 = vector.shape_cast %242 : vector<16xf32> to vector<16x1xf32>
    %cst_111 = arith.constant 1.280000e+02 : f32
    %244 = vector.broadcast %cst_111 : f32 to vector<16x1xf32>
    %245 = arith.divf %243, %244 : vector<16x1xf32>
    %246 = vector.broadcast %245 : vector<16x1xf32> to vector<16x128xf32>
    %247 = arith.subf %237, %246 : vector<16x128xf32>
    %248 = arith.mulf %247, %247 : vector<16x128xf32>
    %cst_112 = arith.constant dense<0.000000e+00> : vector<16xf32>
    %249 = vector.multi_reduction <add>, %248, %cst_112 [1] : vector<16x128xf32> to vector<16xf32>
    %250 = vector.shape_cast %249 : vector<16xf32> to vector<16x1xf32>
    %cst_113 = arith.constant 1.280000e+02 : f32
    %251 = vector.broadcast %cst_113 : f32 to vector<16x1xf32>
    %252 = arith.divf %250, %251 : vector<16x1xf32>
    %cst_114 = arith.constant 9.99999974E-6 : f32
    %253 = vector.broadcast %cst_114 : f32 to vector<16x1xf32>
    %254 = arith.addf %252, %253 : vector<16x1xf32>
    %255 = math.rsqrt %254 : vector<16x1xf32>
    %256 = vector.broadcast %255 : vector<16x1xf32> to vector<16x128xf32>
    %257 = arith.mulf %247, %256 : vector<16x128xf32>
    %258 = vector.broadcast %239 : vector<1x128xf32> to vector<16x128xf32>
    %259 = arith.mulf %257, %258 : vector<16x128xf32>
    %260 = vector.broadcast %241 : vector<1x128xf32> to vector<16x128xf32>
    %261 = arith.addf %259, %260 : vector<16x128xf32>
    %262 = vector.shape_cast %261 : vector<16x128xf32> to vector<1x16x128xf32>
    %c0_115 = arith.constant 0 : index
    %c0_116 = arith.constant 0 : index
    %c0_117 = arith.constant 0 : index
    %263 = vector.load %arg15[%c0_115, %c0_116, %c0_117] : memref<1x16x128xf32, #tpu.memory_space<vmem>>, vector<1x16x128xf32>
    tpu.vector_store %arg15[%c0_115, %c0_116, %c0_117], %262 {strides = array<i32>} : memref<1x16x128xf32, #tpu.memory_space<vmem>>, vector<1x16x128xf32>,
    return
  }
  func.func @transform_0(%arg0: i32) -> (i32, i32, i32) {
    %c0_i32 = arith.constant 0 : i32
    %c0_i32_0 = arith.constant 0 : i32
    %c0_i32_1 = arith.constant 0 : i32
    return %arg0, %c0_i32, %c0_i32_0 : i32, i32, i32
  }
  func.func @transform_1(%arg0: i32) -> (i32, i32, i32) {
    %c0_i32 = arith.constant 0 : i32
    %c0_i32_0 = arith.constant 0 : i32
    %c0_i32_1 = arith.constant 0 : i32
    %c0_i32_2 = arith.constant 0 : i32
    return %c0_i32, %c0_i32_0, %c0_i32_1 : i32, i32, i32
  }
  func.func @transform_2(%arg0: i32) -> (i32, i32, i32) {
    %c0_i32 = arith.constant 0 : i32
    %c0_i32_0 = arith.constant 0 : i32
    %c0_i32_1 = arith.constant 0 : i32
    %c0_i32_2 = arith.constant 0 : i32
    return %c0_i32, %c0_i32_0, %c0_i32_1 : i32, i32, i32
  }
  func.func @transform_3(%arg0: i32) -> (i32, i32, i32) {
    %c0_i32 = arith.constant 0 : i32
    %c0_i32_0 = arith.constant 0 : i32
    %c0_i32_1 = arith.constant 0 : i32
    %c0_i32_2 = arith.constant 0 : i32
    return %c0_i32, %c0_i32_0, %c0_i32_1 : i32, i32, i32
  }
  func.func @transform_4(%arg0: i32) -> (i32, i32, i32) {
    %c0_i32 = arith.constant 0 : i32
    %c0_i32_0 = arith.constant 0 : i32
    %c0_i32_1 = arith.constant 0 : i32
    %c0_i32_2 = arith.constant 0 : i32
    return %c0_i32, %c0_i32_0, %c0_i32_1 : i32, i32, i32
  }
  func.func @transform_5(%arg0: i32) -> (i32, i32, i32) {
    %c0_i32 = arith.constant 0 : i32
    %c0_i32_0 = arith.constant 0 : i32
    %c0_i32_1 = arith.constant 0 : i32
    %c0_i32_2 = arith.constant 0 : i32
    return %c0_i32, %c0_i32_0, %c0_i32_1 : i32, i32, i32
  }
  func.func @transform_6(%arg0: i32) -> (i32, i32, i32) {
    %c0_i32 = arith.constant 0 : i32
    %c0_i32_0 = arith.constant 0 : i32
    %c0_i32_1 = arith.constant 0 : i32
    %c0_i32_2 = arith.constant 0 : i32
    return %c0_i32, %c0_i32_0, %c0_i32_1 : i32, i32, i32
  }
  func.func @transform_7(%arg0: i32) -> (i32, i32, i32) {
    %c0_i32 = arith.constant 0 : i32
    %c0_i32_0 = arith.constant 0 : i32
    %c0_i32_1 = arith.constant 0 : i32
    %c0_i32_2 = arith.constant 0 : i32
    return %c0_i32, %c0_i32_0, %c0_i32_1 : i32, i32, i32
  }
  func.func @transform_8(%arg0: i32) -> (i32, i32, i32) {
    %c0_i32 = arith.constant 0 : i32
    %c0_i32_0 = arith.constant 0 : i32
    %c0_i32_1 = arith.constant 0 : i32
    %c0_i32_2 = arith.constant 0 : i32
    return %c0_i32, %c0_i32_0, %c0_i32_1 : i32, i32, i32
  }
  func.func @transform_9(%arg0: i32) -> (i32, i32, i32) {
    %c0_i32 = arith.constant 0 : i32
    %c0_i32_0 = arith.constant 0 : i32
    %c0_i32_1 = arith.constant 0 : i32
    %c0_i32_2 = arith.constant 0 : i32
    return %c0_i32, %c0_i32_0, %c0_i32_1 : i32, i32, i32
  }
  func.func @transform_10(%arg0: i32) -> (i32, i32, i32) {
    %c0_i32 = arith.constant 0 : i32
    %c0_i32_0 = arith.constant 0 : i32
    %c0_i32_1 = arith.constant 0 : i32
    %c0_i32_2 = arith.constant 0 : i32
    return %c0_i32, %c0_i32_0, %c0_i32_1 : i32, i32, i32
  }
  func.func @transform_11(%arg0: i32) -> (i32, i32, i32) {
    %c0_i32 = arith.constant 0 : i32
    %c0_i32_0 = arith.constant 0 : i32
    %c0_i32_1 = arith.constant 0 : i32
    %c0_i32_2 = arith.constant 0 : i32
    return %c0_i32, %c0_i32_0, %c0_i32_1 : i32, i32, i32
  }
  func.func @transform_12(%arg0: i32) -> (i32, i32, i32) {
    %c0_i32 = arith.constant 0 : i32
    %c0_i32_0 = arith.constant 0 : i32
    %c0_i32_1 = arith.constant 0 : i32
    %c0_i32_2 = arith.constant 0 : i32
    return %c0_i32, %c0_i32_0, %c0_i32_1 : i32, i32, i32
  }
  func.func @transform_13(%arg0: i32) -> (i32, i32, i32) {
    %c0_i32 = arith.constant 0 : i32
    %c0_i32_0 = arith.constant 0 : i32
    %c0_i32_1 = arith.constant 0 : i32
    %c0_i32_2 = arith.constant 0 : i32
    return %c0_i32, %c0_i32_0, %c0_i32_1 : i32, i32, i32
  }
  func.func @transform_14(%arg0: i32) -> (i32, i32, i32) {
    %c0_i32 = arith.constant 0 : i32
    %c0_i32_0 = arith.constant 0 : i32
    %c0_i32_1 = arith.constant 0 : i32
    return %arg0, %c0_i32, %c0_i32_0 : i32, i32, i32
  }
}

</mosaic_0001>

<llo_original>
// kernel: signal_att_forward.1
$region0: #{signal_att_forward.1}
  #allocation0 [shape = 'u32[]', space=smem, size = 0x4, offset = 0x4, fixed_abs, tag = 'smem constant byte address 0x4 - core index']
  #allocation1 [shape = 'u32[144,128]{1,0:T(1,128)}', space=vmem, size = 0x12000, scoped, tag = 'internal scratch']
  %s0 = inlined_call_operand.vmem [shape: f32[2,16,128], index: 0, kind: input, shape index: {}]
  %s1 = inlined_call_operand.vmem [shape: f32[1,16,128], index: 1, kind: input, shape index: {}]
  %s2 = inlined_call_operand.hbm [shape: bf16[2,128,384], index: 2, kind: input, shape index: {}]
  %s3 = inlined_call_operand.hbm [shape: f32[2,1,384], index: 3, kind: input, shape index: {}]
  %s4 = inlined_call_operand.hbm [shape: bf16[2,128,128], index: 4, kind: input, shape index: {}]
  %s5 = inlined_call_operand.hbm [shape: f32[2,1,128], index: 5, kind: input, shape index: {}]
  %s6 = inlined_call_operand.hbm [shape: f32[2,1,128], index: 6, kind: input, shape index: {}]
  %s7 = inlined_call_operand.hbm [shape: f32[2,1,128], index: 7, kind: input, shape index: {}]
  %s8 = inlined_call_operand.hbm [shape: bf16[2,128,256], index: 8, kind: input, shape index: {}]
  %s9 = inlined_call_operand.hbm [shape: f32[2,1,256], index: 9, kind: input, shape index: {}]
  %s10 = inlined_call_operand.hbm [shape: bf16[2,256,128], index: 10, kind: input, shape index: {}]
  %s11 = inlined_call_operand.hbm [shape: f32[2,1,128], index: 11, kind: input, shape index: {}]
  %s12 = inlined_call_operand.hbm [shape: f32[2,1,128], index: 12, kind: input, shape index: {}]
  %s13 = inlined_call_operand.hbm [shape: f32[2,1,128], index: 13, kind: input, shape index: {}]
  %s14 = inlined_call_operand.hbm [shape: f32[2,16,128], index: 14, kind: output, shape index: {}]
  %s15 = sld [smem:[#allocation0]]
  $region137: #{signal_att_forward.1} parent=0
    _
  %s17 = ssub.s32 1, %s15
  %s18 = scalar_select 0, %s17, %s15
  $region1: #{signal_att_forward.1} parent=0
    #allocation2 [shape = 'u8[196608]{0}', space=vmem, size = 0x30000, scoped, tag = 'input window, operand 2, single buffered']
    #allocation3 [shape = 's32[2]{0}', space=sflag, size = 0x8, scoped, tag = 'scoped memory for signal_att_forward.1']
    #allocation4 [shape = 's32[2]{0}', space=sflag, size = 0x8, scoped, tag = 'scoped memory for signal_att_forward.1']
    #allocation5 [shape = 'u8[3072]{0}', space=vmem, size = 0xc00, scoped, tag = 'input window, operand 3, single buffered']
    #allocation6 [shape = 's32[1]{0}', space=sflag, size = 0x4, scoped, tag = 'scoped memory for signal_att_forward.1']
    #allocation7 [shape = 'u8[65536]{0}', space=vmem, size = 0x10000, scoped, tag = 'input window, operand 4, single buffered']
    #allocation8 [shape = 'u8[1024]{0}', space=vmem, size = 0x400, scoped, tag = 'input window, operand 5, single buffered']
    #allocation9 [shape = 's32[1]{0}', space=sflag, size = 0x4, scoped, tag = 'scoped memory for signal_att_forward.1']
    #allocation10 [shape = 'u8[1024]{0}', space=vmem, size = 0x400, scoped, tag = 'input window, operand 6, single buffered']
    #allocation11 [shape = 'u8[1024]{0}', space=vmem, size = 0x400, scoped, tag = 'input window, operand 7, single buffered']
    #allocation12 [shape = 's32[1]{0}', space=sflag, size = 0x4, scoped, tag = 'scoped memory for signal_att_forward.1']
    #allocation13 [shape = 'u8[131072]{0}', space=vmem, size = 0x20000, scoped, tag = 'input window, operand 8, single buffered']
    #allocation14 [shape = 'u8[2048]{0}', space=vmem, size = 0x800, scoped, tag = 'input window, operand 9, single buffered']
    #allocation15 [shape = 's32[1]{0}', space=sflag, size = 0x4, scoped, tag = 'scoped memory for signal_att_forward.1']
    #allocation16 [shape = 'u8[131072]{0}', space=vmem, size = 0x20000, scoped, tag = 'input window, operand 10, single buffered']
    #allocation17 [shape = 'u8[1024]{0}', space=vmem, size = 0x400, scoped, tag = 'input window, operand 11, single buffered']
    #allocation18 [shape = 's32[1]{0}', space=sflag, size = 0x4, scoped, tag = 'scoped memory for signal_att_forward.1']
    #allocation19 [shape = 'u8[1024]{0}', space=vmem, size = 0x400, scoped, tag = 'input window, operand 12, single buffered']
    #allocation20 [shape = 'u8[1024]{0}', space=vmem, size = 0x400, scoped, tag = 'input window, operand 13, single buffered']
    #allocation21 [shape = 's32[1]{0}', space=sflag, size = 0x4, scoped, tag = 'scoped memory for signal_att_forward.1']
    #allocation22 [shape = 'u8[16384]{0}', space=vmem, size = 0x4000, scoped, tag = 'output window, operand 0']
    %19 = vsyncpa [#allocation3], 0
    %20 = vsyncpa [#allocation6], 0
    %21 = vsyncpa [#allocation9], 0
    %22 = vsyncpa [#allocation12], 0
    %23 = vsyncpa [#allocation15], 0
    %24 = vsyncpa [#allocation18], 0
    %25 = vsyncpa [#allocation21], 0
    %26 = vsyncpa [#allocation4], 0
    %s27 = scalar_lea.sflag [#allocation4], 1
    %28 = vsyncpa %s27, 0
    loop: start=0, step=1, limit=4
    $region2: #{signal_att_forward.1} parent=1 // loop_pre_header
      _
    $region3: #{signal_att_forward.1} parent=1 // loop_header
      %s30 = sphi 0, %s34
      %p31 = scmp.ge.s32.totalorder %s30, 4
      %s40 = sphi 0, %s42
      %s43 = sphi 0, %s40
      %s44 = sphi 0, %s43
      %s60 = sphi 0, %s44
      %s64 = sphi 0, %s64
      %s66 = sphi 0, %s64
      %s67 = sphi 0, %s66
      %s81 = sphi 0, %s67
      %s85 = sphi 0, %s85
      %s87 = sphi 0, %s85
      %s88 = sphi 0, %s87
      %s102 = sphi 0, %s88
      %s106 = sphi 0, %s106
      %s108 = sphi 0, %s106
      %s109 = sphi 0, %s108
      %s123 = sphi 0, %s109
      %s127 = sphi 0, %s127
      %s129 = sphi 0, %s127
      %s130 = sphi 0, %s129
      %s144 = sphi 0, %s130
      %s148 = sphi 0, %s148
      %s150 = sphi 0, %s148
      %s151 = sphi 0, %s150
      %s165 = sphi 0, %s151
      %s169 = sphi 0, %s169
      %s171 = sphi 0, %s169
      %s172 = sphi 0, %s171
      %s186 = sphi 0, %s172
      %s190 = sphi 0, %s190
      %s192 = sphi 0, %s190
      %s193 = sphi 0, %s192
      %s207 = sphi 0, %s193
      %s211 = sphi 0, %s211
      %s213 = sphi 0, %s211
      %s214 = sphi 0, %s213
      %s228 = sphi 0, %s214
      %s232 = sphi 0, %s232
      %s234 = sphi 0, %s232
      %s235 = sphi 0, %s234
      %s249 = sphi 0, %s235
      %s253 = sphi 0, %s253
      %s255 = sphi 0, %s253
      %s256 = sphi 0, %s255
      %s270 = sphi 0, %s256
      %s274 = sphi 0, %s274
      %s276 = sphi 0, %s274
      %s277 = sphi 0, %s276
      %s291 = sphi 0, %s277
      %s295 = sphi 0, %s295
      %s297 = sphi 0, %s295
      %s298 = sphi 0, %s297
      %s312 = sphi 0, %s298
      %s316 = sphi 0, %s316
      %s318 = sphi 0, %s316
      %s319 = sphi 0, %s318
      %s333 = sphi 0, %s319
      %s339 = sphi 0, %s341
      %s342 = sphi 0, %s339
      %s343 = sphi 0, %s342
      %s359 = sphi 0, %s343
    $region4: #{signal_att_forward.1} parent=1 // loop_header_branch
      %33 = sbr.rel (%p31) target = $region8
    $region5: #{signal_att_forward.1} parent=1 // loop_body
      %s35 = ssub.s32 %s30, 1
      %s36 = ssub.s32 %s30, 2
      %s37 = sadd.s32 %s30, 1
      %s38 = ssub.s32 %s30, %s37
      %p39 = scmp.eq.s32.totalorder %s38, 0
      %s41 = sadd.s32 %s40, 1
      %s42 = scalar_select %p39, %s40, %s41
      %p45 = pneg %p39
      %p46 = scmp.eq.s32.totalorder %s30, 1
      %p47 = por %p45, %p46
      %p48 = scmp.ne.s32.totalorder %s40, %s43
      %p49 = scmp.eq.s32.totalorder %s30, 0
      %p50 = por %p48, %p49
      %p51 = scmp.ne.s32.totalorder %s40, %s43
      %p52 = scmp.eq.s32.totalorder %s35, 1
      %p53 = por %p51, %p52
      %p54 = scmp.ne.s32.totalorder %s43, %s44
      %p55 = scmp.eq.s32.totalorder %s35, 0
      %p56 = por %p54, %p55
      %p57 = scmp.ne.s32.totalorder %s43, %s44
      %p58 = scmp.eq.s32.totalorder %s36, 1
      %p59 = por %p57, %p58
      %p61 = scmp.ne.s32.totalorder %s44, %s60
      %p62 = scmp.eq.s32.totalorder %s36, 0
      %p63 = por %p61, %p62
      %s65 = sadd.s32 %s64, 1
      %p68 = scmp.eq.s32.totalorder %s30, 1
      %p69 = scmp.ne.s32.totalorder %s64, %s66
      %p70 = scmp.eq.s32.totalorder %s30, 0
      %p71 = por %p69, %p70
      %p72 = scmp.ne.s32.totalorder %s64, %s66
      %p73 = scmp.eq.s32.totalorder %s35, 1
      %p74 = por %p72, %p73
      %p75 = scmp.ne.s32.totalorder %s66, %s67
      %p76 = scmp.eq.s32.totalorder %s35, 0
      %p77 = por %p75, %p76
      %p78 = scmp.ne.s32.totalorder %s66, %s67
      %p79 = scmp.eq.s32.totalorder %s36, 1
      %p80 = por %p78, %p79
      %p82 = scmp.ne.s32.totalorder %s67, %s81
      %p83 = scmp.eq.s32.totalorder %s36, 0
      %p84 = por %p82, %p83
      %s86 = sadd.s32 %s85, 1
      %p89 = scmp.eq.s32.totalorder %s30, 1
      %p90 = scmp.ne.s32.totalorder %s85, %s87
      %p91 = scmp.eq.s32.totalorder %s30, 0
      %p92 = por %p90, %p91
      %p93 = scmp.ne.s32.totalorder %s85, %s87
      %p94 = scmp.eq.s32.totalorder %s35, 1
      %p95 = por %p93, %p94
      %p96 = scmp.ne.s32.totalorder %s87, %s88
      %p97 = scmp.eq.s32.totalorder %s35, 0
      %p98 = por %p96, %p97
      %p99 = scmp.ne.s32.totalorder %s87, %s88
      %p100 = scmp.eq.s32.totalorder %s36, 1
      %p101 = por %p99, %p100
      %p103 = scmp.ne.s32.totalorder %s88, %s102
      %p104 = scmp.eq.s32.totalorder %s36, 0
      %p105 = por %p103, %p104
      %s107 = sadd.s32 %s106, 1
      %p110 = scmp.eq.s32.totalorder %s30, 1
      %p111 = scmp.ne.s32.totalorder %s106, %s108
      %p112 = scmp.eq.s32.totalorder %s30, 0
      %p113 = por %p111, %p112
      %p114 = scmp.ne.s32.totalorder %s106, %s108
      %p115 = scmp.eq.s32.totalorder %s35, 1
      %p116 = por %p114, %p115
      %p117 = scmp.ne.s32.totalorder %s108, %s109
      %p118 = scmp.eq.s32.totalorder %s35, 0
      %p119 = por %p117, %p118
      %p120 = scmp.ne.s32.totalorder %s108, %s109
      %p121 = scmp.eq.s32.totalorder %s36, 1
      %p122 = por %p120, %p121
      %p124 = scmp.ne.s32.totalorder %s109, %s123
      %p125 = scmp.eq.s32.totalorder %s36, 0
      %p126 = por %p124, %p125
      %s128 = sadd.s32 %s127, 1
      %p131 = scmp.eq.s32.totalorder %s30, 1
      %p132 = scmp.ne.s32.totalorder %s127, %s129
      %p133 = scmp.eq.s32.totalorder %s30, 0
      %p134 = por %p132, %p133
      %p135 = scmp.ne.s32.totalorder %s127, %s129
      %p136 = scmp.eq.s32.totalorder %s35, 1
      %p137 = por %p135, %p136
      %p138 = scmp.ne.s32.totalorder %s129, %s130
      %p139 = scmp.eq.s32.totalorder %s35, 0
      %p140 = por %p138, %p139
      %p141 = scmp.ne.s32.totalorder %s129, %s130
      %p142 = scmp.eq.s32.totalorder %s36, 1
      %p143 = por %p141, %p142
      %p145 = scmp.ne.s32.totalorder %s130, %s144
      %p146 = scmp.eq.s32.totalorder %s36, 0
      %p147 = por %p145, %p146
      %s149 = sadd.s32 %s148, 1
      %p152 = scmp.eq.s32.totalorder %s30, 1
      %p153 = scmp.ne.s32.totalorder %s148, %s150
      %p154 = scmp.eq.s32.totalorder %s30, 0
      %p155 = por %p153, %p154
      %p156 = scmp.ne.s32.totalorder %s148, %s150
      %p157 = scmp.eq.s32.totalorder %s35, 1
      %p158 = por %p156, %p157
      %p159 = scmp.ne.s32.totalorder %s150, %s151
      %p160 = scmp.eq.s32.totalorder %s35, 0
      %p161 = por %p159, %p160
      %p162 = scmp.ne.s32.totalorder %s150, %s151
      %p163 = scmp.eq.s32.totalorder %s36, 1
      %p164 = por %p162, %p163
      %p166 = scmp.ne.s32.totalorder %s151, %s165
      %p167 = scmp.eq.s32.totalorder %s36, 0
      %p168 = por %p166, %p167
      %s170 = sadd.s32 %s169, 1
      %p173 = scmp.eq.s32.totalorder %s30, 1
      %p174 = scmp.ne.s32.totalorder %s169, %s171
      %p175 = scmp.eq.s32.totalorder %s30, 0
      %p176 = por %p174, %p175
      %p177 = scmp.ne.s32.totalorder %s169, %s171
      %p178 = scmp.eq.s32.totalorder %s35, 1
      %p179 = por %p177, %p178
      %p180 = scmp.ne.s32.totalorder %s171, %s172
      %p181 = scmp.eq.s32.totalorder %s35, 0
      %p182 = por %p180, %p181
      %p183 = scmp.ne.s32.totalorder %s171, %s172
      %p184 = scmp.eq.s32.totalorder %s36, 1
      %p185 = por %p183, %p184
      %p187 = scmp.ne.s32.totalorder %s172, %s186
      %p188 = scmp.eq.s32.totalorder %s36, 0
      %p189 = por %p187, %p188
      %s191 = sadd.s32 %s190, 1
      %p194 = scmp.eq.s32.totalorder %s30, 1
      %p195 = scmp.ne.s32.totalorder %s190, %s192
      %p196 = scmp.eq.s32.totalorder %s30, 0
      %p197 = por %p195, %p196
      %p198 = scmp.ne.s32.totalorder %s190, %s192
      %p199 = scmp.eq.s32.totalorder %s35, 1
      %p200 = por %p198, %p199
      %p201 = scmp.ne.s32.totalorder %s192, %s193
      %p202 = scmp.eq.s32.totalorder %s35, 0
      %p203 = por %p201, %p202
      %p204 = scmp.ne.s32.totalorder %s192, %s193
      %p205 = scmp.eq.s32.totalorder %s36, 1
      %p206 = por %p204, %p205
      %p208 = scmp.ne.s32.totalorder %s193, %s207
      %p209 = scmp.eq.s32.totalorder %s36, 0
      %p210 = por %p208, %p209
      %s212 = sadd.s32 %s211, 1
      %p215 = scmp.eq.s32.totalorder %s30, 1
      %p216 = scmp.ne.s32.totalorder %s211, %s213
      %p217 = scmp.eq.s32.totalorder %s30, 0
      %p218 = por %p216, %p217
      %p219 = scmp.ne.s32.totalorder %s211, %s213
      %p220 = scmp.eq.s32.totalorder %s35, 1
      %p221 = por %p219, %p220
      %p222 = scmp.ne.s32.totalorder %s213, %s214
      %p223 = scmp.eq.s32.totalorder %s35, 0
      %p224 = por %p222, %p223
      %p225 = scmp.ne.s32.totalorder %s213, %s214
      %p226 = scmp.eq.s32.totalorder %s36, 1
      %p227 = por %p225, %p226
      %p229 = scmp.ne.s32.totalorder %s214, %s228
      %p230 = scmp.eq.s32.totalorder %s36, 0
      %p231 = por %p229, %p230
      %s233 = sadd.s32 %s232, 1
      %p236 = scmp.eq.s32.totalorder %s30, 1
      %p237 = scmp.ne.s32.totalorder %s232, %s234
      %p238 = scmp.eq.s32.totalorder %s30, 0
      %p239 = por %p237, %p238
      %p240 = scmp.ne.s32.totalorder %s232, %s234
      %p241 = scmp.eq.s32.totalorder %s35, 1
      %p242 = por %p240, %p241
      %p243 = scmp.ne.s32.totalorder %s234, %s235
      %p244 = scmp.eq.s32.totalorder %s35, 0
      %p245 = por %p243, %p244
      %p246 = scmp.ne.s32.totalorder %s234, %s235
      %p247 = scmp.eq.s32.totalorder %s36, 1
      %p248 = por %p246, %p247
      %p250 = scmp.ne.s32.totalorder %s235, %s249
      %p251 = scmp.eq.s32.totalorder %s36, 0
      %p252 = por %p250, %p251
      %s254 = sadd.s32 %s253, 1
      %p257 = scmp.eq.s32.totalorder %s30, 1
      %p258 = scmp.ne.s32.totalorder %s253, %s255
      %p259 = scmp.eq.s32.totalorder %s30, 0
      %p260 = por %p258, %p259
      %p261 = scmp.ne.s32.totalorder %s253, %s255
      %p262 = scmp.eq.s32.totalorder %s35, 1
      %p263 = por %p261, %p262
      %p264 = scmp.ne.s32.totalorder %s255, %s256
      %p265 = scmp.eq.s32.totalorder %s35, 0
      %p266 = por %p264, %p265
      %p267 = scmp.ne.s32.totalorder %s255, %s256
      %p268 = scmp.eq.s32.totalorder %s36, 1
      %p269 = por %p267, %p268
      %p271 = scmp.ne.s32.totalorder %s256, %s270
      %p272 = scmp.eq.s32.totalorder %s36, 0
      %p273 = por %p271, %p272
      %s275 = sadd.s32 %s274, 1
      %p278 = scmp.eq.s32.totalorder %s30, 1
      %p279 = scmp.ne.s32.totalorder %s274, %s276
      %p280 = scmp.eq.s32.totalorder %s30, 0
      %p281 = por %p279, %p280
      %p282 = scmp.ne.s32.totalorder %s274, %s276
      %p283 = scmp.eq.s32.totalorder %s35, 1
      %p284 = por %p282, %p283
      %p285 = scmp.ne.s32.totalorder %s276, %s277
      %p286 = scmp.eq.s32.totalorder %s35, 0
      %p287 = por %p285, %p286
      %p288 = scmp.ne.s32.totalorder %s276, %s277
      %p289 = scmp.eq.s32.totalorder %s36, 1
      %p290 = por %p288, %p289
      %p292 = scmp.ne.s32.totalorder %s277, %s291
      %p293 = scmp.eq.s32.totalorder %s36, 0
      %p294 = por %p292, %p293
      %s296 = sadd.s32 %s295, 1
      %p299 = scmp.eq.s32.totalorder %s30, 1
      %p300 = scmp.ne.s32.totalorder %s295, %s297
      %p301 = scmp.eq.s32.totalorder %s30, 0
      %p302 = por %p300, %p301
      %p303 = scmp.ne.s32.totalorder %s295, %s297
      %p304 = scmp.eq.s32.totalorder %s35, 1
      %p305 = por %p303, %p304
      %p306 = scmp.ne.s32.totalorder %s297, %s298
      %p307 = scmp.eq.s32.totalorder %s35, 0
      %p308 = por %p306, %p307
      %p309 = scmp.ne.s32.totalorder %s297, %s298
      %p310 = scmp.eq.s32.totalorder %s36, 1
      %p311 = por %p309, %p310
      %p313 = scmp.ne.s32.totalorder %s298, %s312
      %p314 = scmp.eq.s32.totalorder %s36, 0
      %p315 = por %p313, %p314
      %s317 = sadd.s32 %s316, 1
      %p320 = scmp.eq.s32.totalorder %s30, 1
      %p321 = scmp.ne.s32.totalorder %s316, %s318
      %p322 = scmp.eq.s32.totalorder %s30, 0
      %p323 = por %p321, %p322
      %p324 = scmp.ne.s32.totalorder %s316, %s318
      %p325 = scmp.eq.s32.totalorder %s35, 1
      %p326 = por %p324, %p325
      %p327 = scmp.ne.s32.totalorder %s318, %s319
      %p328 = scmp.eq.s32.totalorder %s35, 0
      %p329 = por %p327, %p328
      %p330 = scmp.ne.s32.totalorder %s318, %s319
      %p331 = scmp.eq.s32.totalorder %s36, 1
      %p332 = por %p330, %p331
      %p334 = scmp.ne.s32.totalorder %s319, %s333
      %p335 = scmp.eq.s32.totalorder %s36, 0
      %p336 = por %p334, %p335
      %s337 = ssub.s32 %s30, %s37
      %p338 = scmp.eq.s32.totalorder %s337, 0
      %s340 = sadd.s32 %s339, 1
      %s341 = scalar_select %p338, %s339, %s340
      %p344 = pneg %p338
      %p345 = scmp.eq.s32.totalorder %s30, 1
      %p346 = por %p344, %p345
      %p347 = scmp.ne.s32.totalorder %s339, %s342
      %p348 = scmp.eq.s32.totalorder %s30, 0
      %p349 = por %p347, %p348
      %p350 = scmp.ne.s32.totalorder %s339, %s342
      %p351 = scmp.eq.s32.totalorder %s35, 1
      %p352 = por %p350, %p351
      %p353 = scmp.ne.s32.totalorder %s342, %s343
      %p354 = scmp.eq.s32.totalorder %s35, 0
      %p355 = por %p353, %p354
      %p356 = scmp.ne.s32.totalorder %s342, %s343
      %p357 = scmp.eq.s32.totalorder %s36, 1
      %p358 = por %p356, %p357
      %p360 = scmp.ne.s32.totalorder %s343, %s359
      %p361 = scmp.eq.s32.totalorder %s36, 0
      %p362 = por %p360, %p361
      %p363 = scmp.le.s32.totalorder 1, %s30
      %p364 = scmp.lt.s32.totalorder %s30, 3
      %p365 = pnand %p363, %p364
      %p366 = pneg %p365
      // Predicated region
      $region9: #{signal_att_forward.1} parent=5 // pred_check
        _
      $region10: #{signal_att_forward.1} parent=5 // pred_check_branch
        %368 = sbr.rel (%p365) target = $region12
      $region11: #{signal_att_forward.1} parent=5 // pred_region
        %s369 = ssub.s32 %s30, 1
        // Predicated region
        $region13: #{signal_att_forward.1} parent=11 // pred_check
          %p370 = pneg %p77
        $region14: #{signal_att_forward.1} parent=11 // pred_check_branch
          %372 = sbr.rel (%p370) target = $region16
        $region15: #{signal_att_forward.1} parent=11 // pred_region
          _
        $region16: #{signal_att_forward.1} parent=11 // pred_fallthru
          _
        // Predicated region
        $region17: #{signal_att_forward.1} parent=11 // pred_check
          %p373 = pneg %p98
        $region18: #{signal_att_forward.1} parent=11 // pred_check_branch
          %375 = sbr.rel (%p373) target = $region20
        $region19: #{signal_att_forward.1} parent=11 // pred_region
          %s377 = ssub.s32 6144, 6144
          %378 = vsyncadd [#allocation3], %s377
          %s379 = sshll.u32 [#allocation2], 4
          %s380 = int_to_ptr.vmem [resolvable:$true] %s379
          %385 = dma.hbm_to_vmem [thread:$0]  %s2, 6144, %s380, [#allocation3], 192, 192, 12
        $region20: #{signal_att_forward.1} parent=11 // pred_fallthru
          _
        // Predicated region
        $region21: #{signal_att_forward.1} parent=11 // pred_check
          %p386 = pneg %p119
        $region22: #{signal_att_forward.1} parent=11 // pred_check_branch
          %388 = sbr.rel (%p386) target = $region24
        $region23: #{signal_att_forward.1} parent=11 // pred_region
          %s390 = ssub.s32 96, 96
          %391 = vsyncadd [#allocation6], %s390
          %s392 = sshll.u32 [#allocation5], 4
          %s393 = int_to_ptr.vmem [resolvable:$true] %s392
          %398 = dma.hbm_to_vmem [thread:$0]  %s3, 96, %s393, [#allocation6], 48, 48, 3
        $region24: #{signal_att_forward.1} parent=11 // pred_fallthru
          _
        // Predicated region
        $region25: #{signal_att_forward.1} parent=11 // pred_check
          %p399 = pneg %p140
        $region26: #{signal_att_forward.1} parent=11 // pred_check_branch
          %401 = sbr.rel (%p399) target = $region28
        $region27: #{signal_att_forward.1} parent=11 // pred_region
          %s403 = ssub.s32 2048, 2048
          %404 = vsyncadd [#allocation6], %s403
          %s405 = sshll.u32 [#allocation7], 4
          %s406 = int_to_ptr.vmem [resolvable:$true] %s405
          %411 = dma.hbm_to_vmem [thread:$0]  %s4, 2048, %s406, [#allocation6], 64, 64, 4
        $region28: #{signal_att_forward.1} parent=11 // pred_fallthru
          _
        // Predicated region
        $region29: #{signal_att_forward.1} parent=11 // pred_check
          %p412 = pneg %p161
        $region30: #{signal_att_forward.1} parent=11 // pred_check_branch
          %414 = sbr.rel (%p412) target = $region32
        $region31: #{signal_att_forward.1} parent=11 // pred_region
          %s416 = ssub.s32 32, 32
          %417 = vsyncadd [#allocation9], %s416
          %s418 = sshll.u32 [#allocation8], 4
          %s419 = int_to_ptr.vmem [resolvable:$true] %s418
          %424 = dma.hbm_to_vmem [thread:$0]  %s5, 32, %s419, [#allocation9], 16, 16, 1
        $region32: #{signal_att_forward.1} parent=11 // pred_fallthru
          _
        // Predicated region
        $region33: #{signal_att_forward.1} parent=11 // pred_check
          %p425 = pneg %p182
        $region34: #{signal_att_forward.1} parent=11 // pred_check_branch
          %427 = sbr.rel (%p425) target = $region36
        $region35: #{signal_att_forward.1} parent=11 // pred_region
          %s429 = ssub.s32 32, 32
          %430 = vsyncadd [#allocation9], %s429
          %s431 = sshll.u32 [#allocation10], 4
          %s432 = int_to_ptr.vmem [resolvable:$true] %s431
          %437 = dma.hbm_to_vmem [thread:$0]  %s6, 32, %s432, [#allocation9], 16, 16, 1
        $region36: #{signal_att_forward.1} parent=11 // pred_fallthru
          _
        // Predicated region
        $region37: #{signal_att_forward.1} parent=11 // pred_check
          %p438 = pneg %p203
        $region38: #{signal_att_forward.1} parent=11 // pred_check_branch
          %440 = sbr.rel (%p438) target = $region40
        $region39: #{signal_att_forward.1} parent=11 // pred_region
          %s442 = ssub.s32 32, 32
          %443 = vsyncadd [#allocation12], %s442
          %s444 = sshll.u32 [#allocation11], 4
          %s445 = int_to_ptr.vmem [resolvable:$true] %s444
          %450 = dma.hbm_to_vmem [thread:$0]  %s7, 32, %s445, [#allocation12], 16, 16, 1
        $region40: #{signal_att_forward.1} parent=11 // pred_fallthru
          _
        // Predicated region
        $region41: #{signal_att_forward.1} parent=11 // pred_check
          %p451 = pneg %p224
        $region42: #{signal_att_forward.1} parent=11 // pred_check_branch
          %453 = sbr.rel (%p451) target = $region44
        $region43: #{signal_att_forward.1} parent=11 // pred_region
          %s455 = ssub.s32 4096, 4096
          %456 = vsyncadd [#allocation12], %s455
          %s457 = sshll.u32 [#allocation13], 4
          %s458 = int_to_ptr.vmem [resolvable:$true] %s457
          %463 = dma.hbm_to_vmem [thread:$0]  %s8, 4096, %s458, [#allocation12], 128, 128, 8
        $region44: #{signal_att_forward.1} parent=11 // pred_fallthru
          _
        // Predicated region
        $region45: #{signal_att_forward.1} parent=11 // pred_check
          %p464 = pneg %p245
        $region46: #{signal_att_forward.1} parent=11 // pred_check_branch
          %466 = sbr.rel (%p464) target = $region48
        $region47: #{signal_att_forward.1} parent=11 // pred_region
          %s468 = ssub.s32 64, 64
          %469 = vsyncadd [#allocation15], %s468
          %s470 = sshll.u32 [#allocation14], 4
          %s471 = int_to_ptr.vmem [resolvable:$true] %s470
          %476 = dma.hbm_to_vmem [thread:$0]  %s9, 64, %s471, [#allocation15], 32, 32, 2
        $region48: #{signal_att_forward.1} parent=11 // pred_fallthru
          _
        // Predicated region
        $region49: #{signal_att_forward.1} parent=11 // pred_check
          %p477 = pneg %p266
        $region50: #{signal_att_forward.1} parent=11 // pred_check_branch
          %479 = sbr.rel (%p477) target = $region52
        $region51: #{signal_att_forward.1} parent=11 // pred_region
          %s481 = ssub.s32 4096, 4096
          %482 = vsyncadd [#allocation15], %s481
          %s483 = sshll.u32 [#allocation16], 4
          %s484 = int_to_ptr.vmem [resolvable:$true] %s483
          %489 = dma.hbm_to_vmem [thread:$0]  %s10, 4096, %s484, [#allocation15], 64, 64, 4
        $region52: #{signal_att_forward.1} parent=11 // pred_fallthru
          _
        // Predicated region
        $region53: #{signal_att_forward.1} parent=11 // pred_check
          %p490 = pneg %p287
        $region54: #{signal_att_forward.1} parent=11 // pred_check_branch
          %492 = sbr.rel (%p490) target = $region56
        $region55: #{signal_att_forward.1} parent=11 // pred_region
          %s494 = ssub.s32 32, 32
          %495 = vsyncadd [#allocation18], %s494
          %s496 = sshll.u32 [#allocation17], 4
          %s497 = int_to_ptr.vmem [resolvable:$true] %s496
          %502 = dma.hbm_to_vmem [thread:$0]  %s11, 32, %s497, [#allocation18], 16, 16, 1
        $region56: #{signal_att_forward.1} parent=11 // pred_fallthru
          _
        // Predicated region
        $region57: #{signal_att_forward.1} parent=11 // pred_check
          %p503 = pneg %p308
        $region58: #{signal_att_forward.1} parent=11 // pred_check_branch
          %505 = sbr.rel (%p503) target = $region60
        $region59: #{signal_att_forward.1} parent=11 // pred_region
          %s507 = ssub.s32 32, 32
          %508 = vsyncadd [#allocation18], %s507
          %s509 = sshll.u32 [#allocation19], 4
          %s510 = int_to_ptr.vmem [resolvable:$true] %s509
          %515 = dma.hbm_to_vmem [thread:$0]  %s12, 32, %s510, [#allocation18], 16, 16, 1
        $region60: #{signal_att_forward.1} parent=11 // pred_fallthru
          _
        // Predicated region
        $region61: #{signal_att_forward.1} parent=11 // pred_check
          %p516 = pneg %p329
        $region62: #{signal_att_forward.1} parent=11 // pred_check_branch
          %518 = sbr.rel (%p516) target = $region64
        $region63: #{signal_att_forward.1} parent=11 // pred_region
          %s520 = ssub.s32 32, 32
          %521 = vsyncadd [#allocation21], %s520
          %s522 = sshll.u32 [#allocation20], 4
          %s523 = int_to_ptr.vmem [resolvable:$true] %s522
          %528 = dma.hbm_to_vmem [thread:$0]  %s13, 32, %s523, [#allocation21], 16, 16, 1
        $region64: #{signal_att_forward.1} parent=11 // pred_fallthru
          _
      $region12: #{signal_att_forward.1} parent=5 // pred_fallthru
        _
      %p529 = scmp.lt.s32.totalorder %s30, 2
      // Predicated region
      $region65: #{signal_att_forward.1} parent=5 // pred_check
        %p530 = pneg %p529
      $region66: #{signal_att_forward.1} parent=5 // pred_check_branch
        %532 = sbr.rel (%p530) target = $region68
      $region67: #{signal_att_forward.1} parent=5 // pred_region
        // Predicated region
        $region69: #{signal_att_forward.1} parent=67 // pred_check
          %p533 = pneg %p50
        $region70: #{signal_att_forward.1} parent=67 // pred_check_branch
          %535 = sbr.rel (%p533) target = $region72
        $region71: #{signal_att_forward.1} parent=67 // pred_region
          %p536 = scmp.lt.s32.totalorder %s30, 1
          %s537 = scalar_select %p536, %s30, 1
          %s538 = smul.addr %s537, 2
          %s539 = smul.addr %s538, 8
          %s540 = scalar_lea.vmem %s0, %s539
        $region72: #{signal_att_forward.1} parent=67 // pred_fallthru
          _
      $region68: #{signal_att_forward.1} parent=5 // pred_fallthru
        _
      %p541 = scmp.le.s32.totalorder 1, %s30
      %p542 = scmp.lt.s32.totalorder %s30, 3
      %p543 = pnand %p541, %p542
      %p544 = pneg %p543
      // Predicated region
      $region73: #{signal_att_forward.1} parent=5 // pred_check
        _
      $region74: #{signal_att_forward.1} parent=5 // pred_check_branch
        %546 = sbr.rel (%p543) target = $region76
      $region75: #{signal_att_forward.1} parent=5 // pred_region
        %s547 = ssub.s32 %s30, 1
        // Predicated region
        $region77: #{signal_att_forward.1} parent=75 // pred_check
          %p548 = pneg %p98
        $region78: #{signal_att_forward.1} parent=75 // pred_check_branch
          %550 = sbr.rel (%p548) target = $region80
        $region79: #{signal_att_forward.1} parent=75 // pred_region
          %551 = dma.done [#allocation3], 6144
        $region80: #{signal_att_forward.1} parent=75 // pred_fallthru
          _
        // Predicated region
        $region81: #{signal_att_forward.1} parent=75 // pred_check
          %p552 = pneg %p119
        $region82: #{signal_att_forward.1} parent=75 // pred_check_branch
          %554 = sbr.rel (%p552) target = $region84
        $region83: #{signal_att_forward.1} parent=75 // pred_region
          %555 = dma.done [#allocation6], 96
        $region84: #{signal_att_forward.1} parent=75 // pred_fallthru
          _
        // Predicated region
        $region85: #{signal_att_forward.1} parent=75 // pred_check
          %p556 = pneg %p140
        $region86: #{signal_att_forward.1} parent=75 // pred_check_branch
          %558 = sbr.rel (%p556) target = $region88
        $region87: #{signal_att_forward.1} parent=75 // pred_region
          %559 = dma.done [#allocation6], 2048
        $region88: #{signal_att_forward.1} parent=75 // pred_fallthru
          _
        // Predicated region
        $region89: #{signal_att_forward.1} parent=75 // pred_check
          %p560 = pneg %p161
        $region90: #{signal_att_forward.1} parent=75 // pred_check_branch
          %562 = sbr.rel (%p560) target = $region92
        $region91: #{signal_att_forward.1} parent=75 // pred_region
          %563 = dma.done [#allocation9], 32
        $region92: #{signal_att_forward.1} parent=75 // pred_fallthru
          _
        // Predicated region
        $region93: #{signal_att_forward.1} parent=75 // pred_check
          %p564 = pneg %p182
        $region94: #{signal_att_forward.1} parent=75 // pred_check_branch
          %566 = sbr.rel (%p564) target = $region96
        $region95: #{signal_att_forward.1} parent=75 // pred_region
          %567 = dma.done [#allocation9], 32
        $region96: #{signal_att_forward.1} parent=75 // pred_fallthru
          _
        // Predicated region
        $region97: #{signal_att_forward.1} parent=75 // pred_check
          %p568 = pneg %p203
        $region98: #{signal_att_forward.1} parent=75 // pred_check_branch
          %570 = sbr.rel (%p568) target = $region100
        $region99: #{signal_att_forward.1} parent=75 // pred_region
          %571 = dma.done [#allocation12], 32
        $region100: #{signal_att_forward.1} parent=75 // pred_fallthru
          _
        // Predicated region
        $region101: #{signal_att_forward.1} parent=75 // pred_check
          %p572 = pneg %p224
        $region102: #{signal_att_forward.1} parent=75 // pred_check_branch
          %574 = sbr.rel (%p572) target = $region104
        $region103: #{signal_att_forward.1} parent=75 // pred_region
          %575 = dma.done [#allocation12], 4096
        $region104: #{signal_att_forward.1} parent=75 // pred_fallthru
          _
        // Predicated region
        $region105: #{signal_att_forward.1} parent=75 // pred_check
          %p576 = pneg %p245
        $region106: #{signal_att_forward.1} parent=75 // pred_check_branch
          %578 = sbr.rel (%p576) target = $region108
        $region107: #{signal_att_forward.1} parent=75 // pred_region
          %579 = dma.done [#allocation15], 64
        $region108: #{signal_att_forward.1} parent=75 // pred_fallthru
          _
        // Predicated region
        $region109: #{signal_att_forward.1} parent=75 // pred_check
          %p580 = pneg %p266
        $region110: #{signal_att_forward.1} parent=75 // pred_check_branch
          %582 = sbr.rel (%p580) target = $region112
        $region111: #{signal_att_forward.1} parent=75 // pred_region
          %583 = dma.done [#allocation15], 4096
        $region112: #{signal_att_forward.1} parent=75 // pred_fallthru
          _
        // Predicated region
        $region113: #{signal_att_forward.1} parent=75 // pred_check
          %p584 = pneg %p287
        $region114: #{signal_att_forward.1} parent=75 // pred_check_branch
          %586 = sbr.rel (%p584) target = $region116
        $region115: #{signal_att_forward.1} parent=75 // pred_region
          %587 = dma.done [#allocation18], 32
        $region116: #{signal_att_forward.1} parent=75 // pred_fallthru
          _
        // Predicated region
        $region117: #{signal_att_forward.1} parent=75 // pred_check
          %p588 = pneg %p308
        $region118: #{signal_att_forward.1} parent=75 // pred_check_branch
          %590 = sbr.rel (%p588) target = $region120
        $region119: #{signal_att_forward.1} parent=75 // pred_region
          %591 = dma.done [#allocation18], 32
        $region120: #{signal_att_forward.1} parent=75 // pred_fallthru
          _
        // Predicated region
        $region121: #{signal_att_forward.1} parent=75 // pred_check
          %p592 = pneg %p329
        $region122: #{signal_att_forward.1} parent=75 // pred_check_branch
          %594 = sbr.rel (%p592) target = $region124
        $region123: #{signal_att_forward.1} parent=75 // pred_region
          %595 = dma.done [#allocation21], 32
        $region124: #{signal_att_forward.1} parent=75 // pred_fallthru
          _
        %p596 = scmp.lt.s32.totalorder %s35, 1
        %s597 = scalar_select %p596, %s35, 1
        %s598 = smul.addr %s597, 2
        %s599 = smul.addr %s598, 8
        %s600 = scalar_lea.vmem %s0, %s599
        %p601 = pneg %p56
        %p602 = pneg %p53
        %p603 = pneg %p77
        %p604 = pneg %p74
        %p605 = pneg %p98
        %p606 = pneg %p95
        %p607 = pneg %p119
        %p608 = pneg %p116
        %p609 = pneg %p140
        %p610 = pneg %p137
        %p611 = pneg %p161
        %p612 = pneg %p158
        %p613 = pneg %p182
        %p614 = pneg %p179
        %p615 = pneg %p203
        %p616 = pneg %p200
        %p617 = pneg %p224
        %p618 = pneg %p221
        %p619 = pneg %p245
        %p620 = pneg %p242
        %p621 = pneg %p266
        %p622 = pneg %p263
        %p623 = pneg %p287
        %p624 = pneg %p284
        %p625 = pneg %p308
        %p626 = pneg %p305
        %p627 = pneg %p329
        %p628 = pneg %p326
        %p629 = pneg %p355
        %p630 = pneg %p352
        %s631 = sand.u32 %s342, 1
        %s632 = scalar_lea.sflag [#allocation4], %s631
        %s633 = sand.u32 %s342, 1
        %s634 = smul.addr %s633, 16
        %s635 = scalar_lea.vmem [#allocation22], %s634
        %p636 = scmp.lt.s32.totalorder %s35, 1
        %s637 = scalar_select %p636, %s35, 1
        %s638 = smul.addr %s637, 2
        %s639 = smul.addr %s638, 8
        %s640 = scalar_lea.vmem %s0, %s639
        %v642 = vld [vmem:[%s640] sm:$0xff]
        %v643 = vld [vmem:[%s640 + $0x8] sm:$0xff]
        %v644 = vld [vmem:[%s1] sm:$0xff]
        %v645 = vld [vmem:[%s1 + $0x8] sm:$0xff]
        %v646 = vadd.f32 %v642, %v644
        %v647 = vadd.f32 %v643, %v645
        %v648 = vld [vmem:[#allocation2] sm:$0xff]
        %v649 = vld [vmem:[#allocation2 + $0x8] sm:$0xf]
        %v650 = vld [vmem:[#allocation2 + $0xc] sm:$0xff]
        %v651 = vld [vmem:[#allocation2 + $0x14] sm:$0xf]
        %v652 = vld [vmem:[#allocation2 + $0x18] sm:$0xff]
        %v653 = vld [vmem:[#allocation2 + $0x20] sm:$0xf]
        %v654 = vld [vmem:[#allocation2 + $0x24] sm:$0xff]
        %v655 = vld [vmem:[#allocation2 + $0x2c] sm:$0xf]
        %v656 = vld [vmem:[#allocation2 + $0x30] sm:$0xff]
        %v657 = vld [vmem:[#allocation2 + $0x38] sm:$0xf]
        %v658 = vld [vmem:[#allocation2 + $0x3c] sm:$0xff]
        %v659 = vld [vmem:[#allocation2 + $0x44] sm:$0xf]
        %v660 = vld [vmem:[#allocation2 + $0x48] sm:$0xff]
        %v661 = vld [vmem:[#allocation2 + $0x50] sm:$0xf]
        %v662 = vld [vmem:[#allocation2 + $0x54] sm:$0xff]
        %v663 = vld [vmem:[#allocation2 + $0x5c] sm:$0xf]
        %v664 = vld [vmem:[#allocation2 + $0x60] sm:$0xff]
        %v665 = vld [vmem:[#allocation2 + $0x68] sm:$0xf]
        %v666 = vld [vmem:[#allocation2 + $0x6c] sm:$0xff]
        %v667 = vld [vmem:[#allocation2 + $0x74] sm:$0xf]
        %v668 = vld [vmem:[#allocation2 + $0x78] sm:$0xff]
        %v669 = vld [vmem:[#allocation2 + $0x80] sm:$0xf]
        %v670 = vld [vmem:[#allocation2 + $0x84] sm:$0xff]
        %v671 = vld [vmem:[#allocation2 + $0x8c] sm:$0xf]
        %v672 = vld [vmem:[#allocation2 + $0x90] sm:$0xff]
        %v673 = vld [vmem:[#allocation2 + $0x98] sm:$0xf]
        %v674 = vld [vmem:[#allocation2 + $0x9c] sm:$0xff]
        %v675 = vld [vmem:[#allocation2 + $0xa4] sm:$0xf]
        %v676 = vld [vmem:[#allocation2 + $0xa8] sm:$0xff]
        %v677 = vld [vmem:[#allocation2 + $0xb0] sm:$0xf]
        %v678 = vld [vmem:[#allocation2 + $0xb4] sm:$0xff]
        %v679 = vld [vmem:[#allocation2 + $0xbc] sm:$0xf]
        %v680 = vpack.c.bf16 %v647, %v646
        %v681 = vld [vmem:[#allocation5] sm:$0x7]
        %v683 = vlaneseq
        %v684 = vshrl.u32 %v683, 7
        %v685 = vsub.s32 0, %v684
        %v686 = vrot.slane %v681, %v685
        %v687 = vlaneseq
        %v688 = vshrl.u32 %v687, 7
        %v689 = vsub.s32 1, %v688
        %v690 = vrot.slane %v681, %v689
        %v691 = vlaneseq
        %v692 = vshrl.u32 %v691, 7
        %v693 = vsub.s32 2, %v692
        %v694 = vrot.slane %v681, %v693
        %v730 = vunpack.c.l.b16 %v648
        %v731 = vunpack.c.h.b16 %v648
        %v732 = vunpack.c.l.b16 %v649
        %v733 = vunpack.c.l.b16 %v650
        %v734 = vunpack.c.h.b16 %v650
        %v735 = vunpack.c.l.b16 %v651
        %v736 = vunpack.c.l.b16 %v652
        %v737 = vunpack.c.h.b16 %v652
        %v738 = vunpack.c.l.b16 %v653
        %v739 = vunpack.c.l.b16 %v654
        %v740 = vunpack.c.h.b16 %v654
        %v741 = vunpack.c.l.b16 %v655
        %v742 = vunpack.c.l.b16 %v656
        %v743 = vunpack.c.h.b16 %v656
        %v744 = vunpack.c.l.b16 %v657
        %v745 = vunpack.c.l.b16 %v658
        %v746 = vunpack.c.h.b16 %v658
        %v747 = vunpack.c.l.b16 %v659
        %v748 = vunpack.c.l.b16 %v660
        %v749 = vunpack.c.h.b16 %v660
        %v750 = vunpack.c.l.b16 %v661
        %v751 = vunpack.c.l.b16 %v662
        %v752 = vunpack.c.h.b16 %v662
        %v753 = vunpack.c.l.b16 %v663
        %v754 = vunpack.c.l.b16 %v664
        %v755 = vunpack.c.h.b16 %v664
        %v756 = vunpack.c.l.b16 %v665
        %v757 = vunpack.c.l.b16 %v666
        %v758 = vunpack.c.h.b16 %v666
        %v759 = vunpack.c.l.b16 %v667
        %v760 = vunpack.c.l.b16 %v668
        %v761 = vunpack.c.h.b16 %v668
        %v762 = vunpack.c.l.b16 %v669
        %v763 = vunpack.c.l.b16 %v670
        %v764 = vunpack.c.h.b16 %v670
        %v765 = vunpack.c.l.b16 %v671
        %v766 = vunpack.c.l.b16 %v672
        %v767 = vunpack.c.h.b16 %v672
        %v768 = vunpack.c.l.b16 %v673
        %v769 = vunpack.c.l.b16 %v674
        %v770 = vunpack.c.h.b16 %v674
        %v771 = vunpack.c.l.b16 %v675
        %v772 = vunpack.c.l.b16 %v676
        %v773 = vunpack.c.h.b16 %v676
        %v774 = vunpack.c.l.b16 %v677
        %v775 = vunpack.c.l.b16 %v678
        %v776 = vunpack.c.h.b16 %v678
        %v777 = vunpack.c.l.b16 %v679
        %v778 = vpack.c.b16 %v733, %v730
        %v779 = vpack.c.b16 %v734, %v731
        %v780 = vpack.c.b16 %v735, %v732
        %v781 = vpack.c.b16 %v739, %v736
        %v782 = vpack.c.b16 %v740, %v737
        %v783 = vpack.c.b16 %v741, %v738
        %v784 = vpack.c.b16 %v745, %v742
        %v785 = vpack.c.b16 %v746, %v743
        %v786 = vpack.c.b16 %v747, %v744
        %v787 = vpack.c.b16 %v751, %v748
        %v788 = vpack.c.b16 %v752, %v749
        %v789 = vpack.c.b16 %v753, %v750
        %v790 = vpack.c.b16 %v757, %v754
        %v791 = vpack.c.b16 %v758, %v755
        %v792 = vpack.c.b16 %v759, %v756
        %v793 = vpack.c.b16 %v763, %v760
        %v794 = vpack.c.b16 %v764, %v761
        %v795 = vpack.c.b16 %v765, %v762
        %v796 = vpack.c.b16 %v769, %v766
        %v797 = vpack.c.b16 %v770, %v767
        %v798 = vpack.c.b16 %v771, %v768
        %v799 = vpack.c.b16 %v775, %v772
        %v800 = vpack.c.b16 %v776, %v773
        %v801 = vpack.c.b16 %v777, %v774
        %826 = vmatprep.subr.bf16.mxu0 %v779
        %827 = vmatpush1.bf16.msra.mxu0 %v778
        %828 = vmatprep.subr.bf16.mxu0 %v782
        %829 = vmatpush1.bf16.msra.mxu0 %v781
        %830 = vmatprep.subr.bf16.mxu0 %v785
        %831 = vmatpush1.bf16.msra.mxu0 %v784
        %832 = vmatprep.subr.bf16.mxu0 %v788
        %833 = vmatpush1.bf16.msra.mxu0 %v787
        %834 = vmatprep.subr.bf16.mxu0 %v791
        %835 = vmatpush1.bf16.msra.mxu0 %v790
        %836 = vmatprep.subr.bf16.mxu0 %v794
        %837 = vmatpush1.bf16.msra.mxu0 %v793
        %838 = vmatprep.subr.bf16.mxu0 %v797
        %839 = vmatpush1.bf16.msra.mxu0 %v796
        %840 = vmatprep.subr.bf16.mxu0 %v800
        %841 = vmatpush1.bf16.msra.mxu0 %v799
        %842 = vmatprep.subr.bf16.mxu0 0
        %843 = vmatpush1.bf16.msra.mxu0 0
        %844 = vmatprep.subr.bf16.mxu0 0
        %845 = vmatpush1.bf16.msra.mxu0 0
        %846 = vmatprep.subr.bf16.mxu0 0
        %847 = vmatpush1.bf16.msra.mxu0 0
        %848 = vmatprep.subr.bf16.mxu0 0
        %849 = vmatpush1.bf16.msra.mxu0 0
        %850 = vmatprep.subr.bf16.mxu0 0
        %851 = vmatpush1.bf16.msra.mxu0 0
        %852 = vmatprep.subr.bf16.mxu0 0
        %853 = vmatpush1.bf16.msra.mxu0 0
        %854 = vmatprep.subr.bf16.mxu0 0
        %855 = vmatpush1.bf16.msra.mxu0 0
        %856 = vmatprep.subr.bf16.mxu0 0
        %857 = vmatpush1.bf16.msra.mxu0 0
        %858 = vmatprep.mubr.bf16.mxu0 0
        %859 = vmatmul.mubr.bf16.gmra.mrb[0].mxu0 %v680
        %v860 = vpop.f32.mrb[0].mxu0
        %v861 = vadd.f32 %v686, %v860
        %v862 = vpop.f32.mrb[0].mxu0
        %v863 = vadd.f32 %v690, %v862
        %v864 = vpop.f32.mrb[0].mxu0
        %v865 = vadd.f32 %v686, %v864
        %v866 = vpop.f32.mrb[0].mxu0
        %v867 = vadd.f32 %v690, %v866
        %868 = vdwg.mxu0
        %869 = vmatprep.subr.bf16.mxu0 0
        %870 = vmatpush1.bf16.msra.mxu0 %v780
        %871 = vmatprep.subr.bf16.mxu0 0
        %872 = vmatpush1.bf16.msra.mxu0 %v783
        %873 = vmatprep.subr.bf16.mxu0 0
        %874 = vmatpush1.bf16.msra.mxu0 %v786
        %875 = vmatprep.subr.bf16.mxu0 0
        %876 = vmatpush1.bf16.msra.mxu0 %v789
        %877 = vmatprep.subr.bf16.mxu0 0
        %878 = vmatpush1.bf16.msra.mxu0 %v792
        %879 = vmatprep.subr.bf16.mxu0 0
        %880 = vmatpush1.bf16.msra.mxu0 %v795
        %881 = vmatprep.subr.bf16.mxu0 0
        %882 = vmatpush1.bf16.msra.mxu0 %v798
        %883 = vmatprep.subr.bf16.mxu0 0
        %884 = vmatpush1.bf16.msra.mxu0 %v801
        %885 = vmatprep.subr.bf16.mxu0 0
        %886 = vmatpush1.bf16.msra.mxu0 0
        %887 = vmatprep.subr.bf16.mxu0 0
        %888 = vmatpush1.bf16.msra.mxu0 0
        %889 = vmatprep.subr.bf16.mxu0 0
        %890 = vmatpush1.bf16.msra.mxu0 0
        %891 = vmatprep.subr.bf16.mxu0 0
        %892 = vmatpush1.bf16.msra.mxu0 0
        %893 = vmatprep.subr.bf16.mxu0 0
        %894 = vmatpush1.bf16.msra.mxu0 0
        %895 = vmatprep.subr.bf16.mxu0 0
        %896 = vmatpush1.bf16.msra.mxu0 0
        %897 = vmatprep.subr.bf16.mxu0 0
        %898 = vmatpush1.bf16.msra.mxu0 0
        %899 = vmatprep.subr.bf16.mxu0 0
        %900 = vmatpush1.bf16.msra.mxu0 0
        %901 = vmatprep.mubr.bf16.mxu0 0
        %902 = vmatmul.mubr.bf16.gmra.mrb[0].mxu0 %v680
        %v903 = vpop.f32.mrb[0].mxu0
        %v904 = vadd.f32 %v694, %v903
        %v905 = vpop.f32.mrb[0].mxu0
        %v906 = vpop.f32.mrb[0].mxu0
        %v907 = vadd.f32 %v694, %v906
        %v908 = vpop.f32.mrb[0].mxu0
        %909 = vdwg.mxu0
        %v910 = vmul.f32 %v861, 0.17677669
        %v911 = vmul.f32 %v865, 0.17677669
        %914 = vrot.lane.b32.xlu0 %v910, 96
        %v915 = vpop.permute.xlu0 %914
        %916 = vrot.lane.b32.xlu0 %v911, 96
        %v917 = vpop.permute.xlu0 %916
        %920 = vrot.lane.b32.xlu0 %v910, 64
        %v921 = vpop.permute.xlu0 %920
        %922 = vrot.lane.b32.xlu0 %v911, 64
        %v923 = vpop.permute.xlu0 %922
        %926 = vrot.lane.b32.xlu0 %v910, 32
        %v927 = vpop.permute.xlu0 %926
        %928 = vrot.lane.b32.xlu0 %v911, 32
        %v929 = vpop.permute.xlu0 %928
        %v932 = vpack.c.bf16 %v911, %v910
        %v933 = vpack.c.bf16 %v917, %v915
        %v934 = vpack.c.bf16 %v923, %v921
        %v935 = vpack.c.bf16 %v929, %v927
        %938 = vrot.lane.b32.xlu0 %v863, 96
        %v939 = vpop.permute.xlu0 %938
        %940 = vrot.lane.b32.xlu0 %v867, 96
        %v941 = vpop.permute.xlu0 %940
        %944 = vrot.lane.b32.xlu0 %v863, 64
        %v945 = vpop.permute.xlu0 %944
        %946 = vrot.lane.b32.xlu0 %v867, 64
        %v947 = vpop.permute.xlu0 %946
        %950 = vrot.lane.b32.xlu0 %v863, 32
        %v951 = vpop.permute.xlu0 %950
        %952 = vrot.lane.b32.xlu0 %v867, 32
        %v953 = vpop.permute.xlu0 %952
        %v956 = vpack.c.bf16 %v867, %v863
        %v957 = vpack.c.bf16 %v941, %v939
        %v958 = vpack.c.bf16 %v947, %v945
        %v959 = vpack.c.bf16 %v953, %v951
        %962 = vrot.lane.b32.xlu0 %v904, 96
        %v963 = vpop.permute.xlu0 %962
        %964 = vrot.lane.b32.xlu0 %v907, 96
        %v965 = vpop.permute.xlu0 %964
        %968 = vrot.lane.b32.xlu0 %v904, 64
        %v969 = vpop.permute.xlu0 %968
        %970 = vrot.lane.b32.xlu0 %v907, 64
        %v971 = vpop.permute.xlu0 %970
        %974 = vrot.lane.b32.xlu0 %v904, 32
        %v975 = vpop.permute.xlu0 %974
        %976 = vrot.lane.b32.xlu0 %v907, 32
        %v977 = vpop.permute.xlu0 %976
        %v980 = vpack.c.bf16 %v907, %v904
        %v981 = vpack.c.bf16 %v965, %v963
        %v982 = vpack.c.bf16 %v971, %v969
        %v983 = vpack.c.bf16 %v977, %v975
        %vm984 = vcmask 261120
        %v986 = vsel %vm984, %v932, 0
        %v989 = vsel %vm984, %v956, 0
        %991 = vmatprep.subr.bf16.mxu0 0
        %992 = vmatpush1.bf16.xpose.msra.mxu0 %v989
        %993 = vmatprep.subr.bf16.mxu0 0
        %994 = vmatpush1.bf16.xpose.msra.mxu0 0
        %995 = vmatprep.subr.bf16.mxu0 0
        %996 = vmatpush1.bf16.xpose.msra.mxu0 0
        %997 = vmatprep.subr.bf16.mxu0 0
        %998 = vmatpush1.bf16.xpose.msra.mxu0 0
        %999 = vmatprep.subr.bf16.mxu0 0
        %1000 = vmatpush1.bf16.xpose.msra.mxu0 0
        %1001 = vmatprep.subr.bf16.mxu0 0
        %1002 = vmatpush1.bf16.xpose.msra.mxu0 0
        %1003 = vmatprep.subr.bf16.mxu0 0
        %1004 = vmatpush1.bf16.xpose.msra.mxu0 0
        %1005 = vmatprep.subr.bf16.mxu0 0
        %1006 = vmatpush1.bf16.xpose.msra.mxu0 0
        %1007 = vmatprep.subr.bf16.mxu0 0
        %1008 = vmatpush1.bf16.xpose.msra.mxu0 0
        %1009 = vmatprep.subr.bf16.mxu0 0
        %1010 = vmatpush1.bf16.xpose.msra.mxu0 0
        %1011 = vmatprep.subr.bf16.mxu0 0
        %1012 = vmatpush1.bf16.xpose.msra.mxu0 0
        %1013 = vmatprep.subr.bf16.mxu0 0
        %1014 = vmatpush1.bf16.xpose.msra.mxu0 0
        %1015 = vmatprep.subr.bf16.mxu0 0
        %1016 = vmatpush1.bf16.xpose.msra.mxu0 0
        %1017 = vmatprep.subr.bf16.mxu0 0
        %1018 = vmatpush1.bf16.xpose.msra.mxu0 0
        %1019 = vmatprep.subr.bf16.mxu0 0
        %1020 = vmatpush1.bf16.xpose.msra.mxu0 0
        %1021 = vmatprep.subr.bf16.mxu0 0
        %1022 = vmatpush1.bf16.xpose.msra.mxu0 0
        %1023 = vmatprep.mubr.bf16.mxu0 0
        %1024 = vmatmul.mubr.bf16.gmra.mrb[0].mxu0 %v986
        %v1025 = vpop.f32.mrb[0].mxu0
        %v1026 = vadd.f32 0.0, %v1025
        %v1027 = vpop.f32.mrb[0].mxu0
        %v1028 = vpop.f32.mrb[0].mxu0
        %v1029 = vadd.f32 0.0, %v1028
        %v1030 = vpop.f32.mrb[0].mxu0
        %1031 = vdwg.mxu0
        %v1033 = vsel %vm984, %v933, 0
        %v1036 = vsel %vm984, %v957, 0
        %1038 = vmatprep.subr.bf16.mxu0 0
        %1039 = vmatpush1.bf16.xpose.msra.mxu0 %v1036
        %1040 = vmatprep.subr.bf16.mxu0 0
        %1041 = vmatpush1.bf16.xpose.msra.mxu0 0
        %1042 = vmatprep.subr.bf16.mxu0 0
        %1043 = vmatpush1.bf16.xpose.msra.mxu0 0
        %1044 = vmatprep.subr.bf16.mxu0 0
        %1045 = vmatpush1.bf16.xpose.msra.mxu0 0
        %1046 = vmatprep.subr.bf16.mxu0 0
        %1047 = vmatpush1.bf16.xpose.msra.mxu0 0
        %1048 = vmatprep.subr.bf16.mxu0 0
        %1049 = vmatpush1.bf16.xpose.msra.mxu0 0
        %1050 = vmatprep.subr.bf16.mxu0 0
        %1051 = vmatpush1.bf16.xpose.msra.mxu0 0
        %1052 = vmatprep.subr.bf16.mxu0 0
        %1053 = vmatpush1.bf16.xpose.msra.mxu0 0
        %1054 = vmatprep.subr.bf16.mxu0 0
        %1055 = vmatpush1.bf16.xpose.msra.mxu0 0
        %1056 = vmatprep.subr.bf16.mxu0 0
        %1057 = vmatpush1.bf16.xpose.msra.mxu0 0
        %1058 = vmatprep.subr.bf16.mxu0 0
        %1059 = vmatpush1.bf16.xpose.msra.mxu0 0
        %1060 = vmatprep.subr.bf16.mxu0 0
        %1061 = vmatpush1.bf16.xpose.msra.mxu0 0
        %1062 = vmatprep.subr.bf16.mxu0 0
        %1063 = vmatpush1.bf16.xpose.msra.mxu0 0
        %1064 = vmatprep.subr.bf16.mxu0 0
        %1065 = vmatpush1.bf16.xpose.msra.mxu0 0
        %1066 = vmatprep.subr.bf16.mxu0 0
        %1067 = vmatpush1.bf16.xpose.msra.mxu0 0
        %1068 = vmatprep.subr.bf16.mxu0 0
        %1069 = vmatpush1.bf16.xpose.msra.mxu0 0
        %1070 = vmatprep.mubr.bf16.mxu0 0
        %1071 = vmatmul.mubr.bf16.gmra.mrb[0].mxu0 %v1033
        %v1072 = vpop.f32.mrb[0].mxu0
        %v1073 = vadd.f32 0.0, %v1072
        %v1074 = vpop.f32.mrb[0].mxu0
        %v1075 = vpop.f32.mrb[0].mxu0
        %v1076 = vadd.f32 0.0, %v1075
        %v1077 = vpop.f32.mrb[0].mxu0
        %1078 = vdwg.mxu0
        %v1080 = vsel %vm984, %v934, 0
        %v1083 = vsel %vm984, %v958, 0
        %1085 = vmatprep.subr.bf16.mxu0 0
        %1086 = vmatpush1.bf16.xpose.msra.mxu0 %v1083
        %1087 = vmatprep.subr.bf16.mxu0 0
        %1088 = vmatpush1.bf16.xpose.msra.mxu0 0
        %1089 = vmatprep.subr.bf16.mxu0 0
        %1090 = vmatpush1.bf16.xpose.msra.mxu0 0
        %1091 = vmatprep.subr.bf16.mxu0 0
        %1092 = vmatpush1.bf16.xpose.msra.mxu0 0
        %1093 = vmatprep.subr.bf16.mxu0 0
        %1094 = vmatpush1.bf16.xpose.msra.mxu0 0
        %1095 = vmatprep.subr.bf16.mxu0 0
        %1096 = vmatpush1.bf16.xpose.msra.mxu0 0
        %1097 = vmatprep.subr.bf16.mxu0 0
        %1098 = vmatpush1.bf16.xpose.msra.mxu0 0
        %1099 = vmatprep.subr.bf16.mxu0 0
        %1100 = vmatpush1.bf16.xpose.msra.mxu0 0
        %1101 = vmatprep.subr.bf16.mxu0 0
        %1102 = vmatpush1.bf16.xpose.msra.mxu0 0
        %1103 = vmatprep.subr.bf16.mxu0 0
        %1104 = vmatpush1.bf16.xpose.msra.mxu0 0
        %1105 = vmatprep.subr.bf16.mxu0 0
        %1106 = vmatpush1.bf16.xpose.msra.mxu0 0
        %1107 = vmatprep.subr.bf16.mxu0 0
        %1108 = vmatpush1.bf16.xpose.msra.mxu0 0
        %1109 = vmatprep.subr.bf16.mxu0 0
        %1110 = vmatpush1.bf16.xpose.msra.mxu0 0
        %1111 = vmatprep.subr.bf16.mxu0 0
        %1112 = vmatpush1.bf16.xpose.msra.mxu0 0
        %1113 = vmatprep.subr.bf16.mxu0 0
        %1114 = vmatpush1.bf16.xpose.msra.mxu0 0
        %1115 = vmatprep.subr.bf16.mxu0 0
        %1116 = vmatpush1.bf16.xpose.msra.mxu0 0
        %1117 = vmatprep.mubr.bf16.mxu0 0
        %1118 = vmatmul.mubr.bf16.gmra.mrb[0].mxu0 %v1080
        %v1119 = vpop.f32.mrb[0].mxu0
        %v1120 = vadd.f32 0.0, %v1119
        %v1121 = vpop.f32.mrb[0].mxu0
        %v1122 = vpop.f32.mrb[0].mxu0
        %v1123 = vadd.f32 0.0, %v1122
        %v1124 = vpop.f32.mrb[0].mxu0
        %1125 = vdwg.mxu0
        %v1127 = vsel %vm984, %v935, 0
        %v1130 = vsel %vm984, %v959, 0
        %1132 = vmatprep.subr.bf16.mxu0 0
        %1133 = vmatpush1.bf16.xpose.msra.mxu0 %v1130
        %1134 = vmatprep.subr.bf16.mxu0 0
        %1135 = vmatpush1.bf16.xpose.msra.mxu0 0
        %1136 = vmatprep.subr.bf16.mxu0 0
        %1137 = vmatpush1.bf16.xpose.msra.mxu0 0
        %1138 = vmatprep.subr.bf16.mxu0 0
        %1139 = vmatpush1.bf16.xpose.msra.mxu0 0
        %1140 = vmatprep.subr.bf16.mxu0 0
        %1141 = vmatpush1.bf16.xpose.msra.mxu0 0
        %1142 = vmatprep.subr.bf16.mxu0 0
        %1143 = vmatpush1.bf16.xpose.msra.mxu0 0
        %1144 = vmatprep.subr.bf16.mxu0 0
        %1145 = vmatpush1.bf16.xpose.msra.mxu0 0
        %1146 = vmatprep.subr.bf16.mxu0 0
        %1147 = vmatpush1.bf16.xpose.msra.mxu0 0
        %1148 = vmatprep.subr.bf16.mxu0 0
        %1149 = vmatpush1.bf16.xpose.msra.mxu0 0
        %1150 = vmatprep.subr.bf16.mxu0 0
        %1151 = vmatpush1.bf16.xpose.msra.mxu0 0
        %1152 = vmatprep.subr.bf16.mxu0 0
        %1153 = vmatpush1.bf16.xpose.msra.mxu0 0
        %1154 = vmatprep.subr.bf16.mxu0 0
        %1155 = vmatpush1.bf16.xpose.msra.mxu0 0
        %1156 = vmatprep.subr.bf16.mxu0 0
        %1157 = vmatpush1.bf16.xpose.msra.mxu0 0
        %1158 = vmatprep.subr.bf16.mxu0 0
        %1159 = vmatpush1.bf16.xpose.msra.mxu0 0
        %1160 = vmatprep.subr.bf16.mxu0 0
        %1161 = vmatpush1.bf16.xpose.msra.mxu0 0
        %1162 = vmatprep.subr.bf16.mxu0 0
        %1163 = vmatpush1.bf16.xpose.msra.mxu0 0
        %1164 = vmatprep.mubr.bf16.mxu0 0
        %1165 = vmatmul.mubr.bf16.gmra.mrb[0].mxu0 %v1127
        %v1166 = vpop.f32.mrb[0].mxu0
        %v1167 = vadd.f32 0.0, %v1166
        %v1168 = vpop.f32.mrb[0].mxu0
        %v1169 = vpop.f32.mrb[0].mxu0
        %v1170 = vadd.f32 0.0, %v1169
        %v1171 = vpop.f32.mrb[0].mxu0
        %1172 = vdwg.mxu0
        %vm1173 = vcmask 130048
        %v1174 = vsel %vm1173, %v1026, -inf
        %1175 = vmax.xlane.f32.xlu0 %v1174
        %v1176 = vpop.xlane.xlu0 %1175
        %v1177 = vsel %vm1173, %v1029, -inf
        %1178 = vmax.xlane.f32.xlu0 %v1177
        %v1179 = vpop.xlane.xlu0 %1178
        %v1180 = vsel %vm1173, %v1073, -inf
        %1181 = vmax.xlane.f32.xlu0 %v1180
        %v1182 = vpop.xlane.xlu0 %1181
        %v1183 = vsel %vm1173, %v1076, -inf
        %1184 = vmax.xlane.f32.xlu0 %v1183
        %v1185 = vpop.xlane.xlu0 %1184
        %v1186 = vsel %vm1173, %v1120, -inf
        %1187 = vmax.xlane.f32.xlu0 %v1186
        %v1188 = vpop.xlane.xlu0 %1187
        %v1189 = vsel %vm1173, %v1123, -inf
        %1190 = vmax.xlane.f32.xlu0 %v1189
        %v1191 = vpop.xlane.xlu0 %1190
        %v1192 = vsel %vm1173, %v1167, -inf
        %1193 = vmax.xlane.f32.xlu0 %v1192
        %v1194 = vpop.xlane.xlu0 %1193
        %v1195 = vsel %vm1173, %v1170, -inf
        %1196 = vmax.xlane.f32.xlu0 %v1195
        %v1197 = vpop.xlane.xlu0 %1196
        %v1198 = vsub.f32 %v1026, %v1176
        %v1199 = vsub.f32 %v1029, %v1179
        %v1200 = vsub.f32 %v1073, %v1182
        %v1201 = vsub.f32 %v1076, %v1185
        %v1202 = vsub.f32 %v1120, %v1188
        %v1203 = vsub.f32 %v1123, %v1191
        %v1204 = vsub.f32 %v1167, %v1194
        %v1205 = vsub.f32 %v1170, %v1197
        %v1206 = vmul.f32 %v1198, 1.442695
        %v1207 = vpow.pop %v1206
        %v1208 = vmul.f32 %v1199, 1.442695
        %v1209 = vpow.pop %v1208
        %v1210 = vmul.f32 %v1200, 1.442695
        %v1211 = vpow.pop %v1210
        %v1212 = vmul.f32 %v1201, 1.442695
        %v1213 = vpow.pop %v1212
        %v1214 = vmul.f32 %v1202, 1.442695
        %v1215 = vpow.pop %v1214
        %v1216 = vmul.f32 %v1203, 1.442695
        %v1217 = vpow.pop %v1216
        %v1218 = vmul.f32 %v1204, 1.442695
        %v1219 = vpow.pop %v1218
        %v1220 = vmul.f32 %v1205, 1.442695
        %v1221 = vpow.pop %v1220
        %v1222 = vsel %vm1173, %v1207, 0.0
        %1223 = vadd.xlane.f32.xlu0 %v1222
        %v1224 = vpop.xlane.xlu0 %1223
        %v1225 = vsel %vm1173, %v1209, 0.0
        %1226 = vadd.xlane.f32.xlu0 %v1225
        %v1227 = vpop.xlane.xlu0 %1226
        %v1228 = vsel %vm1173, %v1211, 0.0
        %1229 = vadd.xlane.f32.xlu0 %v1228
        %v1230 = vpop.xlane.xlu0 %1229
        %v1231 = vsel %vm1173, %v1213, 0.0
        %1232 = vadd.xlane.f32.xlu0 %v1231
        %v1233 = vpop.xlane.xlu0 %1232
        %v1234 = vsel %vm1173, %v1215, 0.0
        %1235 = vadd.xlane.f32.xlu0 %v1234
        %v1236 = vpop.xlane.xlu0 %1235
        %v1237 = vsel %vm1173, %v1217, 0.0
        %1238 = vadd.xlane.f32.xlu0 %v1237
        %v1239 = vpop.xlane.xlu0 %1238
        %v1240 = vsel %vm1173, %v1219, 0.0
        %1241 = vadd.xlane.f32.xlu0 %v1240
        %v1242 = vpop.xlane.xlu0 %1241
        %v1243 = vsel %vm1173, %v1221, 0.0
        %1244 = vadd.xlane.f32.xlu0 %v1243
        %v1245 = vpop.xlane.xlu0 %1244
        %v1246 = vrcp.pop %v1224
        %v1247 = vmul.f32 %v1207, %v1246
        %v1248 = vrcp.pop %v1227
        %v1249 = vmul.f32 %v1209, %v1248
        %v1250 = vrcp.pop %v1230
        %v1251 = vmul.f32 %v1211, %v1250
        %v1252 = vrcp.pop %v1233
        %v1253 = vmul.f32 %v1213, %v1252
        %v1254 = vrcp.pop %v1236
        %v1255 = vmul.f32 %v1215, %v1254
        %v1256 = vrcp.pop %v1239
        %v1257 = vmul.f32 %v1217, %v1256
        %v1258 = vrcp.pop %v1242
        %v1259 = vmul.f32 %v1219, %v1258
        %v1260 = vrcp.pop %v1245
        %v1261 = vmul.f32 %v1221, %v1260
        %v1262 = vpack.c.bf16 %v1249, %v1247
        %v1263 = vpack.c.bf16 %v1253, %v1251
        %v1264 = vpack.c.bf16 %v1257, %v1255
        %v1265 = vpack.c.bf16 %v1261, %v1259
        %v1267 = vsel %vm1173, %v1262, 0
        %1269 = vmatprep.subr.bf16.mxu0 0
        %1270 = vmatpush1.bf16.msra.mxu0 %v980
        %1271 = vmatprep.subr.bf16.mxu0 0
        %1272 = vmatpush1.bf16.msra.mxu0 0
        %1273 = vmatprep.subr.bf16.mxu0 0
        %1274 = vmatpush1.bf16.msra.mxu0 0
        %1275 = vmatprep.subr.bf16.mxu0 0
        %1276 = vmatpush1.bf16.msra.mxu0 0
        %1277 = vmatprep.subr.bf16.mxu0 0
        %1278 = vmatpush1.bf16.msra.mxu0 0
        %1279 = vmatprep.subr.bf16.mxu0 0
        %1280 = vmatpush1.bf16.msra.mxu0 0
        %1281 = vmatprep.subr.bf16.mxu0 0
        %1282 = vmatpush1.bf16.msra.mxu0 0
        %1283 = vmatprep.subr.bf16.mxu0 0
        %1284 = vmatpush1.bf16.msra.mxu0 0
        %1285 = vmatprep.subr.bf16.mxu0 0
        %1286 = vmatpush1.bf16.msra.mxu0 0
        %1287 = vmatprep.subr.bf16.mxu0 0
        %1288 = vmatpush1.bf16.msra.mxu0 0
        %1289 = vmatprep.subr.bf16.mxu0 0
        %1290 = vmatpush1.bf16.msra.mxu0 0
        %1291 = vmatprep.subr.bf16.mxu0 0
        %1292 = vmatpush1.bf16.msra.mxu0 0
        %1293 = vmatprep.subr.bf16.mxu0 0
        %1294 = vmatpush1.bf16.msra.mxu0 0
        %1295 = vmatprep.subr.bf16.mxu0 0
        %1296 = vmatpush1.bf16.msra.mxu0 0
        %1297 = vmatprep.subr.bf16.mxu0 0
        %1298 = vmatpush1.bf16.msra.mxu0 0
        %1299 = vmatprep.subr.bf16.mxu0 0
        %1300 = vmatpush1.bf16.msra.mxu0 0
        %1301 = vmatprep.mubr.bf16.mxu0 0
        %1302 = vmatmul.mubr.bf16.gmra.mrb[0].mxu0 %v1267
        %v1303 = vpop.f32.mrb[0].mxu0
        %v1304 = vadd.f32 0.0, %v1303
        %v1305 = vpop.f32.mrb[0].mxu0
        %v1306 = vpop.f32.mrb[0].mxu0
        %v1307 = vadd.f32 0.0, %v1306
        %v1308 = vpop.f32.mrb[0].mxu0
        %1309 = vdwg.mxu0
        %v1311 = vsel %vm1173, %v1263, 0
        %1313 = vmatprep.subr.bf16.mxu0 0
        %1314 = vmatpush1.bf16.msra.mxu0 %v981
        %1315 = vmatprep.subr.bf16.mxu0 0
        %1316 = vmatpush1.bf16.msra.mxu0 0
        %1317 = vmatprep.subr.bf16.mxu0 0
        %1318 = vmatpush1.bf16.msra.mxu0 0
        %1319 = vmatprep.subr.bf16.mxu0 0
        %1320 = vmatpush1.bf16.msra.mxu0 0
        %1321 = vmatprep.subr.bf16.mxu0 0
        %1322 = vmatpush1.bf16.msra.mxu0 0
        %1323 = vmatprep.subr.bf16.mxu0 0
        %1324 = vmatpush1.bf16.msra.mxu0 0
        %1325 = vmatprep.subr.bf16.mxu0 0
        %1326 = vmatpush1.bf16.msra.mxu0 0
        %1327 = vmatprep.subr.bf16.mxu0 0
        %1328 = vmatpush1.bf16.msra.mxu0 0
        %1329 = vmatprep.subr.bf16.mxu0 0
        %1330 = vmatpush1.bf16.msra.mxu0 0
        %1331 = vmatprep.subr.bf16.mxu0 0
        %1332 = vmatpush1.bf16.msra.mxu0 0
        %1333 = vmatprep.subr.bf16.mxu0 0
        %1334 = vmatpush1.bf16.msra.mxu0 0
        %1335 = vmatprep.subr.bf16.mxu0 0
        %1336 = vmatpush1.bf16.msra.mxu0 0
        %1337 = vmatprep.subr.bf16.mxu0 0
        %1338 = vmatpush1.bf16.msra.mxu0 0
        %1339 = vmatprep.subr.bf16.mxu0 0
        %1340 = vmatpush1.bf16.msra.mxu0 0
        %1341 = vmatprep.subr.bf16.mxu0 0
        %1342 = vmatpush1.bf16.msra.mxu0 0
        %1343 = vmatprep.subr.bf16.mxu0 0
        %1344 = vmatpush1.bf16.msra.mxu0 0
        %1345 = vmatprep.mubr.bf16.mxu0 0
        %1346 = vmatmul.mubr.bf16.gmra.mrb[0].mxu0 %v1311
        %v1347 = vpop.f32.mrb[0].mxu0
        %v1348 = vadd.f32 0.0, %v1347
        %v1349 = vpop.f32.mrb[0].mxu0
        %v1350 = vpop.f32.mrb[0].mxu0
        %v1351 = vadd.f32 0.0, %v1350
        %v1352 = vpop.f32.mrb[0].mxu0
        %1353 = vdwg.mxu0
        %v1355 = vsel %vm1173, %v1264, 0
        %1357 = vmatprep.subr.bf16.mxu0 0
        %1358 = vmatpush1.bf16.msra.mxu0 %v982
        %1359 = vmatprep.subr.bf16.mxu0 0
        %1360 = vmatpush1.bf16.msra.mxu0 0
        %1361 = vmatprep.subr.bf16.mxu0 0
        %1362 = vmatpush1.bf16.msra.mxu0 0
        %1363 = vmatprep.subr.bf16.mxu0 0
        %1364 = vmatpush1.bf16.msra.mxu0 0
        %1365 = vmatprep.subr.bf16.mxu0 0
        %1366 = vmatpush1.bf16.msra.mxu0 0
        %1367 = vmatprep.subr.bf16.mxu0 0
        %1368 = vmatpush1.bf16.msra.mxu0 0
        %1369 = vmatprep.subr.bf16.mxu0 0
        %1370 = vmatpush1.bf16.msra.mxu0 0
        %1371 = vmatprep.subr.bf16.mxu0 0
        %1372 = vmatpush1.bf16.msra.mxu0 0
        %1373 = vmatprep.subr.bf16.mxu0 0
        %1374 = vmatpush1.bf16.msra.mxu0 0
        %1375 = vmatprep.subr.bf16.mxu0 0
        %1376 = vmatpush1.bf16.msra.mxu0 0
        %1377 = vmatprep.subr.bf16.mxu0 0
        %1378 = vmatpush1.bf16.msra.mxu0 0
        %1379 = vmatprep.subr.bf16.mxu0 0
        %1380 = vmatpush1.bf16.msra.mxu0 0
        %1381 = vmatprep.subr.bf16.mxu0 0
        %1382 = vmatpush1.bf16.msra.mxu0 0
        %1383 = vmatprep.subr.bf16.mxu0 0
        %1384 = vmatpush1.bf16.msra.mxu0 0
        %1385 = vmatprep.subr.bf16.mxu0 0
        %1386 = vmatpush1.bf16.msra.mxu0 0
        %1387 = vmatprep.subr.bf16.mxu0 0
        %1388 = vmatpush1.bf16.msra.mxu0 0
        %1389 = vmatprep.mubr.bf16.mxu0 0
        %1390 = vmatmul.mubr.bf16.gmra.mrb[0].mxu0 %v1355
        %v1391 = vpop.f32.mrb[0].mxu0
        %v1392 = vadd.f32 0.0, %v1391
        %v1393 = vpop.f32.mrb[0].mxu0
        %v1394 = vpop.f32.mrb[0].mxu0
        %v1395 = vadd.f32 0.0, %v1394
        %v1396 = vpop.f32.mrb[0].mxu0
        %1397 = vdwg.mxu0
        %v1399 = vsel %vm1173, %v1265, 0
        %1401 = vmatprep.subr.bf16.mxu0 0
        %1402 = vmatpush1.bf16.msra.mxu0 %v983
        %1403 = vmatprep.subr.bf16.mxu0 0
        %1404 = vmatpush1.bf16.msra.mxu0 0
        %1405 = vmatprep.subr.bf16.mxu0 0
        %1406 = vmatpush1.bf16.msra.mxu0 0
        %1407 = vmatprep.subr.bf16.mxu0 0
        %1408 = vmatpush1.bf16.msra.mxu0 0
        %1409 = vmatprep.subr.bf16.mxu0 0
        %1410 = vmatpush1.bf16.msra.mxu0 0
        %1411 = vmatprep.subr.bf16.mxu0 0
        %1412 = vmatpush1.bf16.msra.mxu0 0
        %1413 = vmatprep.subr.bf16.mxu0 0
        %1414 = vmatpush1.bf16.msra.mxu0 0
        %1415 = vmatprep.subr.bf16.mxu0 0
        %1416 = vmatpush1.bf16.msra.mxu0 0
        %1417 = vmatprep.subr.bf16.mxu0 0
        %1418 = vmatpush1.bf16.msra.mxu0 0
        %1419 = vmatprep.subr.bf16.mxu0 0
        %1420 = vmatpush1.bf16.msra.mxu0 0
        %1421 = vmatprep.subr.bf16.mxu0 0
        %1422 = vmatpush1.bf16.msra.mxu0 0
        %1423 = vmatprep.subr.bf16.mxu0 0
        %1424 = vmatpush1.bf16.msra.mxu0 0
        %1425 = vmatprep.subr.bf16.mxu0 0
        %1426 = vmatpush1.bf16.msra.mxu0 0
        %1427 = vmatprep.subr.bf16.mxu0 0
        %1428 = vmatpush1.bf16.msra.mxu0 0
        %1429 = vmatprep.subr.bf16.mxu0 0
        %1430 = vmatpush1.bf16.msra.mxu0 0
        %1431 = vmatprep.subr.bf16.mxu0 0
        %1432 = vmatpush1.bf16.msra.mxu0 0
        %1433 = vmatprep.mubr.bf16.mxu0 0
        %1434 = vmatmul.mubr.bf16.gmra.mrb[0].mxu0 %v1399
        %v1435 = vpop.f32.mrb[0].mxu0
        %v1436 = vadd.f32 0.0, %v1435
        %v1437 = vpop.f32.mrb[0].mxu0
        %v1438 = vpop.f32.mrb[0].mxu0
        %v1439 = vadd.f32 0.0, %v1438
        %v1440 = vpop.f32.mrb[0].mxu0
        %1441 = vdwg.mxu0
        %1444 = vrot.lane.b32.xlu0 %v1348, 32
        %v1445 = vpop.permute.xlu0 %1444
        %1446 = vrot.lane.b32.xlu0 %v1351, 32
        %v1447 = vpop.permute.xlu0 %1446
        %1452 = vrot.lane.b32.xlu0 %v1392, 64
        %v1453 = vpop.permute.xlu0 %1452
        %1454 = vrot.lane.b32.xlu0 %v1395, 64
        %v1455 = vpop.permute.xlu0 %1454
        %1460 = vrot.lane.b32.xlu0 %v1436, 96
        %v1461 = vpop.permute.xlu0 %1460
        %1462 = vrot.lane.b32.xlu0 %v1439, 96
        %v1463 = vpop.permute.xlu0 %1462
        %v1466 = vsel %vm984, %v1304, %v1445
        %v1467 = vsel %vm984, %v1307, %v1447
        %vm1468 = vcmask 523264
        %v1469 = vsel %vm1468, %v1466, %v1453
        %v1470 = vsel %vm1468, %v1467, %v1455
        %vm1471 = vcmask 785408
        %v1472 = vsel %vm1471, %v1469, %v1461
        %v1473 = vsel %vm1471, %v1470, %v1463
        %v1474 = vld [vmem:[#allocation7] sm:$0xf]
        %v1475 = vld [vmem:[#allocation7 + $0x4] sm:$0xf]
        %v1476 = vld [vmem:[#allocation7 + $0x8] sm:$0xf]
        %v1477 = vld [vmem:[#allocation7 + $0xc] sm:$0xf]
        %v1478 = vld [vmem:[#allocation7 + $0x10] sm:$0xf]
        %v1479 = vld [vmem:[#allocation7 + $0x14] sm:$0xf]
        %v1480 = vld [vmem:[#allocation7 + $0x18] sm:$0xf]
        %v1481 = vld [vmem:[#allocation7 + $0x1c] sm:$0xf]
        %v1482 = vld [vmem:[#allocation7 + $0x20] sm:$0xf]
        %v1483 = vld [vmem:[#allocation7 + $0x24] sm:$0xf]
        %v1484 = vld [vmem:[#allocation7 + $0x28] sm:$0xf]
        %v1485 = vld [vmem:[#allocation7 + $0x2c] sm:$0xf]
        %v1486 = vld [vmem:[#allocation7 + $0x30] sm:$0xf]
        %v1487 = vld [vmem:[#allocation7 + $0x34] sm:$0xf]
        %v1488 = vld [vmem:[#allocation7 + $0x38] sm:$0xf]
        %v1489 = vld [vmem:[#allocation7 + $0x3c] sm:$0xf]
        %v1490 = vpack.c.bf16 %v1473, %v1472
        %v1491 = vld [vmem:[#allocation8] sm:$0x1]
        %v1493 = vlaneseq
        %v1494 = vshrl.u32 %v1493, 7
        %v1495 = vsub.s32 0, %v1494
        %v1496 = vrot.slane %v1491, %v1495
        %v1514 = vunpack.c.l.b16 %v1474
        %v1515 = vunpack.c.l.b16 %v1475
        %v1516 = vunpack.c.l.b16 %v1476
        %v1517 = vunpack.c.l.b16 %v1477
        %v1518 = vunpack.c.l.b16 %v1478
        %v1519 = vunpack.c.l.b16 %v1479
        %v1520 = vunpack.c.l.b16 %v1480
        %v1521 = vunpack.c.l.b16 %v1481
        %v1522 = vunpack.c.l.b16 %v1482
        %v1523 = vunpack.c.l.b16 %v1483
        %v1524 = vunpack.c.l.b16 %v1484
        %v1525 = vunpack.c.l.b16 %v1485
        %v1526 = vunpack.c.l.b16 %v1486
        %v1527 = vunpack.c.l.b16 %v1487
        %v1528 = vunpack.c.l.b16 %v1488
        %v1529 = vunpack.c.l.b16 %v1489
        %v1530 = vpack.c.b16 %v1515, %v1514
        %v1531 = vpack.c.b16 %v1517, %v1516
        %v1532 = vpack.c.b16 %v1519, %v1518
        %v1533 = vpack.c.b16 %v1521, %v1520
        %v1534 = vpack.c.b16 %v1523, %v1522
        %v1535 = vpack.c.b16 %v1525, %v1524
        %v1536 = vpack.c.b16 %v1527, %v1526
        %v1537 = vpack.c.b16 %v1529, %v1528
        %1546 = vmatprep.subr.bf16.mxu0 0
        %1547 = vmatpush1.bf16.msra.mxu0 %v1530
        %1548 = vmatprep.subr.bf16.mxu0 0
        %1549 = vmatpush1.bf16.msra.mxu0 %v1531
        %1550 = vmatprep.subr.bf16.mxu0 0
        %1551 = vmatpush1.bf16.msra.mxu0 %v1532
        %1552 = vmatprep.subr.bf16.mxu0 0
        %1553 = vmatpush1.bf16.msra.mxu0 %v1533
        %1554 = vmatprep.subr.bf16.mxu0 0
        %1555 = vmatpush1.bf16.msra.mxu0 %v1534
        %1556 = vmatprep.subr.bf16.mxu0 0
        %1557 = vmatpush1.bf16.msra.mxu0 %v1535
        %1558 = vmatprep.subr.bf16.mxu0 0
        %1559 = vmatpush1.bf16.msra.mxu0 %v1536
        %1560 = vmatprep.subr.bf16.mxu0 0
        %1561 = vmatpush1.bf16.msra.mxu0 %v1537
        %1562 = vmatprep.subr.bf16.mxu0 0
        %1563 = vmatpush1.bf16.msra.mxu0 0
        %1564 = vmatprep.subr.bf16.mxu0 0
        %1565 = vmatpush1.bf16.msra.mxu0 0
        %1566 = vmatprep.subr.bf16.mxu0 0
        %1567 = vmatpush1.bf16.msra.mxu0 0
        %1568 = vmatprep.subr.bf16.mxu0 0
        %1569 = vmatpush1.bf16.msra.mxu0 0
        %1570 = vmatprep.subr.bf16.mxu0 0
        %1571 = vmatpush1.bf16.msra.mxu0 0
        %1572 = vmatprep.subr.bf16.mxu0 0
        %1573 = vmatpush1.bf16.msra.mxu0 0
        %1574 = vmatprep.subr.bf16.mxu0 0
        %1575 = vmatpush1.bf16.msra.mxu0 0
        %1576 = vmatprep.subr.bf16.mxu0 0
        %1577 = vmatpush1.bf16.msra.mxu0 0
        %1578 = vmatprep.mubr.bf16.mxu0 0
        %1579 = vmatmul.mubr.bf16.gmra.mrb[0].mxu0 %v1490
        %v1580 = vpop.f32.mrb[0].mxu0
        %v1581 = vadd.f32 %v1496, %v1580
        %v1582 = vpop.f32.mrb[0].mxu0
        %v1583 = vpop.f32.mrb[0].mxu0
        %v1584 = vadd.f32 %v1496, %v1583
        %v1585 = vpop.f32.mrb[0].mxu0
        %1586 = vdwg.mxu0
        %v1587 = vadd.f32 %v646, %v1581
        %v1588 = vadd.f32 %v647, %v1584
        %v1589 = vld [vmem:[#allocation10] sm:$0x1]
        %v1590 = vld [vmem:[#allocation11] sm:$0x1]
        %1591 = vadd.xlane.f32.xlu0 %v1587
        %v1592 = vpop.xlane.xlu0 %1591
        %1593 = vadd.xlane.f32.xlu0 %v1588
        %v1594 = vpop.xlane.xlu0 %1593
        %v1595 = vrcp.pop 128.0
        %v1596 = vmul.f32 %v1592, %v1595
        %v1597 = vmul.f32 %v1594, %v1595
        %v1598 = vsub.f32 %v1587, %v1596
        %v1599 = vsub.f32 %v1588, %v1597
        %v1600 = vmul.f32 %v1598, %v1598
        %v1601 = vmul.f32 %v1599, %v1599
        %1602 = vadd.xlane.f32.xlu0 %v1600
        %v1603 = vpop.xlane.xlu0 %1602
        %1604 = vadd.xlane.f32.xlu0 %v1601
        %v1605 = vpop.xlane.xlu0 %1604
        %v1606 = vmul.f32 %v1603, %v1595
        %v1607 = vmul.f32 %v1605, %v1595
        %v1608 = vadd.f32 %v1606, 1e-05
        %v1609 = vadd.f32 %v1607, 1e-05
        %v1610 = vrsqrt.pop %v1608
        %v1611 = vrsqrt.pop %v1609
        %v1612 = vmul.f32 %v1598, %v1610
        %v1613 = vmul.f32 %v1599, %v1611
        %v1615 = vlaneseq
        %v1616 = vshrl.u32 %v1615, 7
        %v1617 = vsub.s32 0, %v1616
        %v1618 = vrot.slane %v1589, %v1617
        %v1620 = vmul.f32 %v1612, %v1618
        %v1621 = vmul.f32 %v1613, %v1618
        %v1623 = vlaneseq
        %v1624 = vshrl.u32 %v1623, 7
        %v1625 = vsub.s32 0, %v1624
        %v1626 = vrot.slane %v1590, %v1625
        %v1628 = vadd.f32 %v1620, %v1626
        %v1629 = vadd.f32 %v1621, %v1626
        %v1630 = vld [vmem:[#allocation13] sm:$0xff]
        %v1631 = vld [vmem:[#allocation13 + $0x8] sm:$0xff]
        %v1632 = vld [vmem:[#allocation13 + $0x10] sm:$0xff]
        %v1633 = vld [vmem:[#allocation13 + $0x18] sm:$0xff]
        %v1634 = vld [vmem:[#allocation13 + $0x20] sm:$0xff]
        %v1635 = vld [vmem:[#allocation13 + $0x28] sm:$0xff]
        %v1636 = vld [vmem:[#allocation13 + $0x30] sm:$0xff]
        %v1637 = vld [vmem:[#allocation13 + $0x38] sm:$0xff]
        %v1638 = vld [vmem:[#allocation13 + $0x40] sm:$0xff]
        %v1639 = vld [vmem:[#allocation13 + $0x48] sm:$0xff]
        %v1640 = vld [vmem:[#allocation13 + $0x50] sm:$0xff]
        %v1641 = vld [vmem:[#allocation13 + $0x58] sm:$0xff]
        %v1642 = vld [vmem:[#allocation13 + $0x60] sm:$0xff]
        %v1643 = vld [vmem:[#allocation13 + $0x68] sm:$0xff]
        %v1644 = vld [vmem:[#allocation13 + $0x70] sm:$0xff]
        %v1645 = vld [vmem:[#allocation13 + $0x78] sm:$0xff]
        %v1646 = vpack.c.bf16 %v1629, %v1628
        %v1647 = vld [vmem:[#allocation14] sm:$0x3]
        %v1649 = vlaneseq
        %v1650 = vshrl.u32 %v1649, 7
        %v1651 = vsub.s32 0, %v1650
        %v1652 = vrot.slane %v1647, %v1651
        %v1653 = vlaneseq
        %v1654 = vshrl.u32 %v1653, 7
        %v1655 = vsub.s32 1, %v1654
        %v1656 = vrot.slane %v1647, %v1655
        %v1675 = vunpack.c.l.b16 %v1630
        %v1676 = vunpack.c.h.b16 %v1630
        %v1677 = vunpack.c.l.b16 %v1631
        %v1678 = vunpack.c.h.b16 %v1631
        %v1679 = vunpack.c.l.b16 %v1632
        %v1680 = vunpack.c.h.b16 %v1632
        %v1681 = vunpack.c.l.b16 %v1633
        %v1682 = vunpack.c.h.b16 %v1633
        %v1683 = vunpack.c.l.b16 %v1634
        %v1684 = vunpack.c.h.b16 %v1634
        %v1685 = vunpack.c.l.b16 %v1635
        %v1686 = vunpack.c.h.b16 %v1635
        %v1687 = vunpack.c.l.b16 %v1636
        %v1688 = vunpack.c.h.b16 %v1636
        %v1689 = vunpack.c.l.b16 %v1637
        %v1690 = vunpack.c.h.b16 %v1637
        %v1691 = vunpack.c.l.b16 %v1638
        %v1692 = vunpack.c.h.b16 %v1638
        %v1693 = vunpack.c.l.b16 %v1639
        %v1694 = vunpack.c.h.b16 %v1639
        %v1695 = vunpack.c.l.b16 %v1640
        %v1696 = vunpack.c.h.b16 %v1640
        %v1697 = vunpack.c.l.b16 %v1641
        %v1698 = vunpack.c.h.b16 %v1641
        %v1699 = vunpack.c.l.b16 %v1642
        %v1700 = vunpack.c.h.b16 %v1642
        %v1701 = vunpack.c.l.b16 %v1643
        %v1702 = vunpack.c.h.b16 %v1643
        %v1703 = vunpack.c.l.b16 %v1644
        %v1704 = vunpack.c.h.b16 %v1644
        %v1705 = vunpack.c.l.b16 %v1645
        %v1706 = vunpack.c.h.b16 %v1645
        %v1707 = vpack.c.b16 %v1677, %v1675
        %v1708 = vpack.c.b16 %v1678, %v1676
        %v1709 = vpack.c.b16 %v1681, %v1679
        %v1710 = vpack.c.b16 %v1682, %v1680
        %v1711 = vpack.c.b16 %v1685, %v1683
        %v1712 = vpack.c.b16 %v1686, %v1684
        %v1713 = vpack.c.b16 %v1689, %v1687
        %v1714 = vpack.c.b16 %v1690, %v1688
        %v1715 = vpack.c.b16 %v1693, %v1691
        %v1716 = vpack.c.b16 %v1694, %v1692
        %v1717 = vpack.c.b16 %v1697, %v1695
        %v1718 = vpack.c.b16 %v1698, %v1696
        %v1719 = vpack.c.b16 %v1701, %v1699
        %v1720 = vpack.c.b16 %v1702, %v1700
        %v1721 = vpack.c.b16 %v1705, %v1703
        %v1722 = vpack.c.b16 %v1706, %v1704
        %1739 = vmatprep.subr.bf16.mxu0 %v1708
        %1740 = vmatpush1.bf16.msra.mxu0 %v1707
        %1741 = vmatprep.subr.bf16.mxu0 %v1710
        %1742 = vmatpush1.bf16.msra.mxu0 %v1709
        %1743 = vmatprep.subr.bf16.mxu0 %v1712
        %1744 = vmatpush1.bf16.msra.mxu0 %v1711
        %1745 = vmatprep.subr.bf16.mxu0 %v1714
        %1746 = vmatpush1.bf16.msra.mxu0 %v1713
        %1747 = vmatprep.subr.bf16.mxu0 %v1716
        %1748 = vmatpush1.bf16.msra.mxu0 %v1715
        %1749 = vmatprep.subr.bf16.mxu0 %v1718
        %1750 = vmatpush1.bf16.msra.mxu0 %v1717
        %1751 = vmatprep.subr.bf16.mxu0 %v1720
        %1752 = vmatpush1.bf16.msra.mxu0 %v1719
        %1753 = vmatprep.subr.bf16.mxu0 %v1722
        %1754 = vmatpush1.bf16.msra.mxu0 %v1721
        %1755 = vmatprep.subr.bf16.mxu0 0
        %1756 = vmatpush1.bf16.msra.mxu0 0
        %1757 = vmatprep.subr.bf16.mxu0 0
        %1758 = vmatpush1.bf16.msra.mxu0 0
        %1759 = vmatprep.subr.bf16.mxu0 0
        %1760 = vmatpush1.bf16.msra.mxu0 0
        %1761 = vmatprep.subr.bf16.mxu0 0
        %1762 = vmatpush1.bf16.msra.mxu0 0
        %1763 = vmatprep.subr.bf16.mxu0 0
        %1764 = vmatpush1.bf16.msra.mxu0 0
        %1765 = vmatprep.subr.bf16.mxu0 0
        %1766 = vmatpush1.bf16.msra.mxu0 0
        %1767 = vmatprep.subr.bf16.mxu0 0
        %1768 = vmatpush1.bf16.msra.mxu0 0
        %1769 = vmatprep.subr.bf16.mxu0 0
        %1770 = vmatpush1.bf16.msra.mxu0 0
        %1771 = vmatprep.mubr.bf16.mxu0 0
        %1772 = vmatmul.mubr.bf16.gmra.mrb[0].mxu0 %v1646
        %v1773 = vpop.f32.mrb[0].mxu0
        %v1774 = vadd.f32 %v1652, %v1773
        %v1775 = vpop.f32.mrb[0].mxu0
        %v1776 = vadd.f32 %v1656, %v1775
        %v1777 = vpop.f32.mrb[0].mxu0
        %v1778 = vadd.f32 %v1652, %v1777
        %v1779 = vpop.f32.mrb[0].mxu0
        %v1780 = vadd.f32 %v1656, %v1779
        %1781 = vdwg.mxu0
        %v1782 = vmax.f32 %v1774, 0.0
        %v1783 = vmax.f32 %v1776, 0.0
        %v1784 = vmax.f32 %v1778, 0.0
        %v1785 = vmax.f32 %v1780, 0.0
        %v1786 = vld [vmem:[#allocation16] sm:$0xf]
        %v1787 = vld [vmem:[#allocation16 + $0x4] sm:$0xf]
        %v1788 = vld [vmem:[#allocation16 + $0x8] sm:$0xf]
        %v1789 = vld [vmem:[#allocation16 + $0xc] sm:$0xf]
        %v1790 = vld [vmem:[#allocation16 + $0x10] sm:$0xf]
        %v1791 = vld [vmem:[#allocation16 + $0x14] sm:$0xf]
        %v1792 = vld [vmem:[#allocation16 + $0x18] sm:$0xf]
        %v1793 = vld [vmem:[#allocation16 + $0x1c] sm:$0xf]
        %v1794 = vld [vmem:[#allocation16 + $0x20] sm:$0xf]
        %v1795 = vld [vmem:[#allocation16 + $0x24] sm:$0xf]
        %v1796 = vld [vmem:[#allocation16 + $0x28] sm:$0xf]
        %v1797 = vld [vmem:[#allocation16 + $0x2c] sm:$0xf]
        %v1798 = vld [vmem:[#allocation16 + $0x30] sm:$0xf]
        %v1799 = vld [vmem:[#allocation16 + $0x34] sm:$0xf]
        %v1800 = vld [vmem:[#allocation16 + $0x38] sm:$0xf]
        %v1801 = vld [vmem:[#allocation16 + $0x3c] sm:$0xf]
        %v1802 = vld [vmem:[#allocation16 + $0x40] sm:$0xf]
        %v1803 = vld [vmem:[#allocation16 + $0x44] sm:$0xf]
        %v1804 = vld [vmem:[#allocation16 + $0x48] sm:$0xf]
        %v1805 = vld [vmem:[#allocation16 + $0x4c] sm:$0xf]
        %v1806 = vld [vmem:[#allocation16 + $0x50] sm:$0xf]
        %v1807 = vld [vmem:[#allocation16 + $0x54] sm:$0xf]
        %v1808 = vld [vmem:[#allocation16 + $0x58] sm:$0xf]
        %v1809 = vld [vmem:[#allocation16 + $0x5c] sm:$0xf]
        %v1810 = vld [vmem:[#allocation16 + $0x60] sm:$0xf]
        %v1811 = vld [vmem:[#allocation16 + $0x64] sm:$0xf]
        %v1812 = vld [vmem:[#allocation16 + $0x68] sm:$0xf]
        %v1813 = vld [vmem:[#allocation16 + $0x6c] sm:$0xf]
        %v1814 = vld [vmem:[#allocation16 + $0x70] sm:$0xf]
        %v1815 = vld [vmem:[#allocation16 + $0x74] sm:$0xf]
        %v1816 = vld [vmem:[#allocation16 + $0x78] sm:$0xf]
        %v1817 = vld [vmem:[#allocation16 + $0x7c] sm:$0xf]
        %v1818 = vpack.c.bf16 %v1784, %v1782
        %v1819 = vpack.c.bf16 %v1785, %v1783
        %v1820 = vld [vmem:[#allocation17] sm:$0x1]
        %v1822 = vlaneseq
        %v1823 = vshrl.u32 %v1822, 7
        %v1824 = vsub.s32 0, %v1823
        %v1825 = vrot.slane %v1820, %v1824
        %v1859 = vunpack.c.l.b16 %v1786
        %v1860 = vunpack.c.l.b16 %v1787
        %v1861 = vunpack.c.l.b16 %v1788
        %v1862 = vunpack.c.l.b16 %v1789
        %v1863 = vunpack.c.l.b16 %v1790
        %v1864 = vunpack.c.l.b16 %v1791
        %v1865 = vunpack.c.l.b16 %v1792
        %v1866 = vunpack.c.l.b16 %v1793
        %v1867 = vunpack.c.l.b16 %v1794
        %v1868 = vunpack.c.l.b16 %v1795
        %v1869 = vunpack.c.l.b16 %v1796
        %v1870 = vunpack.c.l.b16 %v1797
        %v1871 = vunpack.c.l.b16 %v1798
        %v1872 = vunpack.c.l.b16 %v1799
        %v1873 = vunpack.c.l.b16 %v1800
        %v1874 = vunpack.c.l.b16 %v1801
        %v1875 = vunpack.c.l.b16 %v1802
        %v1876 = vunpack.c.l.b16 %v1803
        %v1877 = vunpack.c.l.b16 %v1804
        %v1878 = vunpack.c.l.b16 %v1805
        %v1879 = vunpack.c.l.b16 %v1806
        %v1880 = vunpack.c.l.b16 %v1807
        %v1881 = vunpack.c.l.b16 %v1808
        %v1882 = vunpack.c.l.b16 %v1809
        %v1883 = vunpack.c.l.b16 %v1810
        %v1884 = vunpack.c.l.b16 %v1811
        %v1885 = vunpack.c.l.b16 %v1812
        %v1886 = vunpack.c.l.b16 %v1813
        %v1887 = vunpack.c.l.b16 %v1814
        %v1888 = vunpack.c.l.b16 %v1815
        %v1889 = vunpack.c.l.b16 %v1816
        %v1890 = vunpack.c.l.b16 %v1817
        %v1891 = vpack.c.b16 %v1860, %v1859
        %v1892 = vpack.c.b16 %v1862, %v1861
        %v1893 = vpack.c.b16 %v1864, %v1863
        %v1894 = vpack.c.b16 %v1866, %v1865
        %v1895 = vpack.c.b16 %v1868, %v1867
        %v1896 = vpack.c.b16 %v1870, %v1869
        %v1897 = vpack.c.b16 %v1872, %v1871
        %v1898 = vpack.c.b16 %v1874, %v1873
        %v1899 = vpack.c.b16 %v1876, %v1875
        %v1900 = vpack.c.b16 %v1878, %v1877
        %v1901 = vpack.c.b16 %v1880, %v1879
        %v1902 = vpack.c.b16 %v1882, %v1881
        %v1903 = vpack.c.b16 %v1884, %v1883
        %v1904 = vpack.c.b16 %v1886, %v1885
        %v1905 = vpack.c.b16 %v1888, %v1887
        %v1906 = vpack.c.b16 %v1890, %v1889
        %1923 = vmatprep.subr.bf16.mxu0 0
        %1924 = vmatpush1.bf16.msra.mxu0 %v1891
        %1925 = vmatprep.subr.bf16.mxu0 0
        %1926 = vmatpush1.bf16.msra.mxu0 %v1892
        %1927 = vmatprep.subr.bf16.mxu0 0
        %1928 = vmatpush1.bf16.msra.mxu0 %v1893
        %1929 = vmatprep.subr.bf16.mxu0 0
        %1930 = vmatpush1.bf16.msra.mxu0 %v1894
        %1931 = vmatprep.subr.bf16.mxu0 0
        %1932 = vmatpush1.bf16.msra.mxu0 %v1895
        %1933 = vmatprep.subr.bf16.mxu0 0
        %1934 = vmatpush1.bf16.msra.mxu0 %v1896
        %1935 = vmatprep.subr.bf16.mxu0 0
        %1936 = vmatpush1.bf16.msra.mxu0 %v1897
        %1937 = vmatprep.subr.bf16.mxu0 0
        %1938 = vmatpush1.bf16.msra.mxu0 %v1898
        %1939 = vmatprep.subr.bf16.mxu0 0
        %1940 = vmatpush1.bf16.msra.mxu0 %v1899
        %1941 = vmatprep.subr.bf16.mxu0 0
        %1942 = vmatpush1.bf16.msra.mxu0 %v1900
        %1943 = vmatprep.subr.bf16.mxu0 0
        %1944 = vmatpush1.bf16.msra.mxu0 %v1901
        %1945 = vmatprep.subr.bf16.mxu0 0
        %1946 = vmatpush1.bf16.msra.mxu0 %v1902
        %1947 = vmatprep.subr.bf16.mxu0 0
        %1948 = vmatpush1.bf16.msra.mxu0 %v1903
        %1949 = vmatprep.subr.bf16.mxu0 0
        %1950 = vmatpush1.bf16.msra.mxu0 %v1904
        %1951 = vmatprep.subr.bf16.mxu0 0
        %1952 = vmatpush1.bf16.msra.mxu0 %v1905
        %1953 = vmatprep.subr.bf16.mxu0 0
        %1954 = vmatpush1.bf16.msra.mxu0 %v1906
        %1955 = vmatprep.mubr.bf16.mxu0 %v1819
        %1956 = vmatmul.mubr.bf16.gmra.mrb[0].mxu0 %v1818
        %v1957 = vpop.f32.mrb[0].mxu0
        %v1958 = vadd.f32 %v1825, %v1957
        %v1959 = vpop.f32.mrb[0].mxu0
        %v1960 = vpop.f32.mrb[0].mxu0
        %v1961 = vadd.f32 %v1825, %v1960
        %v1962 = vpop.f32.mrb[0].mxu0
        %1963 = vdwg.mxu0
        %v1964 = vadd.f32 %v1628, %v1958
        %v1965 = vadd.f32 %v1629, %v1961
        %v1966 = vld [vmem:[#allocation19] sm:$0x1]
        %v1967 = vld [vmem:[#allocation20] sm:$0x1]
        %1968 = vadd.xlane.f32.xlu0 %v1964
        %v1969 = vpop.xlane.xlu0 %1968
        %1970 = vadd.xlane.f32.xlu0 %v1965
        %v1971 = vpop.xlane.xlu0 %1970
        %v1972 = vmul.f32 %v1969, %v1595
        %v1973 = vmul.f32 %v1971, %v1595
        %v1974 = vsub.f32 %v1964, %v1972
        %v1975 = vsub.f32 %v1965, %v1973
        %v1976 = vmul.f32 %v1974, %v1974
        %v1977 = vmul.f32 %v1975, %v1975
        %1978 = vadd.xlane.f32.xlu0 %v1976
        %v1979 = vpop.xlane.xlu0 %1978
        %1980 = vadd.xlane.f32.xlu0 %v1977
        %v1981 = vpop.xlane.xlu0 %1980
        %v1982 = vmul.f32 %v1979, %v1595
        %v1983 = vmul.f32 %v1981, %v1595
        %v1984 = vadd.f32 %v1982, 1e-05
        %v1985 = vadd.f32 %v1983, 1e-05
        %v1986 = vrsqrt.pop %v1984
        %v1987 = vrsqrt.pop %v1985
        %v1988 = vmul.f32 %v1974, %v1986
        %v1989 = vmul.f32 %v1975, %v1987
        %v1991 = vlaneseq
        %v1992 = vshrl.u32 %v1991, 7
        %v1993 = vsub.s32 0, %v1992
        %v1994 = vrot.slane %v1966, %v1993
        %v1996 = vmul.f32 %v1988, %v1994
        %v1997 = vmul.f32 %v1989, %v1994
        %v1999 = vlaneseq
        %v2000 = vshrl.u32 %v1999, 7
        %v2001 = vsub.s32 0, %v2000
        %v2002 = vrot.slane %v1967, %v2001
        %v2004 = vadd.f32 %v1996, %v2002
        %v2005 = vadd.f32 %v1997, %v2002
        %s2006 = scalar_lea.vmem [#allocation2], 192
        %v2007 = vld [vmem:[%s2006] sm:$0xff]
        %v2008 = vld [vmem:[%s2006 + $0x8] sm:$0xf]
        %v2009 = vld [vmem:[%s2006 + $0xc] sm:$0xff]
        %v2010 = vld [vmem:[%s2006 + $0x14] sm:$0xf]
        %v2011 = vld [vmem:[%s2006 + $0x18] sm:$0xff]
        %v2012 = vld [vmem:[%s2006 + $0x20] sm:$0xf]
        %v2013 = vld [vmem:[%s2006 + $0x24] sm:$0xff]
        %v2014 = vld [vmem:[%s2006 + $0x2c] sm:$0xf]
        %v2015 = vld [vmem:[%s2006 + $0x30] sm:$0xff]
        %v2016 = vld [vmem:[%s2006 + $0x38] sm:$0xf]
        %v2017 = vld [vmem:[%s2006 + $0x3c] sm:$0xff]
        %v2018 = vld [vmem:[%s2006 + $0x44] sm:$0xf]
        %v2019 = vld [vmem:[%s2006 + $0x48] sm:$0xff]
        %v2020 = vld [vmem:[%s2006 + $0x50] sm:$0xf]
        %v2021 = vld [vmem:[%s2006 + $0x54] sm:$0xff]
        %v2022 = vld [vmem:[%s2006 + $0x5c] sm:$0xf]
        %v2023 = vld [vmem:[%s2006 + $0x60] sm:$0xff]
        %v2024 = vld [vmem:[%s2006 + $0x68] sm:$0xf]
        %v2025 = vld [vmem:[%s2006 + $0x6c] sm:$0xff]
        %v2026 = vld [vmem:[%s2006 + $0x74] sm:$0xf]
        %v2027 = vld [vmem:[%s2006 + $0x78] sm:$0xff]
        %v2028 = vld [vmem:[%s2006 + $0x80] sm:$0xf]
        %v2029 = vld [vmem:[%s2006 + $0x84] sm:$0xff]
        %v2030 = vld [vmem:[%s2006 + $0x8c] sm:$0xf]
        %v2031 = vld [vmem:[%s2006 + $0x90] sm:$0xff]
        %v2032 = vld [vmem:[%s2006 + $0x98] sm:$0xf]
        %v2033 = vld [vmem:[%s2006 + $0x9c] sm:$0xff]
        %v2034 = vld [vmem:[%s2006 + $0xa4] sm:$0xf]
        %v2035 = vld [vmem:[%s2006 + $0xa8] sm:$0xff]
        %v2036 = vld [vmem:[%s2006 + $0xb0] sm:$0xf]
        %v2037 = vld [vmem:[%s2006 + $0xb4] sm:$0xff]
        %v2038 = vld [vmem:[%s2006 + $0xbc] sm:$0xf]
        %v2039 = vpack.c.bf16 %v2005, %v2004
        %s2040 = scalar_lea.vmem [#allocation5], 3
        %v2041 = vld [vmem:[%s2040] sm:$0x7]
        %v2043 = vlaneseq
        %v2044 = vshrl.u32 %v2043, 7
        %v2045 = vsub.s32 0, %v2044
        %v2046 = vrot.slane %v2041, %v2045
        %v2047 = vlaneseq
        %v2048 = vshrl.u32 %v2047, 7
        %v2049 = vsub.s32 1, %v2048
        %v2050 = vrot.slane %v2041, %v2049
        %v2051 = vlaneseq
        %v2052 = vshrl.u32 %v2051, 7
        %v2053 = vsub.s32 2, %v2052
        %v2054 = vrot.slane %v2041, %v2053
        %v2090 = vunpack.c.l.b16 %v2007
        %v2091 = vunpack.c.h.b16 %v2007
        %v2092 = vunpack.c.l.b16 %v2008
        %v2093 = vunpack.c.l.b16 %v2009
        %v2094 = vunpack.c.h.b16 %v2009
        %v2095 = vunpack.c.l.b16 %v2010
        %v2096 = vunpack.c.l.b16 %v2011
        %v2097 = vunpack.c.h.b16 %v2011
        %v2098 = vunpack.c.l.b16 %v2012
        %v2099 = vunpack.c.l.b16 %v2013
        %v2100 = vunpack.c.h.b16 %v2013
        %v2101 = vunpack.c.l.b16 %v2014
        %v2102 = vunpack.c.l.b16 %v2015
        %v2103 = vunpack.c.h.b16 %v2015
        %v2104 = vunpack.c.l.b16 %v2016
        %v2105 = vunpack.c.l.b16 %v2017
        %v2106 = vunpack.c.h.b16 %v2017
        %v2107 = vunpack.c.l.b16 %v2018
        %v2108 = vunpack.c.l.b16 %v2019
        %v2109 = vunpack.c.h.b16 %v2019
        %v2110 = vunpack.c.l.b16 %v2020
        %v2111 = vunpack.c.l.b16 %v2021
        %v2112 = vunpack.c.h.b16 %v2021
        %v2113 = vunpack.c.l.b16 %v2022
        %v2114 = vunpack.c.l.b16 %v2023
        %v2115 = vunpack.c.h.b16 %v2023
        %v2116 = vunpack.c.l.b16 %v2024
        %v2117 = vunpack.c.l.b16 %v2025
        %v2118 = vunpack.c.h.b16 %v2025
        %v2119 = vunpack.c.l.b16 %v2026
        %v2120 = vunpack.c.l.b16 %v2027
        %v2121 = vunpack.c.h.b16 %v2027
        %v2122 = vunpack.c.l.b16 %v2028
        %v2123 = vunpack.c.l.b16 %v2029
        %v2124 = vunpack.c.h.b16 %v2029
        %v2125 = vunpack.c.l.b16 %v2030
        %v2126 = vunpack.c.l.b16 %v2031
        %v2127 = vunpack.c.h.b16 %v2031
        %v2128 = vunpack.c.l.b16 %v2032
        %v2129 = vunpack.c.l.b16 %v2033
        %v2130 = vunpack.c.h.b16 %v2033
        %v2131 = vunpack.c.l.b16 %v2034
        %v2132 = vunpack.c.l.b16 %v2035
        %v2133 = vunpack.c.h.b16 %v2035
        %v2134 = vunpack.c.l.b16 %v2036
        %v2135 = vunpack.c.l.b16 %v2037
        %v2136 = vunpack.c.h.b16 %v2037
        %v2137 = vunpack.c.l.b16 %v2038
        %v2138 = vpack.c.b16 %v2093, %v2090
        %v2139 = vpack.c.b16 %v2094, %v2091
        %v2140 = vpack.c.b16 %v2095, %v2092
        %v2141 = vpack.c.b16 %v2099, %v2096
        %v2142 = vpack.c.b16 %v2100, %v2097
        %v2143 = vpack.c.b16 %v2101, %v2098
        %v2144 = vpack.c.b16 %v2105, %v2102
        %v2145 = vpack.c.b16 %v2106, %v2103
        %v2146 = vpack.c.b16 %v2107, %v2104
        %v2147 = vpack.c.b16 %v2111, %v2108
        %v2148 = vpack.c.b16 %v2112, %v2109
        %v2149 = vpack.c.b16 %v2113, %v2110
        %v2150 = vpack.c.b16 %v2117, %v2114
        %v2151 = vpack.c.b16 %v2118, %v2115
        %v2152 = vpack.c.b16 %v2119, %v2116
        %v2153 = vpack.c.b16 %v2123, %v2120
        %v2154 = vpack.c.b16 %v2124, %v2121
        %v2155 = vpack.c.b16 %v2125, %v2122
        %v2156 = vpack.c.b16 %v2129, %v2126
        %v2157 = vpack.c.b16 %v2130, %v2127
        %v2158 = vpack.c.b16 %v2131, %v2128
        %v2159 = vpack.c.b16 %v2135, %v2132
        %v2160 = vpack.c.b16 %v2136, %v2133
        %v2161 = vpack.c.b16 %v2137, %v2134
        %2186 = vmatprep.subr.bf16.mxu0 %v2139
        %2187 = vmatpush1.bf16.msra.mxu0 %v2138
        %2188 = vmatprep.subr.bf16.mxu0 %v2142
        %2189 = vmatpush1.bf16.msra.mxu0 %v2141
        %2190 = vmatprep.subr.bf16.mxu0 %v2145
        %2191 = vmatpush1.bf16.msra.mxu0 %v2144
        %2192 = vmatprep.subr.bf16.mxu0 %v2148
        %2193 = vmatpush1.bf16.msra.mxu0 %v2147
        %2194 = vmatprep.subr.bf16.mxu0 %v2151
        %2195 = vmatpush1.bf16.msra.mxu0 %v2150
        %2196 = vmatprep.subr.bf16.mxu0 %v2154
        %2197 = vmatpush1.bf16.msra.mxu0 %v2153
        %2198 = vmatprep.subr.bf16.mxu0 %v2157
        %2199 = vmatpush1.bf16.msra.mxu0 %v2156
        %2200 = vmatprep.subr.bf16.mxu0 %v2160
        %2201 = vmatpush1.bf16.msra.mxu0 %v2159
        %2202 = vmatprep.subr.bf16.mxu0 0
        %2203 = vmatpush1.bf16.msra.mxu0 0
        %2204 = vmatprep.subr.bf16.mxu0 0
        %2205 = vmatpush1.bf16.msra.mxu0 0
        %2206 = vmatprep.subr.bf16.mxu0 0
        %2207 = vmatpush1.bf16.msra.mxu0 0
        %2208 = vmatprep.subr.bf16.mxu0 0
        %2209 = vmatpush1.bf16.msra.mxu0 0
        %2210 = vmatprep.subr.bf16.mxu0 0
        %2211 = vmatpush1.bf16.msra.mxu0 0
        %2212 = vmatprep.subr.bf16.mxu0 0
        %2213 = vmatpush1.bf16.msra.mxu0 0
        %2214 = vmatprep.subr.bf16.mxu0 0
        %2215 = vmatpush1.bf16.msra.mxu0 0
        %2216 = vmatprep.subr.bf16.mxu0 0
        %2217 = vmatpush1.bf16.msra.mxu0 0
        %2218 = vmatprep.mubr.bf16.mxu0 0
        %2219 = vmatmul.mubr.bf16.gmra.mrb[0].mxu0 %v2039
        %v2220 = vpop.f32.mrb[0].mxu0
        %v2221 = vadd.f32 %v2046, %v2220
        %v2222 = vpop.f32.mrb[0].mxu0
        %v2223 = vadd.f32 %v2050, %v2222
        %v2224 = vpop.f32.mrb[0].mxu0
        %v2225 = vadd.f32 %v2046, %v2224
        %v2226 = vpop.f32.mrb[0].mxu0
        %v2227 = vadd.f32 %v2050, %v2226
        %2228 = vdwg.mxu0
        %2229 = vmatprep.subr.bf16.mxu0 0
        %2230 = vmatpush1.bf16.msra.mxu0 %v2140
        %2231 = vmatprep.subr.bf16.mxu0 0
        %2232 = vmatpush1.bf16.msra.mxu0 %v2143
        %2233 = vmatprep.subr.bf16.mxu0 0
        %2234 = vmatpush1.bf16.msra.mxu0 %v2146
        %2235 = vmatprep.subr.bf16.mxu0 0
        %2236 = vmatpush1.bf16.msra.mxu0 %v2149
        %2237 = vmatprep.subr.bf16.mxu0 0
        %2238 = vmatpush1.bf16.msra.mxu0 %v2152
        %2239 = vmatprep.subr.bf16.mxu0 0
        %2240 = vmatpush1.bf16.msra.mxu0 %v2155
        %2241 = vmatprep.subr.bf16.mxu0 0
        %2242 = vmatpush1.bf16.msra.mxu0 %v2158
        %2243 = vmatprep.subr.bf16.mxu0 0
        %2244 = vmatpush1.bf16.msra.mxu0 %v2161
        %2245 = vmatprep.subr.bf16.mxu0 0
        %2246 = vmatpush1.bf16.msra.mxu0 0
        %2247 = vmatprep.subr.bf16.mxu0 0
        %2248 = vmatpush1.bf16.msra.mxu0 0
        %2249 = vmatprep.subr.bf16.mxu0 0
        %2250 = vmatpush1.bf16.msra.mxu0 0
        %2251 = vmatprep.subr.bf16.mxu0 0
        %2252 = vmatpush1.bf16.msra.mxu0 0
        %2253 = vmatprep.subr.bf16.mxu0 0
        %2254 = vmatpush1.bf16.msra.mxu0 0
        %2255 = vmatprep.subr.bf16.mxu0 0
        %2256 = vmatpush1.bf16.msra.mxu0 0
        %2257 = vmatprep.subr.bf16.mxu0 0
        %2258 = vmatpush1.bf16.msra.mxu0 0
        %2259 = vmatprep.subr.bf16.mxu0 0
        %2260 = vmatpush1.bf16.msra.mxu0 0
        %2261 = vmatprep.mubr.bf16.mxu0 0
        %2262 = vmatmul.mubr.bf16.gmra.mrb[0].mxu0 %v2039
        %v2263 = vpop.f32.mrb[0].mxu0
        %v2264 = vadd.f32 %v2054, %v2263
        %v2265 = vpop.f32.mrb[0].mxu0
        %v2266 = vpop.f32.mrb[0].mxu0
        %v2267 = vadd.f32 %v2054, %v2266
        %v2268 = vpop.f32.mrb[0].mxu0
        %2269 = vdwg.mxu0
        %v2270 = vmul.f32 %v2221, 0.17677669
        %v2271 = vmul.f32 %v2225, 0.17677669
        %2274 = vrot.lane.b32.xlu0 %v2270, 96
        %v2275 = vpop.permute.xlu0 %2274
        %2276 = vrot.lane.b32.xlu0 %v2271, 96
        %v2277 = vpop.permute.xlu0 %2276
        %2280 = vrot.lane.b32.xlu0 %v2270, 64
        %v2281 = vpop.permute.xlu0 %2280
        %2282 = vrot.lane.b32.xlu0 %v2271, 64
        %v2283 = vpop.permute.xlu0 %2282
        %2286 = vrot.lane.b32.xlu0 %v2270, 32
        %v2287 = vpop.permute.xlu0 %2286
        %2288 = vrot.lane.b32.xlu0 %v2271, 32
        %v2289 = vpop.permute.xlu0 %2288
        %v2292 = vpack.c.bf16 %v2271, %v2270
        %v2293 = vpack.c.bf16 %v2277, %v2275
        %v2294 = vpack.c.bf16 %v2283, %v2281
        %v2295 = vpack.c.bf16 %v2289, %v2287
        %2298 = vrot.lane.b32.xlu0 %v2223, 96
        %v2299 = vpop.permute.xlu0 %2298
        %2300 = vrot.lane.b32.xlu0 %v2227, 96
        %v2301 = vpop.permute.xlu0 %2300
        %2304 = vrot.lane.b32.xlu0 %v2223, 64
        %v2305 = vpop.permute.xlu0 %2304
        %2306 = vrot.lane.b32.xlu0 %v2227, 64
        %v2307 = vpop.permute.xlu0 %2306
        %2310 = vrot.lane.b32.xlu0 %v2223, 32
        %v2311 = vpop.permute.xlu0 %2310
        %2312 = vrot.lane.b32.xlu0 %v2227, 32
        %v2313 = vpop.permute.xlu0 %2312
        %v2316 = vpack.c.bf16 %v2227, %v2223
        %v2317 = vpack.c.bf16 %v2301, %v2299
        %v2318 = vpack.c.bf16 %v2307, %v2305
        %v2319 = vpack.c.bf16 %v2313, %v2311
        %2322 = vrot.lane.b32.xlu0 %v2264, 96
        %v2323 = vpop.permute.xlu0 %2322
        %2324 = vrot.lane.b32.xlu0 %v2267, 96
        %v2325 = vpop.permute.xlu0 %2324
        %2328 = vrot.lane.b32.xlu0 %v2264, 64
        %v2329 = vpop.permute.xlu0 %2328
        %2330 = vrot.lane.b32.xlu0 %v2267, 64
        %v2331 = vpop.permute.xlu0 %2330
        %2334 = vrot.lane.b32.xlu0 %v2264, 32
        %v2335 = vpop.permute.xlu0 %2334
        %2336 = vrot.lane.b32.xlu0 %v2267, 32
        %v2337 = vpop.permute.xlu0 %2336
        %v2340 = vpack.c.bf16 %v2267, %v2264
        %v2341 = vpack.c.bf16 %v2325, %v2323
        %v2342 = vpack.c.bf16 %v2331, %v2329
        %v2343 = vpack.c.bf16 %v2337, %v2335
        %v2345 = vsel %vm984, %v2292, 0
        %v2348 = vsel %vm984, %v2316, 0
        %2350 = vmatprep.subr.bf16.mxu0 0
        %2351 = vmatpush1.bf16.xpose.msra.mxu0 %v2348
        %2352 = vmatprep.subr.bf16.mxu0 0
        %2353 = vmatpush1.bf16.xpose.msra.mxu0 0
        %2354 = vmatprep.subr.bf16.mxu0 0
        %2355 = vmatpush1.bf16.xpose.msra.mxu0 0
        %2356 = vmatprep.subr.bf16.mxu0 0
        %2357 = vmatpush1.bf16.xpose.msra.mxu0 0
        %2358 = vmatprep.subr.bf16.mxu0 0
        %2359 = vmatpush1.bf16.xpose.msra.mxu0 0
        %2360 = vmatprep.subr.bf16.mxu0 0
        %2361 = vmatpush1.bf16.xpose.msra.mxu0 0
        %2362 = vmatprep.subr.bf16.mxu0 0
        %2363 = vmatpush1.bf16.xpose.msra.mxu0 0
        %2364 = vmatprep.subr.bf16.mxu0 0
        %2365 = vmatpush1.bf16.xpose.msra.mxu0 0
        %2366 = vmatprep.subr.bf16.mxu0 0
        %2367 = vmatpush1.bf16.xpose.msra.mxu0 0
        %2368 = vmatprep.subr.bf16.mxu0 0
        %2369 = vmatpush1.bf16.xpose.msra.mxu0 0
        %2370 = vmatprep.subr.bf16.mxu0 0
        %2371 = vmatpush1.bf16.xpose.msra.mxu0 0
        %2372 = vmatprep.subr.bf16.mxu0 0
        %2373 = vmatpush1.bf16.xpose.msra.mxu0 0
        %2374 = vmatprep.subr.bf16.mxu0 0
        %2375 = vmatpush1.bf16.xpose.msra.mxu0 0
        %2376 = vmatprep.subr.bf16.mxu0 0
        %2377 = vmatpush1.bf16.xpose.msra.mxu0 0
        %2378 = vmatprep.subr.bf16.mxu0 0
        %2379 = vmatpush1.bf16.xpose.msra.mxu0 0
        %2380 = vmatprep.subr.bf16.mxu0 0
        %2381 = vmatpush1.bf16.xpose.msra.mxu0 0
        %2382 = vmatprep.mubr.bf16.mxu0 0
        %2383 = vmatmul.mubr.bf16.gmra.mrb[0].mxu0 %v2345
        %v2384 = vpop.f32.mrb[0].mxu0
        %v2385 = vadd.f32 0.0, %v2384
        %v2386 = vpop.f32.mrb[0].mxu0
        %v2387 = vpop.f32.mrb[0].mxu0
        %v2388 = vadd.f32 0.0, %v2387
        %v2389 = vpop.f32.mrb[0].mxu0
        %2390 = vdwg.mxu0
        %v2392 = vsel %vm984, %v2293, 0
        %v2395 = vsel %vm984, %v2317, 0
        %2397 = vmatprep.subr.bf16.mxu0 0
        %2398 = vmatpush1.bf16.xpose.msra.mxu0 %v2395
        %2399 = vmatprep.subr.bf16.mxu0 0
        %2400 = vmatpush1.bf16.xpose.msra.mxu0 0
        %2401 = vmatprep.subr.bf16.mxu0 0
        %2402 = vmatpush1.bf16.xpose.msra.mxu0 0
        %2403 = vmatprep.subr.bf16.mxu0 0
        %2404 = vmatpush1.bf16.xpose.msra.mxu0 0
        %2405 = vmatprep.subr.bf16.mxu0 0
        %2406 = vmatpush1.bf16.xpose.msra.mxu0 0
        %2407 = vmatprep.subr.bf16.mxu0 0
        %2408 = vmatpush1.bf16.xpose.msra.mxu0 0
        %2409 = vmatprep.subr.bf16.mxu0 0
        %2410 = vmatpush1.bf16.xpose.msra.mxu0 0
        %2411 = vmatprep.subr.bf16.mxu0 0
        %2412 = vmatpush1.bf16.xpose.msra.mxu0 0
        %2413 = vmatprep.subr.bf16.mxu0 0
        %2414 = vmatpush1.bf16.xpose.msra.mxu0 0
        %2415 = vmatprep.subr.bf16.mxu0 0
        %2416 = vmatpush1.bf16.xpose.msra.mxu0 0
        %2417 = vmatprep.subr.bf16.mxu0 0
        %2418 = vmatpush1.bf16.xpose.msra.mxu0 0
        %2419 = vmatprep.subr.bf16.mxu0 0
        %2420 = vmatpush1.bf16.xpose.msra.mxu0 0
        %2421 = vmatprep.subr.bf16.mxu0 0
        %2422 = vmatpush1.bf16.xpose.msra.mxu0 0
        %2423 = vmatprep.subr.bf16.mxu0 0
        %2424 = vmatpush1.bf16.xpose.msra.mxu0 0
        %2425 = vmatprep.subr.bf16.mxu0 0
        %2426 = vmatpush1.bf16.xpose.msra.mxu0 0
        %2427 = vmatprep.subr.bf16.mxu0 0
        %2428 = vmatpush1.bf16.xpose.msra.mxu0 0
        %2429 = vmatprep.mubr.bf16.mxu0 0
        %2430 = vmatmul.mubr.bf16.gmra.mrb[0].mxu0 %v2392
        %v2431 = vpop.f32.mrb[0].mxu0
        %v2432 = vadd.f32 0.0, %v2431
        %v2433 = vpop.f32.mrb[0].mxu0
        %v2434 = vpop.f32.mrb[0].mxu0
        %v2435 = vadd.f32 0.0, %v2434
        %v2436 = vpop.f32.mrb[0].mxu0
        %2437 = vdwg.mxu0
        %v2439 = vsel %vm984, %v2294, 0
        %v2442 = vsel %vm984, %v2318, 0
        %2444 = vmatprep.subr.bf16.mxu0 0
        %2445 = vmatpush1.bf16.xpose.msra.mxu0 %v2442
        %2446 = vmatprep.subr.bf16.mxu0 0
        %2447 = vmatpush1.bf16.xpose.msra.mxu0 0
        %2448 = vmatprep.subr.bf16.mxu0 0
        %2449 = vmatpush1.bf16.xpose.msra.mxu0 0
        %2450 = vmatprep.subr.bf16.mxu0 0
        %2451 = vmatpush1.bf16.xpose.msra.mxu0 0
        %2452 = vmatprep.subr.bf16.mxu0 0
        %2453 = vmatpush1.bf16.xpose.msra.mxu0 0
        %2454 = vmatprep.subr.bf16.mxu0 0
        %2455 = vmatpush1.bf16.xpose.msra.mxu0 0
        %2456 = vmatprep.subr.bf16.mxu0 0
        %2457 = vmatpush1.bf16.xpose.msra.mxu0 0
        %2458 = vmatprep.subr.bf16.mxu0 0
        %2459 = vmatpush1.bf16.xpose.msra.mxu0 0
        %2460 = vmatprep.subr.bf16.mxu0 0
        %2461 = vmatpush1.bf16.xpose.msra.mxu0 0
        %2462 = vmatprep.subr.bf16.mxu0 0
        %2463 = vmatpush1.bf16.xpose.msra.mxu0 0
        %2464 = vmatprep.subr.bf16.mxu0 0
        %2465 = vmatpush1.bf16.xpose.msra.mxu0 0
        %2466 = vmatprep.subr.bf16.mxu0 0
        %2467 = vmatpush1.bf16.xpose.msra.mxu0 0
        %2468 = vmatprep.subr.bf16.mxu0 0
        %2469 = vmatpush1.bf16.xpose.msra.mxu0 0
        %2470 = vmatprep.subr.bf16.mxu0 0
        %2471 = vmatpush1.bf16.xpose.msra.mxu0 0
        %2472 = vmatprep.subr.bf16.mxu0 0
        %2473 = vmatpush1.bf16.xpose.msra.mxu0 0
        %2474 = vmatprep.subr.bf16.mxu0 0
        %2475 = vmatpush1.bf16.xpose.msra.mxu0 0
        %2476 = vmatprep.mubr.bf16.mxu0 0
        %2477 = vmatmul.mubr.bf16.gmra.mrb[0].mxu0 %v2439
        %v2478 = vpop.f32.mrb[0].mxu0
        %v2479 = vadd.f32 0.0, %v2478
        %v2480 = vpop.f32.mrb[0].mxu0
        %v2481 = vpop.f32.mrb[0].mxu0
        %v2482 = vadd.f32 0.0, %v2481
        %v2483 = vpop.f32.mrb[0].mxu0
        %2484 = vdwg.mxu0
        %v2486 = vsel %vm984, %v2295, 0
        %v2489 = vsel %vm984, %v2319, 0
        %2491 = vmatprep.subr.bf16.mxu0 0
        %2492 = vmatpush1.bf16.xpose.msra.mxu0 %v2489
        %2493 = vmatprep.subr.bf16.mxu0 0
        %2494 = vmatpush1.bf16.xpose.msra.mxu0 0
        %2495 = vmatprep.subr.bf16.mxu0 0
        %2496 = vmatpush1.bf16.xpose.msra.mxu0 0
        %2497 = vmatprep.subr.bf16.mxu0 0
        %2498 = vmatpush1.bf16.xpose.msra.mxu0 0
        %2499 = vmatprep.subr.bf16.mxu0 0
        %2500 = vmatpush1.bf16.xpose.msra.mxu0 0
        %2501 = vmatprep.subr.bf16.mxu0 0
        %2502 = vmatpush1.bf16.xpose.msra.mxu0 0
        %2503 = vmatprep.subr.bf16.mxu0 0
        %2504 = vmatpush1.bf16.xpose.msra.mxu0 0
        %2505 = vmatprep.subr.bf16.mxu0 0
        %2506 = vmatpush1.bf16.xpose.msra.mxu0 0
        %2507 = vmatprep.subr.bf16.mxu0 0
        %2508 = vmatpush1.bf16.xpose.msra.mxu0 0
        %2509 = vmatprep.subr.bf16.mxu0 0
        %2510 = vmatpush1.bf16.xpose.msra.mxu0 0
        %2511 = vmatprep.subr.bf16.mxu0 0
        %2512 = vmatpush1.bf16.xpose.msra.mxu0 0
        %2513 = vmatprep.subr.bf16.mxu0 0
        %2514 = vmatpush1.bf16.xpose.msra.mxu0 0
        %2515 = vmatprep.subr.bf16.mxu0 0
        %2516 = vmatpush1.bf16.xpose.msra.mxu0 0
        %2517 = vmatprep.subr.bf16.mxu0 0
        %2518 = vmatpush1.bf16.xpose.msra.mxu0 0
        %2519 = vmatprep.subr.bf16.mxu0 0
        %2520 = vmatpush1.bf16.xpose.msra.mxu0 0
        %2521 = vmatprep.subr.bf16.mxu0 0
        %2522 = vmatpush1.bf16.xpose.msra.mxu0 0
        %2523 = vmatprep.mubr.bf16.mxu0 0
        %2524 = vmatmul.mubr.bf16.gmra.mrb[0].mxu0 %v2486
        %v2525 = vpop.f32.mrb[0].mxu0
        %v2526 = vadd.f32 0.0, %v2525
        %v2527 = vpop.f32.mrb[0].mxu0
        %v2528 = vpop.f32.mrb[0].mxu0
        %v2529 = vadd.f32 0.0, %v2528
        %v2530 = vpop.f32.mrb[0].mxu0
        %2531 = vdwg.mxu0
        %v2532 = vsel %vm1173, %v2385, -inf
        %2533 = vmax.xlane.f32.xlu0 %v2532
        %v2534 = vpop.xlane.xlu0 %2533
        %v2535 = vsel %vm1173, %v2388, -inf
        %2536 = vmax.xlane.f32.xlu0 %v2535
        %v2537 = vpop.xlane.xlu0 %2536
        %v2538 = vsel %vm1173, %v2432, -inf
        %2539 = vmax.xlane.f32.xlu0 %v2538
        %v2540 = vpop.xlane.xlu0 %2539
        %v2541 = vsel %vm1173, %v2435, -inf
        %2542 = vmax.xlane.f32.xlu0 %v2541
        %v2543 = vpop.xlane.xlu0 %2542
        %v2544 = vsel %vm1173, %v2479, -inf
        %2545 = vmax.xlane.f32.xlu0 %v2544
        %v2546 = vpop.xlane.xlu0 %2545
        %v2547 = vsel %vm1173, %v2482, -inf
        %2548 = vmax.xlane.f32.xlu0 %v2547
        %v2549 = vpop.xlane.xlu0 %2548
        %v2550 = vsel %vm1173, %v2526, -inf
        %2551 = vmax.xlane.f32.xlu0 %v2550
        %v2552 = vpop.xlane.xlu0 %2551
        %v2553 = vsel %vm1173, %v2529, -inf
        %2554 = vmax.xlane.f32.xlu0 %v2553
        %v2555 = vpop.xlane.xlu0 %2554
        %v2556 = vsub.f32 %v2385, %v2534
        %v2557 = vsub.f32 %v2388, %v2537
        %v2558 = vsub.f32 %v2432, %v2540
        %v2559 = vsub.f32 %v2435, %v2543
        %v2560 = vsub.f32 %v2479, %v2546
        %v2561 = vsub.f32 %v2482, %v2549
        %v2562 = vsub.f32 %v2526, %v2552
        %v2563 = vsub.f32 %v2529, %v2555
        %v2564 = vmul.f32 %v2556, 1.442695
        %v2565 = vpow.pop %v2564
        %v2566 = vmul.f32 %v2557, 1.442695
        %v2567 = vpow.pop %v2566
        %v2568 = vmul.f32 %v2558, 1.442695
        %v2569 = vpow.pop %v2568
        %v2570 = vmul.f32 %v2559, 1.442695
        %v2571 = vpow.pop %v2570
        %v2572 = vmul.f32 %v2560, 1.442695
        %v2573 = vpow.pop %v2572
        %v2574 = vmul.f32 %v2561, 1.442695
        %v2575 = vpow.pop %v2574
        %v2576 = vmul.f32 %v2562, 1.442695
        %v2577 = vpow.pop %v2576
        %v2578 = vmul.f32 %v2563, 1.442695
        %v2579 = vpow.pop %v2578
        %v2580 = vsel %vm1173, %v2565, 0.0
        %2581 = vadd.xlane.f32.xlu0 %v2580
        %v2582 = vpop.xlane.xlu0 %2581
        %v2583 = vsel %vm1173, %v2567, 0.0
        %2584 = vadd.xlane.f32.xlu0 %v2583
        %v2585 = vpop.xlane.xlu0 %2584
        %v2586 = vsel %vm1173, %v2569, 0.0
        %2587 = vadd.xlane.f32.xlu0 %v2586
        %v2588 = vpop.xlane.xlu0 %2587
        %v2589 = vsel %vm1173, %v2571, 0.0
        %2590 = vadd.xlane.f32.xlu0 %v2589
        %v2591 = vpop.xlane.xlu0 %2590
        %v2592 = vsel %vm1173, %v2573, 0.0
        %2593 = vadd.xlane.f32.xlu0 %v2592
        %v2594 = vpop.xlane.xlu0 %2593
        %v2595 = vsel %vm1173, %v2575, 0.0
        %2596 = vadd.xlane.f32.xlu0 %v2595
        %v2597 = vpop.xlane.xlu0 %2596
        %v2598 = vsel %vm1173, %v2577, 0.0
        %2599 = vadd.xlane.f32.xlu0 %v2598
        %v2600 = vpop.xlane.xlu0 %2599
        %v2601 = vsel %vm1173, %v2579, 0.0
        %2602 = vadd.xlane.f32.xlu0 %v2601
        %v2603 = vpop.xlane.xlu0 %2602
        %v2604 = vrcp.pop %v2582
        %v2605 = vmul.f32 %v2565, %v2604
        %v2606 = vrcp.pop %v2585
        %v2607 = vmul.f32 %v2567, %v2606
        %v2608 = vrcp.pop %v2588
        %v2609 = vmul.f32 %v2569, %v2608
        %v2610 = vrcp.pop %v2591
        %v2611 = vmul.f32 %v2571, %v2610
        %v2612 = vrcp.pop %v2594
        %v2613 = vmul.f32 %v2573, %v2612
        %v2614 = vrcp.pop %v2597
        %v2615 = vmul.f32 %v2575, %v2614
        %v2616 = vrcp.pop %v2600
        %v2617 = vmul.f32 %v2577, %v2616
        %v2618 = vrcp.pop %v2603
        %v2619 = vmul.f32 %v2579, %v2618
        %v2620 = vpack.c.bf16 %v2607, %v2605
        %v2621 = vpack.c.bf16 %v2611, %v2609
        %v2622 = vpack.c.bf16 %v2615, %v2613
        %v2623 = vpack.c.bf16 %v2619, %v2617
        %v2625 = vsel %vm1173, %v2620, 0
        %2627 = vmatprep.subr.bf16.mxu0 0
        %2628 = vmatpush1.bf16.msra.mxu0 %v2340
        %2629 = vmatprep.subr.bf16.mxu0 0
        %2630 = vmatpush1.bf16.msra.mxu0 0
        %2631 = vmatprep.subr.bf16.mxu0 0
        %2632 = vmatpush1.bf16.msra.mxu0 0
        %2633 = vmatprep.subr.bf16.mxu0 0
        %2634 = vmatpush1.bf16.msra.mxu0 0
        %2635 = vmatprep.subr.bf16.mxu0 0
        %2636 = vmatpush1.bf16.msra.mxu0 0
        %2637 = vmatprep.subr.bf16.mxu0 0
        %2638 = vmatpush1.bf16.msra.mxu0 0
        %2639 = vmatprep.subr.bf16.mxu0 0
        %2640 = vmatpush1.bf16.msra.mxu0 0
        %2641 = vmatprep.subr.bf16.mxu0 0
        %2642 = vmatpush1.bf16.msra.mxu0 0
        %2643 = vmatprep.subr.bf16.mxu0 0
        %2644 = vmatpush1.bf16.msra.mxu0 0
        %2645 = vmatprep.subr.bf16.mxu0 0
        %2646 = vmatpush1.bf16.msra.mxu0 0
        %2647 = vmatprep.subr.bf16.mxu0 0
        %2648 = vmatpush1.bf16.msra.mxu0 0
        %2649 = vmatprep.subr.bf16.mxu0 0
        %2650 = vmatpush1.bf16.msra.mxu0 0
        %2651 = vmatprep.subr.bf16.mxu0 0
        %2652 = vmatpush1.bf16.msra.mxu0 0
        %2653 = vmatprep.subr.bf16.mxu0 0
        %2654 = vmatpush1.bf16.msra.mxu0 0
        %2655 = vmatprep.subr.bf16.mxu0 0
        %2656 = vmatpush1.bf16.msra.mxu0 0
        %2657 = vmatprep.subr.bf16.mxu0 0
        %2658 = vmatpush1.bf16.msra.mxu0 0
        %2659 = vmatprep.mubr.bf16.mxu0 0
        %2660 = vmatmul.mubr.bf16.gmra.mrb[0].mxu0 %v2625
        %v2661 = vpop.f32.mrb[0].mxu0
        %v2662 = vadd.f32 0.0, %v2661
        %v2663 = vpop.f32.mrb[0].mxu0
        %v2664 = vpop.f32.mrb[0].mxu0
        %v2665 = vadd.f32 0.0, %v2664
        %v2666 = vpop.f32.mrb[0].mxu0
        %2667 = vdwg.mxu0
        %v2669 = vsel %vm1173, %v2621, 0
        %2671 = vmatprep.subr.bf16.mxu0 0
        %2672 = vmatpush1.bf16.msra.mxu0 %v2341
        %2673 = vmatprep.subr.bf16.mxu0 0
        %2674 = vmatpush1.bf16.msra.mxu0 0
        %2675 = vmatprep.subr.bf16.mxu0 0
        %2676 = vmatpush1.bf16.msra.mxu0 0
        %2677 = vmatprep.subr.bf16.mxu0 0
        %2678 = vmatpush1.bf16.msra.mxu0 0
        %2679 = vmatprep.subr.bf16.mxu0 0
        %2680 = vmatpush1.bf16.msra.mxu0 0
        %2681 = vmatprep.subr.bf16.mxu0 0
        %2682 = vmatpush1.bf16.msra.mxu0 0
        %2683 = vmatprep.subr.bf16.mxu0 0
        %2684 = vmatpush1.bf16.msra.mxu0 0
        %2685 = vmatprep.subr.bf16.mxu0 0
        %2686 = vmatpush1.bf16.msra.mxu0 0
        %2687 = vmatprep.subr.bf16.mxu0 0
        %2688 = vmatpush1.bf16.msra.mxu0 0
        %2689 = vmatprep.subr.bf16.mxu0 0
        %2690 = vmatpush1.bf16.msra.mxu0 0
        %2691 = vmatprep.subr.bf16.mxu0 0
        %2692 = vmatpush1.bf16.msra.mxu0 0
        %2693 = vmatprep.subr.bf16.mxu0 0
        %2694 = vmatpush1.bf16.msra.mxu0 0
        %2695 = vmatprep.subr.bf16.mxu0 0
        %2696 = vmatpush1.bf16.msra.mxu0 0
        %2697 = vmatprep.subr.bf16.mxu0 0
        %2698 = vmatpush1.bf16.msra.mxu0 0
        %2699 = vmatprep.subr.bf16.mxu0 0
        %2700 = vmatpush1.bf16.msra.mxu0 0
        %2701 = vmatprep.subr.bf16.mxu0 0
        %2702 = vmatpush1.bf16.msra.mxu0 0
        %2703 = vmatprep.mubr.bf16.mxu0 0
        %2704 = vmatmul.mubr.bf16.gmra.mrb[0].mxu0 %v2669
        %v2705 = vpop.f32.mrb[0].mxu0
        %v2706 = vadd.f32 0.0, %v2705
        %v2707 = vpop.f32.mrb[0].mxu0
        %v2708 = vpop.f32.mrb[0].mxu0
        %v2709 = vadd.f32 0.0, %v2708
        %v2710 = vpop.f32.mrb[0].mxu0
        %2711 = vdwg.mxu0
        %v2713 = vsel %vm1173, %v2622, 0
        %2715 = vmatprep.subr.bf16.mxu0 0
        %2716 = vmatpush1.bf16.msra.mxu0 %v2342
        %2717 = vmatprep.subr.bf16.mxu0 0
        %2718 = vmatpush1.bf16.msra.mxu0 0
        %2719 = vmatprep.subr.bf16.mxu0 0
        %2720 = vmatpush1.bf16.msra.mxu0 0
        %2721 = vmatprep.subr.bf16.mxu0 0
        %2722 = vmatpush1.bf16.msra.mxu0 0
        %2723 = vmatprep.subr.bf16.mxu0 0
        %2724 = vmatpush1.bf16.msra.mxu0 0
        %2725 = vmatprep.subr.bf16.mxu0 0
        %2726 = vmatpush1.bf16.msra.mxu0 0
        %2727 = vmatprep.subr.bf16.mxu0 0
        %2728 = vmatpush1.bf16.msra.mxu0 0
        %2729 = vmatprep.subr.bf16.mxu0 0
        %2730 = vmatpush1.bf16.msra.mxu0 0
        %2731 = vmatprep.subr.bf16.mxu0 0
        %2732 = vmatpush1.bf16.msra.mxu0 0
        %2733 = vmatprep.subr.bf16.mxu0 0
        %2734 = vmatpush1.bf16.msra.mxu0 0
        %2735 = vmatprep.subr.bf16.mxu0 0
        %2736 = vmatpush1.bf16.msra.mxu0 0
        %2737 = vmatprep.subr.bf16.mxu0 0
        %2738 = vmatpush1.bf16.msra.mxu0 0
        %2739 = vmatprep.subr.bf16.mxu0 0
        %2740 = vmatpush1.bf16.msra.mxu0 0
        %2741 = vmatprep.subr.bf16.mxu0 0
        %2742 = vmatpush1.bf16.msra.mxu0 0
        %2743 = vmatprep.subr.bf16.mxu0 0
        %2744 = vmatpush1.bf16.msra.mxu0 0
        %2745 = vmatprep.subr.bf16.mxu0 0
        %2746 = vmatpush1.bf16.msra.mxu0 0
        %2747 = vmatprep.mubr.bf16.mxu0 0
        %2748 = vmatmul.mubr.bf16.gmra.mrb[0].mxu0 %v2713
        %v2749 = vpop.f32.mrb[0].mxu0
        %v2750 = vadd.f32 0.0, %v2749
        %v2751 = vpop.f32.mrb[0].mxu0
        %v2752 = vpop.f32.mrb[0].mxu0
        %v2753 = vadd.f32 0.0, %v2752
        %v2754 = vpop.f32.mrb[0].mxu0
        %2755 = vdwg.mxu0
        %v2757 = vsel %vm1173, %v2623, 0
        %2759 = vmatprep.subr.bf16.mxu0 0
        %2760 = vmatpush1.bf16.msra.mxu0 %v2343
        %2761 = vmatprep.subr.bf16.mxu0 0
        %2762 = vmatpush1.bf16.msra.mxu0 0
        %2763 = vmatprep.subr.bf16.mxu0 0
        %2764 = vmatpush1.bf16.msra.mxu0 0
        %2765 = vmatprep.subr.bf16.mxu0 0
        %2766 = vmatpush1.bf16.msra.mxu0 0
        %2767 = vmatprep.subr.bf16.mxu0 0
        %2768 = vmatpush1.bf16.msra.mxu0 0
        %2769 = vmatprep.subr.bf16.mxu0 0
        %2770 = vmatpush1.bf16.msra.mxu0 0
        %2771 = vmatprep.subr.bf16.mxu0 0
        %2772 = vmatpush1.bf16.msra.mxu0 0
        %2773 = vmatprep.subr.bf16.mxu0 0
        %2774 = vmatpush1.bf16.msra.mxu0 0
        %2775 = vmatprep.subr.bf16.mxu0 0
        %2776 = vmatpush1.bf16.msra.mxu0 0
        %2777 = vmatprep.subr.bf16.mxu0 0
        %2778 = vmatpush1.bf16.msra.mxu0 0
        %2779 = vmatprep.subr.bf16.mxu0 0
        %2780 = vmatpush1.bf16.msra.mxu0 0
        %2781 = vmatprep.subr.bf16.mxu0 0
        %2782 = vmatpush1.bf16.msra.mxu0 0
        %2783 = vmatprep.subr.bf16.mxu0 0
        %2784 = vmatpush1.bf16.msra.mxu0 0
        %2785 = vmatprep.subr.bf16.mxu0 0
        %2786 = vmatpush1.bf16.msra.mxu0 0
        %2787 = vmatprep.subr.bf16.mxu0 0
        %2788 = vmatpush1.bf16.msra.mxu0 0
        %2789 = vmatprep.subr.bf16.mxu0 0
        %2790 = vmatpush1.bf16.msra.mxu0 0
        %2791 = vmatprep.mubr.bf16.mxu0 0
        %2792 = vmatmul.mubr.bf16.gmra.mrb[0].mxu0 %v2757
        %v2793 = vpop.f32.mrb[0].mxu0
        %v2794 = vadd.f32 0.0, %v2793
        %v2795 = vpop.f32.mrb[0].mxu0
        %v2796 = vpop.f32.mrb[0].mxu0
        %v2797 = vadd.f32 0.0, %v2796
        %v2798 = vpop.f32.mrb[0].mxu0
        %2799 = vdwg.mxu0
        %2802 = vrot.lane.b32.xlu0 %v2706, 32
        %v2803 = vpop.permute.xlu0 %2802
        %2804 = vrot.lane.b32.xlu0 %v2709, 32
        %v2805 = vpop.permute.xlu0 %2804
        %2810 = vrot.lane.b32.xlu0 %v2750, 64
        %v2811 = vpop.permute.xlu0 %2810
        %2812 = vrot.lane.b32.xlu0 %v2753, 64
        %v2813 = vpop.permute.xlu0 %2812
        %2818 = vrot.lane.b32.xlu0 %v2794, 96
        %v2819 = vpop.permute.xlu0 %2818
        %2820 = vrot.lane.b32.xlu0 %v2797, 96
        %v2821 = vpop.permute.xlu0 %2820
        %v2824 = vsel %vm984, %v2662, %v2803
        %v2825 = vsel %vm984, %v2665, %v2805
        %v2826 = vsel %vm1468, %v2824, %v2811
        %v2827 = vsel %vm1468, %v2825, %v2813
        %v2828 = vsel %vm1471, %v2826, %v2819
        %v2829 = vsel %vm1471, %v2827, %v2821
        %s2830 = scalar_lea.vmem [#allocation7], 64
        %v2831 = vld [vmem:[%s2830] sm:$0xf]
        %v2832 = vld [vmem:[%s2830 + $0x4] sm:$0xf]
        %v2833 = vld [vmem:[%s2830 + $0x8] sm:$0xf]
        %v2834 = vld [vmem:[%s2830 + $0xc] sm:$0xf]
        %v2835 = vld [vmem:[%s2830 + $0x10] sm:$0xf]
        %v2836 = vld [vmem:[%s2830 + $0x14] sm:$0xf]
        %v2837 = vld [vmem:[%s2830 + $0x18] sm:$0xf]
        %v2838 = vld [vmem:[%s2830 + $0x1c] sm:$0xf]
        %v2839 = vld [vmem:[%s2830 + $0x20] sm:$0xf]
        %v2840 = vld [vmem:[%s2830 + $0x24] sm:$0xf]
        %v2841 = vld [vmem:[%s2830 + $0x28] sm:$0xf]
        %v2842 = vld [vmem:[%s2830 + $0x2c] sm:$0xf]
        %v2843 = vld [vmem:[%s2830 + $0x30] sm:$0xf]
        %v2844 = vld [vmem:[%s2830 + $0x34] sm:$0xf]
        %v2845 = vld [vmem:[%s2830 + $0x38] sm:$0xf]
        %v2846 = vld [vmem:[%s2830 + $0x3c] sm:$0xf]
        %v2847 = vpack.c.bf16 %v2829, %v2828
        %s2848 = scalar_lea.vmem [#allocation8], 1
        %v2849 = vld [vmem:[%s2848] sm:$0x1]
        %v2851 = vlaneseq
        %v2852 = vshrl.u32 %v2851, 7
        %v2853 = vsub.s32 0, %v2852
        %v2854 = vrot.slane %v2849, %v2853
        %v2872 = vunpack.c.l.b16 %v2831
        %v2873 = vunpack.c.l.b16 %v2832
        %v2874 = vunpack.c.l.b16 %v2833
        %v2875 = vunpack.c.l.b16 %v2834
        %v2876 = vunpack.c.l.b16 %v2835
        %v2877 = vunpack.c.l.b16 %v2836
        %v2878 = vunpack.c.l.b16 %v2837
        %v2879 = vunpack.c.l.b16 %v2838
        %v2880 = vunpack.c.l.b16 %v2839
        %v2881 = vunpack.c.l.b16 %v2840
        %v2882 = vunpack.c.l.b16 %v2841
        %v2883 = vunpack.c.l.b16 %v2842
        %v2884 = vunpack.c.l.b16 %v2843
        %v2885 = vunpack.c.l.b16 %v2844
        %v2886 = vunpack.c.l.b16 %v2845
        %v2887 = vunpack.c.l.b16 %v2846
        %v2888 = vpack.c.b16 %v2873, %v2872
        %v2889 = vpack.c.b16 %v2875, %v2874
        %v2890 = vpack.c.b16 %v2877, %v2876
        %v2891 = vpack.c.b16 %v2879, %v2878
        %v2892 = vpack.c.b16 %v2881, %v2880
        %v2893 = vpack.c.b16 %v2883, %v2882
        %v2894 = vpack.c.b16 %v2885, %v2884
        %v2895 = vpack.c.b16 %v2887, %v2886
        %2904 = vmatprep.subr.bf16.mxu0 0
        %2905 = vmatpush1.bf16.msra.mxu0 %v2888
        %2906 = vmatprep.subr.bf16.mxu0 0
        %2907 = vmatpush1.bf16.msra.mxu0 %v2889
        %2908 = vmatprep.subr.bf16.mxu0 0
        %2909 = vmatpush1.bf16.msra.mxu0 %v2890
        %2910 = vmatprep.subr.bf16.mxu0 0
        %2911 = vmatpush1.bf16.msra.mxu0 %v2891
        %2912 = vmatprep.subr.bf16.mxu0 0
        %2913 = vmatpush1.bf16.msra.mxu0 %v2892
        %2914 = vmatprep.subr.bf16.mxu0 0
        %2915 = vmatpush1.bf16.msra.mxu0 %v2893
        %2916 = vmatprep.subr.bf16.mxu0 0
        %2917 = vmatpush1.bf16.msra.mxu0 %v2894
        %2918 = vmatprep.subr.bf16.mxu0 0
        %2919 = vmatpush1.bf16.msra.mxu0 %v2895
        %2920 = vmatprep.subr.bf16.mxu0 0
        %2921 = vmatpush1.bf16.msra.mxu0 0
        %2922 = vmatprep.subr.bf16.mxu0 0
        %2923 = vmatpush1.bf16.msra.mxu0 0
        %2924 = vmatprep.subr.bf16.mxu0 0
        %2925 = vmatpush1.bf16.msra.mxu0 0
        %2926 = vmatprep.subr.bf16.mxu0 0
        %2927 = vmatpush1.bf16.msra.mxu0 0
        %2928 = vmatprep.subr.bf16.mxu0 0
        %2929 = vmatpush1.bf16.msra.mxu0 0
        %2930 = vmatprep.subr.bf16.mxu0 0
        %2931 = vmatpush1.bf16.msra.mxu0 0
        %2932 = vmatprep.subr.bf16.mxu0 0
        %2933 = vmatpush1.bf16.msra.mxu0 0
        %2934 = vmatprep.subr.bf16.mxu0 0
        %2935 = vmatpush1.bf16.msra.mxu0 0
        %2936 = vmatprep.mubr.bf16.mxu0 0
        %2937 = vmatmul.mubr.bf16.gmra.mrb[0].mxu0 %v2847
        %v2938 = vpop.f32.mrb[0].mxu0
        %v2939 = vadd.f32 %v2854, %v2938
        %v2940 = vpop.f32.mrb[0].mxu0
        %v2941 = vpop.f32.mrb[0].mxu0
        %v2942 = vadd.f32 %v2854, %v2941
        %v2943 = vpop.f32.mrb[0].mxu0
        %2944 = vdwg.mxu0
        %v2945 = vadd.f32 %v2004, %v2939
        %v2946 = vadd.f32 %v2005, %v2942
        %s2947 = scalar_lea.vmem [#allocation10], 1
        %v2948 = vld [vmem:[%s2947] sm:$0x1]
        %s2949 = scalar_lea.vmem [#allocation11], 1
        %v2950 = vld [vmem:[%s2949] sm:$0x1]
        %2951 = vadd.xlane.f32.xlu0 %v2945
        %v2952 = vpop.xlane.xlu0 %2951
        %2953 = vadd.xlane.f32.xlu0 %v2946
        %v2954 = vpop.xlane.xlu0 %2953
        %v2955 = vmul.f32 %v2952, %v1595
        %v2956 = vmul.f32 %v2954, %v1595
        %v2957 = vsub.f32 %v2945, %v2955
        %v2958 = vsub.f32 %v2946, %v2956
        %v2959 = vmul.f32 %v2957, %v2957
        %v2960 = vmul.f32 %v2958, %v2958
        %2961 = vadd.xlane.f32.xlu0 %v2959
        %v2962 = vpop.xlane.xlu0 %2961
        %2963 = vadd.xlane.f32.xlu0 %v2960
        %v2964 = vpop.xlane.xlu0 %2963
        %v2965 = vmul.f32 %v2962, %v1595
        %v2966 = vmul.f32 %v2964, %v1595
        %v2967 = vadd.f32 %v2965, 1e-05
        %v2968 = vadd.f32 %v2966, 1e-05
        %v2969 = vrsqrt.pop %v2967
        %v2970 = vrsqrt.pop %v2968
        %v2971 = vmul.f32 %v2957, %v2969
        %v2972 = vmul.f32 %v2958, %v2970
        %v2974 = vlaneseq
        %v2975 = vshrl.u32 %v2974, 7
        %v2976 = vsub.s32 0, %v2975
        %v2977 = vrot.slane %v2948, %v2976
        %v2979 = vmul.f32 %v2971, %v2977
        %v2980 = vmul.f32 %v2972, %v2977
        %v2982 = vlaneseq
        %v2983 = vshrl.u32 %v2982, 7
        %v2984 = vsub.s32 0, %v2983
        %v2985 = vrot.slane %v2950, %v2984
        %v2987 = vadd.f32 %v2979, %v2985
        %v2988 = vadd.f32 %v2980, %v2985
        %s2989 = scalar_lea.vmem [#allocation13], 128
        %v2990 = vld [vmem:[%s2989] sm:$0xff]
        %v2991 = vld [vmem:[%s2989 + $0x8] sm:$0xff]
        %v2992 = vld [vmem:[%s2989 + $0x10] sm:$0xff]
        %v2993 = vld [vmem:[%s2989 + $0x18] sm:$0xff]
        %v2994 = vld [vmem:[%s2989 + $0x20] sm:$0xff]
        %v2995 = vld [vmem:[%s2989 + $0x28] sm:$0xff]
        %v2996 = vld [vmem:[%s2989 + $0x30] sm:$0xff]
        %v2997 = vld [vmem:[%s2989 + $0x38] sm:$0xff]
        %v2998 = vld [vmem:[%s2989 + $0x40] sm:$0xff]
        %v2999 = vld [vmem:[%s2989 + $0x48] sm:$0xff]
        %v3000 = vld [vmem:[%s2989 + $0x50] sm:$0xff]
        %v3001 = vld [vmem:[%s2989 + $0x58] sm:$0xff]
        %v3002 = vld [vmem:[%s2989 + $0x60] sm:$0xff]
        %v3003 = vld [vmem:[%s2989 + $0x68] sm:$0xff]
        %v3004 = vld [vmem:[%s2989 + $0x70] sm:$0xff]
        %v3005 = vld [vmem:[%s2989 + $0x78] sm:$0xff]
        %v3006 = vpack.c.bf16 %v2988, %v2987
        %s3007 = scalar_lea.vmem [#allocation14], 2
        %v3008 = vld [vmem:[%s3007] sm:$0x3]
        %v3010 = vlaneseq
        %v3011 = vshrl.u32 %v3010, 7
        %v3012 = vsub.s32 0, %v3011
        %v3013 = vrot.slane %v3008, %v3012
        %v3014 = vlaneseq
        %v3015 = vshrl.u32 %v3014, 7
        %v3016 = vsub.s32 1, %v3015
        %v3017 = vrot.slane %v3008, %v3016
        %v3036 = vunpack.c.l.b16 %v2990
        %v3037 = vunpack.c.h.b16 %v2990
        %v3038 = vunpack.c.l.b16 %v2991
        %v3039 = vunpack.c.h.b16 %v2991
        %v3040 = vunpack.c.l.b16 %v2992
        %v3041 = vunpack.c.h.b16 %v2992
        %v3042 = vunpack.c.l.b16 %v2993
        %v3043 = vunpack.c.h.b16 %v2993
        %v3044 = vunpack.c.l.b16 %v2994
        %v3045 = vunpack.c.h.b16 %v2994
        %v3046 = vunpack.c.l.b16 %v2995
        %v3047 = vunpack.c.h.b16 %v2995
        %v3048 = vunpack.c.l.b16 %v2996
        %v3049 = vunpack.c.h.b16 %v2996
        %v3050 = vunpack.c.l.b16 %v2997
        %v3051 = vunpack.c.h.b16 %v2997
        %v3052 = vunpack.c.l.b16 %v2998
        %v3053 = vunpack.c.h.b16 %v2998
        %v3054 = vunpack.c.l.b16 %v2999
        %v3055 = vunpack.c.h.b16 %v2999
        %v3056 = vunpack.c.l.b16 %v3000
        %v3057 = vunpack.c.h.b16 %v3000
        %v3058 = vunpack.c.l.b16 %v3001
        %v3059 = vunpack.c.h.b16 %v3001
        %v3060 = vunpack.c.l.b16 %v3002
        %v3061 = vunpack.c.h.b16 %v3002
        %v3062 = vunpack.c.l.b16 %v3003
        %v3063 = vunpack.c.h.b16 %v3003
        %v3064 = vunpack.c.l.b16 %v3004
        %v3065 = vunpack.c.h.b16 %v3004
        %v3066 = vunpack.c.l.b16 %v3005
        %v3067 = vunpack.c.h.b16 %v3005
        %v3068 = vpack.c.b16 %v3038, %v3036
        %v3069 = vpack.c.b16 %v3039, %v3037
        %v3070 = vpack.c.b16 %v3042, %v3040
        %v3071 = vpack.c.b16 %v3043, %v3041
        %v3072 = vpack.c.b16 %v3046, %v3044
        %v3073 = vpack.c.b16 %v3047, %v3045
        %v3074 = vpack.c.b16 %v3050, %v3048
        %v3075 = vpack.c.b16 %v3051, %v3049
        %v3076 = vpack.c.b16 %v3054, %v3052
        %v3077 = vpack.c.b16 %v3055, %v3053
        %v3078 = vpack.c.b16 %v3058, %v3056
        %v3079 = vpack.c.b16 %v3059, %v3057
        %v3080 = vpack.c.b16 %v3062, %v3060
        %v3081 = vpack.c.b16 %v3063, %v3061
        %v3082 = vpack.c.b16 %v3066, %v3064
        %v3083 = vpack.c.b16 %v3067, %v3065
        %3100 = vmatprep.subr.bf16.mxu0 %v3069
        %3101 = vmatpush1.bf16.msra.mxu0 %v3068
        %3102 = vmatprep.subr.bf16.mxu0 %v3071
        %3103 = vmatpush1.bf16.msra.mxu0 %v3070
        %3104 = vmatprep.subr.bf16.mxu0 %v3073
        %3105 = vmatpush1.bf16.msra.mxu0 %v3072
        %3106 = vmatprep.subr.bf16.mxu0 %v3075
        %3107 = vmatpush1.bf16.msra.mxu0 %v3074
        %3108 = vmatprep.subr.bf16.mxu0 %v3077
        %3109 = vmatpush1.bf16.msra.mxu0 %v3076
        %3110 = vmatprep.subr.bf16.mxu0 %v3079
        %3111 = vmatpush1.bf16.msra.mxu0 %v3078
        %3112 = vmatprep.subr.bf16.mxu0 %v3081
        %3113 = vmatpush1.bf16.msra.mxu0 %v3080
        %3114 = vmatprep.subr.bf16.mxu0 %v3083
        %3115 = vmatpush1.bf16.msra.mxu0 %v3082
        %3116 = vmatprep.subr.bf16.mxu0 0
        %3117 = vmatpush1.bf16.msra.mxu0 0
        %3118 = vmatprep.subr.bf16.mxu0 0
        %3119 = vmatpush1.bf16.msra.mxu0 0
        %3120 = vmatprep.subr.bf16.mxu0 0
        %3121 = vmatpush1.bf16.msra.mxu0 0
        %3122 = vmatprep.subr.bf16.mxu0 0
        %3123 = vmatpush1.bf16.msra.mxu0 0
        %3124 = vmatprep.subr.bf16.mxu0 0
        %3125 = vmatpush1.bf16.msra.mxu0 0
        %3126 = vmatprep.subr.bf16.mxu0 0
        %3127 = vmatpush1.bf16.msra.mxu0 0
        %3128 = vmatprep.subr.bf16.mxu0 0
        %3129 = vmatpush1.bf16.msra.mxu0 0
        %3130 = vmatprep.subr.bf16.mxu0 0
        %3131 = vmatpush1.bf16.msra.mxu0 0
        %3132 = vmatprep.mubr.bf16.mxu0 0
        %3133 = vmatmul.mubr.bf16.gmra.mrb[0].mxu0 %v3006
        %v3134 = vpop.f32.mrb[0].mxu0
        %v3135 = vadd.f32 %v3013, %v3134
        %v3136 = vpop.f32.mrb[0].mxu0
        %v3137 = vadd.f32 %v3017, %v3136
        %v3138 = vpop.f32.mrb[0].mxu0
        %v3139 = vadd.f32 %v3013, %v3138
        %v3140 = vpop.f32.mrb[0].mxu0
        %v3141 = vadd.f32 %v3017, %v3140
        %3142 = vdwg.mxu0
        %v3143 = vmax.f32 %v3135, 0.0
        %v3144 = vmax.f32 %v3137, 0.0
        %v3145 = vmax.f32 %v3139, 0.0
        %v3146 = vmax.f32 %v3141, 0.0
        %s3147 = scalar_lea.vmem [#allocation16], 128
        %v3148 = vld [vmem:[%s3147] sm:$0xf]
        %v3149 = vld [vmem:[%s3147 + $0x4] sm:$0xf]
        %v3150 = vld [vmem:[%s3147 + $0x8] sm:$0xf]
        %v3151 = vld [vmem:[%s3147 + $0xc] sm:$0xf]
        %v3152 = vld [vmem:[%s3147 + $0x10] sm:$0xf]
        %v3153 = vld [vmem:[%s3147 + $0x14] sm:$0xf]
        %v3154 = vld [vmem:[%s3147 + $0x18] sm:$0xf]
        %v3155 = vld [vmem:[%s3147 + $0x1c] sm:$0xf]
        %v3156 = vld [vmem:[%s3147 + $0x20] sm:$0xf]
        %v3157 = vld [vmem:[%s3147 + $0x24] sm:$0xf]
        %v3158 = vld [vmem:[%s3147 + $0x28] sm:$0xf]
        %v3159 = vld [vmem:[%s3147 + $0x2c] sm:$0xf]
        %v3160 = vld [vmem:[%s3147 + $0x30] sm:$0xf]
        %v3161 = vld [vmem:[%s3147 + $0x34] sm:$0xf]
        %v3162 = vld [vmem:[%s3147 + $0x38] sm:$0xf]
        %v3163 = vld [vmem:[%s3147 + $0x3c] sm:$0xf]
        %v3164 = vld [vmem:[%s3147 + $0x40] sm:$0xf]
        %v3165 = vld [vmem:[%s3147 + $0x44] sm:$0xf]
        %v3166 = vld [vmem:[%s3147 + $0x48] sm:$0xf]
        %v3167 = vld [vmem:[%s3147 + $0x4c] sm:$0xf]
        %v3168 = vld [vmem:[%s3147 + $0x50] sm:$0xf]
        %v3169 = vld [vmem:[%s3147 + $0x54] sm:$0xf]
        %v3170 = vld [vmem:[%s3147 + $0x58] sm:$0xf]
        %v3171 = vld [vmem:[%s3147 + $0x5c] sm:$0xf]
        %v3172 = vld [vmem:[%s3147 + $0x60] sm:$0xf]
        %v3173 = vld [vmem:[%s3147 + $0x64] sm:$0xf]
        %v3174 = vld [vmem:[%s3147 + $0x68] sm:$0xf]
        %v3175 = vld [vmem:[%s3147 + $0x6c] sm:$0xf]
        %v3176 = vld [vmem:[%s3147 + $0x70] sm:$0xf]
        %v3177 = vld [vmem:[%s3147 + $0x74] sm:$0xf]
        %v3178 = vld [vmem:[%s3147 + $0x78] sm:$0xf]
        %v3179 = vld [vmem:[%s3147 + $0x7c] sm:$0xf]
        %v3180 = vpack.c.bf16 %v3145, %v3143
        %v3181 = vpack.c.bf16 %v3146, %v3144
        %s3182 = scalar_lea.vmem [#allocation17], 1
        %v3183 = vld [vmem:[%s3182] sm:$0x1]
        %v3185 = vlaneseq
        %v3186 = vshrl.u32 %v3185, 7
        %v3187 = vsub.s32 0, %v3186
        %v3188 = vrot.slane %v3183, %v3187
        %v3222 = vunpack.c.l.b16 %v3148
        %v3223 = vunpack.c.l.b16 %v3149
        %v3224 = vunpack.c.l.b16 %v3150
        %v3225 = vunpack.c.l.b16 %v3151
        %v3226 = vunpack.c.l.b16 %v3152
        %v3227 = vunpack.c.l.b16 %v3153
        %v3228 = vunpack.c.l.b16 %v3154
        %v3229 = vunpack.c.l.b16 %v3155
        %v3230 = vunpack.c.l.b16 %v3156
        %v3231 = vunpack.c.l.b16 %v3157
        %v3232 = vunpack.c.l.b16 %v3158
        %v3233 = vunpack.c.l.b16 %v3159
        %v3234 = vunpack.c.l.b16 %v3160
        %v3235 = vunpack.c.l.b16 %v3161
        %v3236 = vunpack.c.l.b16 %v3162
        %v3237 = vunpack.c.l.b16 %v3163
        %v3238 = vunpack.c.l.b16 %v3164
        %v3239 = vunpack.c.l.b16 %v3165
        %v3240 = vunpack.c.l.b16 %v3166
        %v3241 = vunpack.c.l.b16 %v3167
        %v3242 = vunpack.c.l.b16 %v3168
        %v3243 = vunpack.c.l.b16 %v3169
        %v3244 = vunpack.c.l.b16 %v3170
        %v3245 = vunpack.c.l.b16 %v3171
        %v3246 = vunpack.c.l.b16 %v3172
        %v3247 = vunpack.c.l.b16 %v3173
        %v3248 = vunpack.c.l.b16 %v3174
        %v3249 = vunpack.c.l.b16 %v3175
        %v3250 = vunpack.c.l.b16 %v3176
        %v3251 = vunpack.c.l.b16 %v3177
        %v3252 = vunpack.c.l.b16 %v3178
        %v3253 = vunpack.c.l.b16 %v3179
        %v3254 = vpack.c.b16 %v3223, %v3222
        %v3255 = vpack.c.b16 %v3225, %v3224
        %v3256 = vpack.c.b16 %v3227, %v3226
        %v3257 = vpack.c.b16 %v3229, %v3228
        %v3258 = vpack.c.b16 %v3231, %v3230
        %v3259 = vpack.c.b16 %v3233, %v3232
        %v3260 = vpack.c.b16 %v3235, %v3234
        %v3261 = vpack.c.b16 %v3237, %v3236
        %v3262 = vpack.c.b16 %v3239, %v3238
        %v3263 = vpack.c.b16 %v3241, %v3240
        %v3264 = vpack.c.b16 %v3243, %v3242
        %v3265 = vpack.c.b16 %v3245, %v3244
        %v3266 = vpack.c.b16 %v3247, %v3246
        %v3267 = vpack.c.b16 %v3249, %v3248
        %v3268 = vpack.c.b16 %v3251, %v3250
        %v3269 = vpack.c.b16 %v3253, %v3252
        %3286 = vmatprep.subr.bf16.mxu0 0
        %3287 = vmatpush1.bf16.msra.mxu0 %v3254
        %3288 = vmatprep.subr.bf16.mxu0 0
        %3289 = vmatpush1.bf16.msra.mxu0 %v3255
        %3290 = vmatprep.subr.bf16.mxu0 0
        %3291 = vmatpush1.bf16.msra.mxu0 %v3256
        %3292 = vmatprep.subr.bf16.mxu0 0
        %3293 = vmatpush1.bf16.msra.mxu0 %v3257
        %3294 = vmatprep.subr.bf16.mxu0 0
        %3295 = vmatpush1.bf16.msra.mxu0 %v3258
        %3296 = vmatprep.subr.bf16.mxu0 0
        %3297 = vmatpush1.bf16.msra.mxu0 %v3259
        %3298 = vmatprep.subr.bf16.mxu0 0
        %3299 = vmatpush1.bf16.msra.mxu0 %v3260
        %3300 = vmatprep.subr.bf16.mxu0 0
        %3301 = vmatpush1.bf16.msra.mxu0 %v3261
        %3302 = vmatprep.subr.bf16.mxu0 0
        %3303 = vmatpush1.bf16.msra.mxu0 %v3262
        %3304 = vmatprep.subr.bf16.mxu0 0
        %3305 = vmatpush1.bf16.msra.mxu0 %v3263
        %3306 = vmatprep.subr.bf16.mxu0 0
        %3307 = vmatpush1.bf16.msra.mxu0 %v3264
        %3308 = vmatprep.subr.bf16.mxu0 0
        %3309 = vmatpush1.bf16.msra.mxu0 %v3265
        %3310 = vmatprep.subr.bf16.mxu0 0
        %3311 = vmatpush1.bf16.msra.mxu0 %v3266
        %3312 = vmatprep.subr.bf16.mxu0 0
        %3313 = vmatpush1.bf16.msra.mxu0 %v3267
        %3314 = vmatprep.subr.bf16.mxu0 0
        %3315 = vmatpush1.bf16.msra.mxu0 %v3268
        %3316 = vmatprep.subr.bf16.mxu0 0
        %3317 = vmatpush1.bf16.msra.mxu0 %v3269
        %3318 = vmatprep.mubr.bf16.mxu0 %v3181
        %3319 = vmatmul.mubr.bf16.gmra.mrb[0].mxu0 %v3180
        %v3320 = vpop.f32.mrb[0].mxu0
        %v3321 = vadd.f32 %v3188, %v3320
        %v3322 = vpop.f32.mrb[0].mxu0
        %v3323 = vpop.f32.mrb[0].mxu0
        %v3324 = vadd.f32 %v3188, %v3323
        %v3325 = vpop.f32.mrb[0].mxu0
        %3326 = vdwg.mxu0
        %v3327 = vadd.f32 %v2987, %v3321
        %v3328 = vadd.f32 %v2988, %v3324
        %s3329 = scalar_lea.vmem [#allocation19], 1
        %v3330 = vld [vmem:[%s3329] sm:$0x1]
        %s3331 = scalar_lea.vmem [#allocation20], 1
        %v3332 = vld [vmem:[%s3331] sm:$0x1]
        %3333 = vadd.xlane.f32.xlu0 %v3327
        %v3334 = vpop.xlane.xlu0 %3333
        %3335 = vadd.xlane.f32.xlu0 %v3328
        %v3336 = vpop.xlane.xlu0 %3335
        %v3337 = vmul.f32 %v3334, %v1595
        %v3338 = vmul.f32 %v3336, %v1595
        %v3339 = vsub.f32 %v3327, %v3337
        %v3340 = vsub.f32 %v3328, %v3338
        %v3341 = vmul.f32 %v3339, %v3339
        %v3342 = vmul.f32 %v3340, %v3340
        %3343 = vadd.xlane.f32.xlu0 %v3341
        %v3344 = vpop.xlane.xlu0 %3343
        %3345 = vadd.xlane.f32.xlu0 %v3342
        %v3346 = vpop.xlane.xlu0 %3345
        %v3347 = vmul.f32 %v3344, %v1595
        %v3348 = vmul.f32 %v3346, %v1595
        %v3349 = vadd.f32 %v3347, 1e-05
        %v3350 = vadd.f32 %v3348, 1e-05
        %v3351 = vrsqrt.pop %v3349
        %v3352 = vrsqrt.pop %v3350
        %v3353 = vmul.f32 %v3339, %v3351
        %v3354 = vmul.f32 %v3340, %v3352
        %v3356 = vlaneseq
        %v3357 = vshrl.u32 %v3356, 7
        %v3358 = vsub.s32 0, %v3357
        %v3359 = vrot.slane %v3330, %v3358
        %v3361 = vmul.f32 %v3353, %v3359
        %v3362 = vmul.f32 %v3354, %v3359
        %v3364 = vlaneseq
        %v3365 = vshrl.u32 %v3364, 7
        %v3366 = vsub.s32 0, %v3365
        %v3367 = vrot.slane %v3332, %v3366
        %v3369 = vadd.f32 %v3361, %v3367
        %v3370 = vadd.f32 %v3362, %v3367
        %3371 = vst [vmem:[%s635] sm:$0xff] %v3369
        %3372 = vst [vmem:[%s635 + $0x8] sm:$0xff] %v3370
        %s3373 = sand.u32 %s342, 1
        %s3374 = scalar_lea.sflag [#allocation4], %s3373
        %s3375 = sand.u32 %s342, 1
        %s3376 = smul.addr %s3375, 16
        %s3377 = scalar_lea.vmem [#allocation22], %s3376
        // Predicated region
        $region125: #{signal_att_forward.1} parent=75 // pred_check
          %p3378 = pneg %p352
        $region126: #{signal_att_forward.1} parent=75 // pred_check_branch
          %3380 = sbr.rel (%p3378) target = $region128
        $region127: #{signal_att_forward.1} parent=75 // pred_region
          %s3382 = ssub.s32 256, 256
          %3383 = vsyncadd %s3374, %s3382
          %s3384 = smul.addr %s35, 2
          %s3385 = smul.addr %s3384, 128
          %s3386 = scalar_lea.hbm %s14, %s3385
          %s3387 = sshll.u32 %s3377, 4
          %s3388 = int_to_ptr.vmem [resolvable:$true] %s3387
          %3393 = dma.vmem_to_hbm [thread:$0]  %s3388, 256, %s3386, %s3374, 128, 128, 8
        $region128: #{signal_att_forward.1} parent=75 // pred_fallthru
          _
      $region76: #{signal_att_forward.1} parent=5 // pred_fallthru
        _
      %p3394 = scmp.le.s32.totalorder 2, %s30
      // Predicated region
      $region129: #{signal_att_forward.1} parent=5 // pred_check
        %p3395 = pneg %p3394
      $region130: #{signal_att_forward.1} parent=5 // pred_check_branch
        %3397 = sbr.rel (%p3395) target = $region132
      $region131: #{signal_att_forward.1} parent=5 // pred_region
        %s3398 = ssub.s32 %s30, 2
        // Predicated region
        $region133: #{signal_att_forward.1} parent=131 // pred_check
          %p3399 = pneg %p358
        $region134: #{signal_att_forward.1} parent=131 // pred_check_branch
          %3401 = sbr.rel (%p3399) target = $region136
        $region135: #{signal_att_forward.1} parent=131 // pred_region
          %s3402 = sand.u32 %s343, 1
          %s3403 = scalar_lea.sflag [#allocation4], %s3402
          %s3404 = sand.u32 %s343, 1
          %s3405 = smul.addr %s3404, 16
          %s3406 = scalar_lea.vmem [#allocation22], %s3405
          %3407 = dma.done %s3403, 256
        $region136: #{signal_att_forward.1} parent=131 // pred_fallthru
          _
      $region132: #{signal_att_forward.1} parent=5 // pred_fallthru
        _
    $region6: #{signal_att_forward.1} parent=1 // loop_footer
      %s34 = sadd.s32 1, %s30
    $region7: #{signal_att_forward.1} parent=1 // loop_footer_branch
      %29 = sbr.rel target = $region3
    $region8: #{signal_att_forward.1} parent=1 // loop_exit
      _
    %3408 = vsyncpa [#allocation3], 1
    %s3409 = scalar_lea.sflag [#allocation3], 1
    %3410 = vsyncpa %s3409, 1
    %3411 = vsyncpa [#allocation6], 1
    %3412 = vsyncpa [#allocation9], 1
    %3413 = vsyncpa [#allocation12], 1
    %3414 = vsyncpa [#allocation15], 1
    %3415 = vsyncpa [#allocation18], 1
    %3416 = vsyncpa [#allocation21], 1
    %3417 = vsyncpa [#allocation4], 1
    %s3418 = scalar_lea.sflag [#allocation4], 1
    %3419 = vsyncpa %s3418, 1

</llo_original>
